<compile_context>
chip_gen: v7x
topology: tpu7x:2x2x1
jax: 0.10.0
libtpu: 0.0.40
codegen_flags: <defaults>
</compile_context>

<pallas_src>
import functools

import jax
import jax.numpy as jnp
from jax.experimental import pallas as pl
from jax.experimental.pallas import tpu as pltpu


# ----------------------------------------------------------------------------
# small helpers
# ----------------------------------------------------------------------------
def _round_up(x, m):
    return (x + m - 1) // m * m


def _tile(dim, pref):
    """Pick (tile, padded_dim): full-dim block if small, else `pref`-wide tiles."""
    if dim <= pref:
        return dim, dim
    return pref, _round_up(dim, pref)


def _pad2(x, m, n):
    M, N = x.shape
    if M == m and N == n:
        return x
    return jnp.pad(x, ((0, m - M), (0, n - N)))


def _pad3(x, s, d):
    _, S, D = x.shape
    if S == s and D == d:
        return x
    return jnp.pad(x, ((0, 0), (0, s - S), (0, d - D)))


# ----------------------------------------------------------------------------
# Tiled linear:  X @ W + b  (optionally fused ReLU)
# ----------------------------------------------------------------------------
def _matmul_kernel(x_ref, w_ref, b_ref, o_ref, acc_ref, *, activation):
    k = pl.program_id(2)

    @pl.when(k == 0)
    def _():
        acc_ref[...] = jnp.zeros_like(acc_ref)

    acc_ref[...] += jnp.dot(x_ref[...], w_ref[...],
                            preferred_element_type=jnp.float32)

    @pl.when(k == pl.num_programs(2) - 1)
    def _():
        y = acc_ref[...] + b_ref[...]
        if activation == "relu":
            y = jnp.maximum(y, 0.0)
        o_ref[...] = y.astype(o_ref.dtype)


def _matmul_nok_kernel(x_ref, w_ref, b_ref, o_ref, *, activation):
    """Single-shot contraction (K fits in one block): no scratch accumulator."""
    y = jnp.dot(x_ref[...], w_ref[...],
                preferred_element_type=jnp.float32) + b_ref[...]
    if activation == "relu":
        y = jnp.maximum(y, 0.0)
    o_ref[...] = y.astype(o_ref.dtype)


def linear(x2d, w, b, activation=None, *, tm_pref=256, tn_pref=256, tk_pref=512):
    """x2d: [M, K], w: [K, N], b: [N]  ->  [M, N]"""
    M, K = x2d.shape
    N = w.shape[1]

    tm, Mp = _tile(M, tm_pref)
    tk, Kp = _tile(K, tk_pref)
    tn, Np = _tile(N, tn_pref)

    xp = _pad2(x2d, Mp, Kp)
    wp = _pad2(w, Kp, Np)
    bp = _pad2(b.reshape(1, N), 1, Np)

    if Kp // tk == 1:
        kernel = functools.partial(_matmul_nok_kernel, activation=activation)
        out = pl.pallas_call(
            kernel,
            out_shape=jax.ShapeDtypeStruct((Mp, Np), x2d.dtype),
            grid=(Mp // tm, Np // tn),
            in_specs=[
                pl.BlockSpec((tm, tk), lambda i, j: (i, 0)),
                pl.BlockSpec((tk, tn), lambda i, j: (0, j)),
                pl.BlockSpec((1, tn), lambda i, j: (0, j)),
            ],
            out_specs=pl.BlockSpec((tm, tn), lambda i, j: (i, j)),
            compiler_params=pltpu.CompilerParams(
                dimension_semantics=("parallel", "parallel")),
        )(xp, wp, bp)
    else:
        kernel = functools.partial(_matmul_kernel, activation=activation)
        out = pl.pallas_call(
            kernel,
            out_shape=jax.ShapeDtypeStruct((Mp, Np), x2d.dtype),
            grid=(Mp // tm, Np // tn, Kp // tk),
            in_specs=[
                pl.BlockSpec((tm, tk), lambda i, j, k: (i, k)),
                pl.BlockSpec((tk, tn), lambda i, j, k: (k, j)),
                pl.BlockSpec((1, tn), lambda i, j, k: (0, j)),
            ],
            out_specs=pl.BlockSpec((tm, tn), lambda i, j, k: (i, j)),
            scratch_shapes=[pltpu.VMEM((tm, tn), jnp.float32)],
            compiler_params=pltpu.CompilerParams(
                dimension_semantics=("parallel", "parallel", "arbitrary")),
        )(xp, wp, bp)

    if Mp != M or Np != N:
        out = out[:M, :N]
    return out


# ----------------------------------------------------------------------------
# Fused feed-forward:  Linear -> ReLU -> Linear  (hidden tile stays in VMEM)
# ----------------------------------------------------------------------------
def _ffn_kernel(x_ref, w1_ref, b1_ref, w2_ref, b2_ref, o_ref):
    h = jnp.dot(x_ref[...], w1_ref[...],
                preferred_element_type=jnp.float32) + b1_ref[...]
    h = jnp.maximum(h, 0.0)
    y = jnp.dot(h.astype(w2_ref.dtype), w2_ref[...],
                preferred_element_type=jnp.float32) + b2_ref[...]
    o_ref[...] = y.astype(o_ref.dtype)


def feed_forward(p, x):
    """x: [B, S, D] -> [B, S, D]."""
    B, S, D = x.shape
    Hid = p["w1"].shape[1]
    M = B * S
    x2 = x.reshape(M, D)

    tm, Mp = _tile(M, 256)
    # Fused path keeps both weight matrices + the hidden tile resident in VMEM.
    fused_bytes = 4 * (2 * D * Hid + tm * (2 * D + Hid))
    if fused_bytes > 8 * 1024 * 1024:
        # Fallback for very large D/hidden: two tiled, pipelined matmuls.
        h = linear(x2, p["w1"], p["b1"], activation="relu")
        y = linear(h, p["w2"], p["b2"])
        return y.reshape(B, S, D)

    xp = _pad2(x2, Mp, D)
    out = pl.pallas_call(
        _ffn_kernel,
        out_shape=jax.ShapeDtypeStruct((Mp, D), x.dtype),
        grid=(Mp // tm,),
        in_specs=[
            pl.BlockSpec((tm, D), lambda i: (i, 0)),
            pl.BlockSpec((D, Hid), lambda i: (0, 0)),
            pl.BlockSpec((1, Hid), lambda i: (0, 0)),
            pl.BlockSpec((Hid, D), lambda i: (0, 0)),
            pl.BlockSpec((1, D), lambda i: (0, 0)),
        ],
        out_specs=pl.BlockSpec((tm, D), lambda i: (i, 0)),
        compiler_params=pltpu.CompilerParams(
            dimension_semantics=("parallel",)),
    )(xp, p["w1"], p["b1"].reshape(1, Hid), p["w2"], p["b2"].reshape(1, D))
    return out[:M].reshape(B, S, D)


# ----------------------------------------------------------------------------
# Fused residual-add + LayerNorm, tiled over rows
# ----------------------------------------------------------------------------
def _add_layernorm_kernel(x_ref, r_ref, g_ref, b_ref, o_ref, *, eps):
    x = x_ref[...].astype(jnp.float32) + r_ref[...].astype(jnp.float32)
    mean = jnp.mean(x, axis=-1, keepdims=True)
    var = jnp.mean((x - mean) ** 2, axis=-1, keepdims=True)
    y = (x - mean) * jax.lax.rsqrt(var + eps)
    o_ref[...] = (y * g_ref[...] + b_ref[...]).astype(o_ref.dtype)


def add_and_norm(p, x, sub, eps=1e-5):
    """LayerNorm(x + sub) over the last dim (torch.nn.LayerNorm semantics)."""
    B, S, D = x.shape
    M = B * S
    tm, Mp = _tile(M, 512)
    x2 = _pad2(x.reshape(M, D), Mp, D)
    s2 = _pad2(sub.reshape(M, D), Mp, D)
    kernel = functools.partial(_add_layernorm_kernel, eps=eps)
    out = pl.pallas_call(
        kernel,
        out_shape=jax.ShapeDtypeStruct((Mp, D), x.dtype),
        grid=(Mp // tm,),
        in_specs=[
            pl.BlockSpec((tm, D), lambda i: (i, 0)),
            pl.BlockSpec((tm, D), lambda i: (i, 0)),
            pl.BlockSpec((1, D), lambda i: (0, 0)),
            pl.BlockSpec((1, D), lambda i: (0, 0)),
        ],
        out_specs=pl.BlockSpec((tm, D), lambda i: (i, 0)),
        compiler_params=pltpu.CompilerParams(
            dimension_semantics=("parallel",)),
    )(x2, s2, p["gamma"].reshape(1, D), p["beta"].reshape(1, D))
    return out[:M].reshape(B, S, D)


# ----------------------------------------------------------------------------
# KV-blocked online-softmax attention (flash-attention style)
# ----------------------------------------------------------------------------
def _flash_attn_kernel(q_ref, k_ref, v_ref, o_ref, m_sc, l_sc, acc_sc,
                       *, scale, causal, kv_len, need_mask):
    kv_i = pl.program_id(2)

    @pl.when(kv_i == 0)
    def _():
        m_sc[...] = jnp.full_like(m_sc, -jnp.inf)
        l_sc[...] = jnp.zeros_like(l_sc)
        acc_sc[...] = jnp.zeros_like(acc_sc)

    # Scores for this (q block, kv block): (Bt, tq, tkv), f32 accumulation.
    s = jnp.einsum("bqd,bkd->bqk", q_ref[...], k_ref[...],
                   preferred_element_type=jnp.float32) * scale

    if need_mask:
        _, tq, tkv = s.shape
        kv_pos = kv_i * tkv + jax.lax.broadcasted_iota(jnp.int32, (tq, tkv), 1)
        valid = kv_pos < kv_len
        if causal:
            q_pos = (pl.program_id(1) * tq +
                     jax.lax.broadcasted_iota(jnp.int32, (tq, tkv), 0))
            valid = jnp.logical_and(valid, kv_pos <= q_pos)
        s = jnp.where(valid[None], s, jnp.float32(-1e30))

    m_prev = m_sc[...]
    m_new = jnp.maximum(m_prev, s.max(axis=-1, keepdims=True))
    alpha = jnp.exp(m_prev - m_new)
    p = jnp.exp(s - m_new)
    l_sc[...] = alpha * l_sc[...] + p.sum(axis=-1, keepdims=True)
    acc_sc[...] = alpha * acc_sc[...] + jnp.einsum(
        "bqk,bkd->bqd", p.astype(v_ref.dtype), v_ref[...],
        preferred_element_type=jnp.float32)
    m_sc[...] = m_new

    @pl.when(kv_i == pl.num_programs(2) - 1)
    def _():
        o_ref[...] = (acc_sc[...] *
                      pl.reciprocal(l_sc[...], approx=True)).astype(o_ref.dtype)


def _pick_bh_tile(BH, tq, tkv, Dp, budget=512 * 1024):
    """Largest divisor of BH whose q/k/v blocks stay <= `budget` bytes each."""
    per = 4 * Dp * max(tq, tkv)
    cap = max(1, budget // per)
    bt = 1
    for d in range(1, BH + 1):
        if BH % d == 0 and d <= cap:
            bt = d
    return bt


def flash_attention(q, k, v, scale, causal):
    """q: [BH, Sq, Dh], k/v: [BH, Sk, Dh] -> [BH, Sq, Dh]."""
    BH, Sq, Dh = q.shape
    Sk = k.shape[1]

    Dp = _round_up(Dh, 128)          # lane-dense head dim (pad with zeros)
    tq, Sqp = _tile(Sq, 128)
    tkv, Skp = _tile(Sk, 128)
    Bt = _pick_bh_tile(BH, tq, tkv, Dp)   # several (batch*head) slabs per step

    qp = _pad3(q, Sqp, Dp)
    kp = _pad3(k, Skp, Dp)
    vp = _pad3(v, Skp, Dp)

    kernel = functools.partial(
        _flash_attn_kernel, scale=scale, causal=causal, kv_len=Sk,
        need_mask=causal or (Skp != Sk))

    out = pl.pallas_call(
        kernel,
        out_shape=jax.ShapeDtypeStruct((BH, Sqp, Dp), q.dtype),
        grid=(BH // Bt, Sqp // tq, Skp // tkv),
        in_specs=[
            pl.BlockSpec((Bt, tq, Dp), lambda b, i, j: (b, i, 0)),
            pl.BlockSpec((Bt, tkv, Dp), lambda b, i, j: (b, j, 0)),
            pl.BlockSpec((Bt, tkv, Dp), lambda b, i, j: (b, j, 0)),
        ],
        out_specs=pl.BlockSpec((Bt, tq, Dp), lambda b, i, j: (b, i, 0)),
        scratch_shapes=[
            pltpu.VMEM((Bt, tq, 1), jnp.float32),
            pltpu.VMEM((Bt, tq, 1), jnp.float32),
            pltpu.VMEM((Bt, tq, Dp), jnp.float32),
        ],
        compiler_params=pltpu.CompilerParams(
            dimension_semantics=("parallel", "parallel", "arbitrary")),
    )(qp, kp, vp)

    if Sqp != Sq or Dp != Dh:
        out = out[:, :Sq, :Dh]
    return out


# ----------------------------------------------------------------------------
# Transformer building blocks
# ----------------------------------------------------------------------------
def multi_head_attention(p, x_q, x_kv, num_heads, causal):
    """x_q: [B, Sq, D], x_kv: [B, Sk, D] -> [B, Sq, D].

    Self-attention params carry a fused 'wqkv' (single projection matmul over
    x); cross-attention carries separate 'wq' and a fused 'wkv' over enc_out.
    """
    B, Sq, D = x_q.shape
    Sk = x_kv.shape[1]
    dh = D // num_heads

    if "wqkv" in p:                      # self-attention: one fused QKV matmul
        qkv = linear(x_q.reshape(B * Sq, D), p["wqkv"], p["bqkv"])
        q, k, v = qkv[:, :D], qkv[:, D:2 * D], qkv[:, 2 * D:]
        Sk = Sq
    else:                                # cross-attention: Q + fused K/V
        q = linear(x_q.reshape(B * Sq, D), p["wq"], p["bq"])
        kv = linear(x_kv.reshape(B * Sk, D), p["wkv"], p["bkv"])
        k, v = kv[:, :D], kv[:, D:]

    def split_heads(t, S):
        return (t.reshape(B, S, num_heads, dh)
                 .transpose(0, 2, 1, 3)
                 .reshape(B * num_heads, S, dh))

    qh, kh, vh = split_heads(q, Sq), split_heads(k, Sk), split_heads(v, Sk)

    attn = flash_attention(qh, kh, vh, scale=1.0 / (dh ** 0.5), causal=causal)
    attn = (attn.reshape(B, num_heads, Sq, dh)
                .transpose(0, 2, 1, 3)
                .reshape(B * Sq, D))
    out = linear(attn, p["wo"], p["bo"])
    return out.reshape(B, Sq, D)


def encoder_layer(p, x, num_heads):
    a = multi_head_attention(p["attn"], x, x, num_heads, causal=False)
    x = add_and_norm(p["ln1"], x, a)
    f = feed_forward(p["ffn"], x)
    x = add_and_norm(p["ln2"], x, f)
    return x


def decoder_layer(p, x, enc_out, num_heads):
    a = multi_head_attention(p["self_attn"], x, x, num_heads, causal=True)
    x = add_and_norm(p["ln1"], x, a)
    c = multi_head_attention(p["cross_attn"], x, enc_out, num_heads, causal=False)
    x = add_and_norm(p["ln2"], x, c)
    f = feed_forward(p["ffn"], x)
    x = add_and_norm(p["ln3"], x, f)
    return x


def positional_encoding(S, D, dtype=jnp.float32):
    pos = jnp.arange(S, dtype=jnp.float32)[:, None]
    i = jnp.arange(D, dtype=jnp.float32)[None, :]
    angle = pos / jnp.power(10000.0, (2.0 * jnp.floor(i / 2.0)) / D)
    pe = jnp.where((jnp.arange(D) % 2) == 0, jnp.sin(angle), jnp.cos(angle))
    return pe.astype(dtype)


def transformer_forward(params, src_seq, trg_seq, config):
    """src_seq: [B, S, D], trg_seq: [B, T, D] -> decoder output [B, T, D]."""
    B, S, D = src_seq.shape
    T = trg_seq.shape[1]
    H = config["head"]

    # TODO(synk): the reference sourceMask builds padding masks from token ids
    # (pad=0); inputs here are continuous embeddings, so encoder/cross masks are
    # all-valid (mask skipped entirely in-kernel) and the decoder self-attention
    # uses a causal mask generated in-kernel from iota (never materialized).
    # TODO(synk): dropout (rate=config['dropout']) is identity at inference.
    x = src_seq + positional_encoding(S, D, src_seq.dtype)[None]
    for lp in params["encoder"]:
        x = encoder_layer(lp, x, H)
    en_output = x

    y = trg_seq + positional_encoding(T, D, trg_seq.dtype)[None]
    for lp in params["decoder"]:
        y = decoder_layer(lp, y, en_output, H)
    return y


# ----------------------------------------------------------------------------
# Deterministic parameter init
# ----------------------------------------------------------------------------
def _init_attn(key, D, fused_qkv):
    ks = jax.random.split(key, 3)
    scale = 0.02
    if fused_qkv:
        return {
            "wqkv": scale * jax.random.normal(ks[0], (D, 3 * D), jnp.float32),
            "bqkv": jnp.zeros((3 * D,), jnp.float32),
            "wo": scale * jax.random.normal(ks[2], (D, D), jnp.float32),
            "bo": jnp.zeros((D,), jnp.float32),
        }
    return {
        "wq": scale * jax.random.normal(ks[0], (D, D), jnp.float32),
        "bq": jnp.zeros((D,), jnp.float32),
        "wkv": scale * jax.random.normal(ks[1], (D, 2 * D), jnp.float32),
        "bkv": jnp.zeros((2 * D,), jnp.float32),
        "wo": scale * jax.random.normal(ks[2], (D, D), jnp.float32),
        "bo": jnp.zeros((D,), jnp.float32),
    }


def _init_ffn(key, D, Hid):
    k1, k2 = jax.random.split(key)
    scale = 0.02
    return {
        "w1": scale * jax.random.normal(k1, (D, Hid), jnp.float32),
        "b1": jnp.zeros((Hid,), jnp.float32),
        "w2": scale * jax.random.normal(k2, (Hid, D), jnp.float32),
        "b2": jnp.zeros((D,), jnp.float32),
    }


def _init_ln(D):
    return {"gamma": jnp.ones((D,), jnp.float32),
            "beta": jnp.zeros((D,), jnp.float32)}


def init_params(key, config):
    D, Hid, L = config["d_model"], config["hidden_size"], config["layer_size"]
    enc_keys = jax.random.split(jax.random.fold_in(key, 0), L)
    dec_keys = jax.random.split(jax.random.fold_in(key, 1), L)
    encoder = []
    for k in enc_keys:
        k1, k2 = jax.random.split(k)
        encoder.append({"attn": _init_attn(k1, D, fused_qkv=True),
                        "ln1": _init_ln(D),
                        "ffn": _init_ffn(k2, D, Hid), "ln2": _init_ln(D)})
    decoder = []
    for k in dec_keys:
        k1, k2, k3 = jax.random.split(k, 3)
        decoder.append({"self_attn": _init_attn(k1, D, fused_qkv=True),
                        "ln1": _init_ln(D),
                        "cross_attn": _init_attn(k2, D, fused_qkv=False),
                        "ln2": _init_ln(D),
                        "ffn": _init_ffn(k3, D, Hid), "ln3": _init_ln(D)})
    return {"encoder": encoder, "decoder": decoder}


# ----------------------------------------------------------------------------
if __name__ == "__main__":
    config = {
        "d_model": 32,
        "hidden_size": 64,
        "sentence_length": 8,
        "trg_length": 8,
        "layer_size": 2,
        "head": 4,
        "pad": 0,
        "dropout": 0.1,
    }

    key = jax.random.PRNGKey(0)
    kp, ks, kt = jax.random.split(key, 3)

    B, S, T, D = 2, 8, 8, config["d_model"]
    src_seq = jax.random.normal(ks, (B, S, D), jnp.float32)
    trg_seq = jax.random.normal(kt, (B, T, D), jnp.float32)

    params = init_params(kp, config)

    fwd = jax.jit(lambda p, s, t: transformer_forward(p, s, t, config))
    out = fwd(params, src_seq, trg_seq)
    out = jax.block_until_ready(out)
    assert out.shape == (B, T, D)
    assert jnp.all(jnp.isfinite(out))
    print("KERNEL_OK")
</pallas_src>

<mosaic_0001>
module attributes {stable_mosaic.version = 11 : i64} {
  func.func @_matmul_nok_kernel(%arg0: i32, %arg1: i32, %arg2: memref<16x32xf32, #tpu.memory_space<vmem>>, %arg3: memref<32x96xf32, #tpu.memory_space<vmem>>, %arg4: memref<1x96xf32, #tpu.memory_space<vmem>>, %arg5: memref<16x96xf32, #tpu.memory_space<vmem>>) attributes {dimension_semantics = [#tpu.dimension_semantics<parallel>, #tpu.dimension_semantics<parallel>], iteration_bounds = array<i64: 1, 1>, scalar_prefetch = 0 : i64, scratch_operands = 0 : i64, tpu.core_type = #tpu.core_type<tc>, window_params = [{transform_indices = @transform_0, window_bounds = array<i64: 16, 32>}, {transform_indices = @transform_1, window_bounds = array<i64: 32, 96>}, {transform_indices = @transform_2, window_bounds = array<i64: 1, 96>}, {transform_indices = @transform_3, window_bounds = array<i64: 16, 96>}]} {
    %c0 = arith.constant 0 : index
    %c0_0 = arith.constant 0 : index
    %0 = vector.load %arg2[%c0, %c0_0] : memref<16x32xf32, #tpu.memory_space<vmem>>, vector<16x32xf32>
    %c0_1 = arith.constant 0 : index
    %c0_2 = arith.constant 0 : index
    %1 = vector.load %arg3[%c0_1, %c0_2] : memref<32x96xf32, #tpu.memory_space<vmem>>, vector<32x96xf32>
    %cst = arith.constant dense<0.000000e+00> : vector<16x96xf32>
    %2 = tpu.matmul %0, %1, %cst {dimension_numbers = #tpu.dot_dimension_numbers<[1], [0], [0], [1], [0, 0, 1, 1], [], []>} : vector<16x32xf32>, vector<32x96xf32>, vector<16x96xf32> -> vector<16x96xf32>
    %c0_3 = arith.constant 0 : index
    %c0_4 = arith.constant 0 : index
    %3 = vector.load %arg4[%c0_3, %c0_4] : memref<1x96xf32, #tpu.memory_space<vmem>>, vector<1x96xf32>
    %4 = vector.broadcast %3 : vector<1x96xf32> to vector<16x96xf32>
    %5 = arith.addf %2, %4 : vector<16x96xf32>
    %c0_5 = arith.constant 0 : index
    %c0_6 = arith.constant 0 : index
    %6 = vector.load %arg5[%c0_5, %c0_6] : memref<16x96xf32, #tpu.memory_space<vmem>>, vector<16x96xf32>
    tpu.vector_store %arg5[%c0_5, %c0_6], %5 {strides = array<i32>} : memref<16x96xf32, #tpu.memory_space<vmem>>, vector<16x96xf32>,
    return
  }
  func.func @transform_0(%arg0: i32, %arg1: i32) -> (i32, i32) {
    %c0_i32 = arith.constant 0 : i32
    %c0_i32_0 = arith.constant 0 : i32
    return %arg0, %c0_i32 : i32, i32
  }
  func.func @transform_1(%arg0: i32, %arg1: i32) -> (i32, i32) {
    %c0_i32 = arith.constant 0 : i32
    %c0_i32_0 = arith.constant 0 : i32
    return %c0_i32, %arg1 : i32, i32
  }
  func.func @transform_2(%arg0: i32, %arg1: i32) -> (i32, i32) {
    %c0_i32 = arith.constant 0 : i32
    %c0_i32_0 = arith.constant 0 : i32
    return %c0_i32, %arg1 : i32, i32
  }
  func.func @transform_3(%arg0: i32, %arg1: i32) -> (i32, i32) {
    %c0_i32 = arith.constant 0 : i32
    return %arg0, %arg1 : i32, i32
  }
}

module attributes {stable_mosaic.version = 11 : i64} {
  func.func @_flash_attn_kernel(%arg0: i32, %arg1: i32, %arg2: i32, %arg3: memref<8x8x128xf32, #tpu.memory_space<vmem>>, %arg4: memref<8x8x128xf32, #tpu.memory_space<vmem>>, %arg5: memref<8x8x128xf32, #tpu.memory_space<vmem>>, %arg6: memref<8x8x128xf32, #tpu.memory_space<vmem>>, %arg7: memref<8x8x1xf32, #tpu.memory_space<vmem>>, %arg8: memref<8x8x1xf32, #tpu.memory_space<vmem>>, %arg9: memref<8x8x128xf32, #tpu.memory_space<vmem>>) attributes {dimension_semantics = [#tpu.dimension_semantics<parallel>, #tpu.dimension_semantics<parallel>, #tpu.dimension_semantics<arbitrary>], iteration_bounds = array<i64: 1, 1, 1>, scalar_prefetch = 0 : i64, scratch_operands = 3 : i64, tpu.core_type = #tpu.core_type<tc>, window_params = [{transform_indices = @transform_0, window_bounds = array<i64: 8, 8, 128>}, {transform_indices = @transform_1, window_bounds = array<i64: 8, 8, 128>}, {transform_indices = @transform_2, window_bounds = array<i64: 8, 8, 128>}, {transform_indices = @transform_3, window_bounds = array<i64: 8, 8, 128>}]} {
    %c0_i32 = arith.constant 0 : i32
    %0 = arith.cmpi eq, %arg2, %c0_i32 : i32
    %1 = arith.extui %0 : i1 to i32
    %c0_i32_0 = arith.constant 0 : i32
    %2 = arith.cmpi ne, %1, %c0_i32_0 : i32
    scf.if %2 {
      %cst_36 = arith.constant 0xFF800000 : f32
      %51 = vector.broadcast %cst_36 : f32 to vector<8x8x1xf32>
      %c0_37 = arith.constant 0 : index
      %c0_38 = arith.constant 0 : index
      %c0_39 = arith.constant 0 : index
      %52 = vector.load %arg7[%c0_37, %c0_38, %c0_39] : memref<8x8x1xf32, #tpu.memory_space<vmem>>, vector<8x8x1xf32>
      tpu.vector_store %arg7[%c0_37, %c0_38, %c0_39], %51 {strides = array<i32>} : memref<8x8x1xf32, #tpu.memory_space<vmem>>, vector<8x8x1xf32>,
      %cst_40 = arith.constant 0.000000e+00 : f32
      %53 = vector.broadcast %cst_40 : f32 to vector<8x8x1xf32>
      %c0_41 = arith.constant 0 : index
      %c0_42 = arith.constant 0 : index
      %c0_43 = arith.constant 0 : index
      %54 = vector.load %arg8[%c0_41, %c0_42, %c0_43] : memref<8x8x1xf32, #tpu.memory_space<vmem>>, vector<8x8x1xf32>
      tpu.vector_store %arg8[%c0_41, %c0_42, %c0_43], %53 {strides = array<i32>} : memref<8x8x1xf32, #tpu.memory_space<vmem>>, vector<8x8x1xf32>,
      %cst_44 = arith.constant 0.000000e+00 : f32
      %55 = vector.broadcast %cst_44 : f32 to vector<8x8x128xf32>
      %c0_45 = arith.constant 0 : index
      %c0_46 = arith.constant 0 : index
      %c0_47 = arith.constant 0 : index
      %56 = vector.load %arg9[%c0_45, %c0_46, %c0_47] : memref<8x8x128xf32, #tpu.memory_space<vmem>>, vector<8x8x128xf32>
      tpu.vector_store %arg9[%c0_45, %c0_46, %c0_47], %55 {strides = array<i32>} : memref<8x8x128xf32, #tpu.memory_space<vmem>>, vector<8x8x128xf32>,
    } else {
    }
    %c0 = arith.constant 0 : index
    %c0_1 = arith.constant 0 : index
    %c0_2 = arith.constant 0 : index
    %3 = vector.load %arg3[%c0, %c0_1, %c0_2] : memref<8x8x128xf32, #tpu.memory_space<vmem>>, vector<8x8x128xf32>
    %c0_3 = arith.constant 0 : index
    %c0_4 = arith.constant 0 : index
    %c0_5 = arith.constant 0 : index
    %4 = vector.load %arg4[%c0_3, %c0_4, %c0_5] : memref<8x8x128xf32, #tpu.memory_space<vmem>>, vector<8x8x128xf32>
    "tpu.trace_start"() <{level = 10 : i32, message = "bqd,bkd->bqk"}> : () -> ()
    %cst = arith.constant dense<0.000000e+00> : vector<8x8x8xf32>
    %5 = tpu.matmul %3, %4, %cst {dimension_numbers = #tpu.dot_dimension_numbers<[2], [2], [1], [1], [0, 0, 0, 1, 1, 1], [0], [0]>} : vector<8x8x128xf32>, vector<8x8x128xf32>, vector<8x8x8xf32> -> vector<8x8x8xf32>
    "tpu.trace_stop"() : () -> ()
    %cst_6 = arith.constant 0.353553385 : f32
    %6 = vector.broadcast %cst_6 : f32 to vector<8x8x8xf32>
    %7 = arith.mulf %5, %6 : vector<8x8x8xf32>
    %c8_i32 = arith.constant 8 : i32
    %8 = arith.muli %arg2, %c8_i32 : i32
    %9 = tpu.iota {dimensions = array<i32: 1>} : vector<8x8xi32>
    %10 = vector.broadcast %8 : i32 to vector<8x8xi32>
    %11 = arith.addi %10, %9 : vector<8x8xi32>
    %c8_i32_7 = arith.constant 8 : i32
    %12 = vector.broadcast %c8_i32_7 : i32 to vector<8x8xi32>
    %13 = arith.cmpi slt, %11, %12 : vector<8x8xi32>
    %c8_i32_8 = arith.constant 8 : i32
    %14 = arith.muli %arg1, %c8_i32_8 : i32
    %15 = tpu.iota {dimensions = array<i32: 0>} : vector<8x8xi32>
    %16 = vector.broadcast %14 : i32 to vector<8x8xi32>
    %17 = arith.addi %16, %15 : vector<8x8xi32>
    %18 = arith.cmpi sle, %11, %17 : vector<8x8xi32>
    %19 = arith.andi %13, %18 : vector<8x8xi1>
    %20 = vector.shape_cast %19 : vector<8x8xi1> to vector<1x8x8xi1>
    %cst_9 = arith.constant -1.000000e+30 : f32
    %21 = vector.shape_cast %20 : vector<1x8x8xi1> to vector<1x8x8xi1>
    %22 = vector.broadcast %21 : vector<1x8x8xi1> to vector<8x8x8xi1>
    %23 = vector.broadcast %cst_9 : f32 to vector<8x8x8xf32>
    %24 = arith.select %22, %7, %23 : vector<8x8x8xi1>, vector<8x8x8xf32>
    %c0_10 = arith.constant 0 : index
    %c0_11 = arith.constant 0 : index
    %c0_12 = arith.constant 0 : index
    %25 = vector.load %arg7[%c0_10, %c0_11, %c0_12] : memref<8x8x1xf32, #tpu.memory_space<vmem>>, vector<8x8x1xf32>
    %cst_13 = arith.constant dense<0xFF800000> : vector<8x8xf32>
    %26 = vector.multi_reduction <maximumf>, %24, %cst_13 [2] : vector<8x8x8xf32> to vector<8x8xf32>
    %27 = vector.shape_cast %26 : vector<8x8xf32> to vector<8x8x1xf32>
    %28 = arith.maximumf %25, %27 : vector<8x8x1xf32>
    %29 = arith.subf %25, %28 : vector<8x8x1xf32>
    %30 = math.exp %29 : vector<8x8x1xf32>
    %31 = vector.broadcast %28 : vector<8x8x1xf32> to vector<8x8x8xf32>
    %32 = arith.subf %24, %31 : vector<8x8x8xf32>
    %33 = math.exp %32 : vector<8x8x8xf32>
    %c0_14 = arith.constant 0 : index
    %c0_15 = arith.constant 0 : index
    %c0_16 = arith.constant 0 : index
    %34 = vector.load %arg8[%c0_14, %c0_15, %c0_16] : memref<8x8x1xf32, #tpu.memory_space<vmem>>, vector<8x8x1xf32>
    %35 = arith.mulf %30, %34 : vector<8x8x1xf32>
    %cst_17 = arith.constant dense<0.000000e+00> : vector<8x8xf32>
    %36 = vector.multi_reduction <add>, %33, %cst_17 [2] : vector<8x8x8xf32> to vector<8x8xf32>
    %37 = vector.shape_cast %36 : vector<8x8xf32> to vector<8x8x1xf32>
    %38 = arith.addf %35, %37 : vector<8x8x1xf32>
    %c0_18 = arith.constant 0 : index
    %c0_19 = arith.constant 0 : index
    %c0_20 = arith.constant 0 : index
    %39 = vector.load %arg8[%c0_18, %c0_19, %c0_20] : memref<8x8x1xf32, #tpu.memory_space<vmem>>, vector<8x8x1xf32>
    tpu.vector_store %arg8[%c0_18, %c0_19, %c0_20], %38 {strides = array<i32>} : memref<8x8x1xf32, #tpu.memory_space<vmem>>, vector<8x8x1xf32>,
    %c0_21 = arith.constant 0 : index
    %c0_22 = arith.constant 0 : index
    %c0_23 = arith.constant 0 : index
    %40 = vector.load %arg9[%c0_21, %c0_22, %c0_23] : memref<8x8x128xf32, #tpu.memory_space<vmem>>, vector<8x8x128xf32>
    %41 = vector.broadcast %30 : vector<8x8x1xf32> to vector<8x8x128xf32>
    %42 = arith.mulf %41, %40 : vector<8x8x128xf32>
    %c0_24 = arith.constant 0 : index
    %c0_25 = arith.constant 0 : index
    %c0_26 = arith.constant 0 : index
    %43 = vector.load %arg5[%c0_24, %c0_25, %c0_26] : memref<8x8x128xf32, #tpu.memory_space<vmem>>, vector<8x8x128xf32>
    "tpu.trace_start"() <{level = 10 : i32, message = "bqk,bkd->bqd"}> : () -> ()
    %cst_27 = arith.constant dense<0.000000e+00> : vector<8x8x128xf32>
    %44 = tpu.matmul %33, %43, %cst_27 {dimension_numbers = #tpu.dot_dimension_numbers<[2], [1], [1], [2], [0, 0, 0, 1, 1, 2], [0], [0]>} : vector<8x8x8xf32>, vector<8x8x128xf32>, vector<8x8x128xf32> -> vector<8x8x128xf32>
    "tpu.trace_stop"() : () -> ()
    %45 = arith.addf %42, %44 : vector<8x8x128xf32>
    %c0_28 = arith.constant 0 : index
    %c0_29 = arith.constant 0 : index
    %c0_30 = arith.constant 0 : index
    %46 = vector.load %arg9[%c0_28, %c0_29, %c0_30] : memref<8x8x128xf32, #tpu.memory_space<vmem>>, vector<8x8x128xf32>
    tpu.vector_store %arg9[%c0_28, %c0_29, %c0_30], %45 {strides = array<i32>} : memref<8x8x128xf32, #tpu.memory_space<vmem>>, vector<8x8x128xf32>,
    %c0_31 = arith.constant 0 : index
    %c0_32 = arith.constant 0 : index
    %c0_33 = arith.constant 0 : index
    %47 = vector.load %arg7[%c0_31, %c0_32, %c0_33] : memref<8x8x1xf32, #tpu.memory_space<vmem>>, vector<8x8x1xf32>
    tpu.vector_store %arg7[%c0_31, %c0_32, %c0_33], %28 {strides = array<i32>} : memref<8x8x1xf32, #tpu.memory_space<vmem>>, vector<8x8x1xf32>,
    %c0_i32_34 = arith.constant 0 : i32
    %48 = arith.cmpi eq, %arg2, %c0_i32_34 : i32
    %49 = arith.extui %48 : i1 to i32
    %c0_i32_35 = arith.constant 0 : i32
    %50 = arith.cmpi ne, %49, %c0_i32_35 : i32
    scf.if %50 {
      %c0_36 = arith.constant 0 : index
      %c0_37 = arith.constant 0 : index
      %c0_38 = arith.constant 0 : index
      %51 = vector.load %arg9[%c0_36, %c0_37, %c0_38] : memref<8x8x128xf32, #tpu.memory_space<vmem>>, vector<8x8x128xf32>
      %c0_39 = arith.constant 0 : index
      %c0_40 = arith.constant 0 : index
      %c0_41 = arith.constant 0 : index
      %52 = vector.load %arg8[%c0_39, %c0_40, %c0_41] : memref<8x8x1xf32, #tpu.memory_space<vmem>>, vector<8x8x1xf32>
      %53 = tpu.reciprocal %52 {approx = true} : vector<8x8x1xf32> -> vector<8x8x1xf32>
      %54 = vector.broadcast %53 : vector<8x8x1xf32> to vector<8x8x128xf32>
      %55 = arith.mulf %51, %54 : vector<8x8x128xf32>
      %c0_42 = arith.constant 0 : index
      %c0_43 = arith.constant 0 : index
      %c0_44 = arith.constant 0 : index
      %56 = vector.load %arg6[%c0_42, %c0_43, %c0_44] : memref<8x8x128xf32, #tpu.memory_space<vmem>>, vector<8x8x128xf32>
      tpu.vector_store %arg6[%c0_42, %c0_43, %c0_44], %55 {strides = array<i32>} : memref<8x8x128xf32, #tpu.memory_space<vmem>>, vector<8x8x128xf32>,
    } else {
    }
    return
  }
  func.func @transform_0(%arg0: i32, %arg1: i32, %arg2: i32) -> (i32, i32, i32) {
    %c0_i32 = arith.constant 0 : i32
    %c0_i32_0 = arith.constant 0 : i32
    return %arg0, %arg1, %c0_i32 : i32, i32, i32
  }
  func.func @transform_1(%arg0: i32, %arg1: i32, %arg2: i32) -> (i32, i32, i32) {
    %c0_i32 = arith.constant 0 : i32
    %c0_i32_0 = arith.constant 0 : i32
    return %arg0, %arg2, %c0_i32 : i32, i32, i32
  }
  func.func @transform_2(%arg0: i32, %arg1: i32, %arg2: i32) -> (i32, i32, i32) {
    %c0_i32 = arith.constant 0 : i32
    %c0_i32_0 = arith.constant 0 : i32
    return %arg0, %arg2, %c0_i32 : i32, i32, i32
  }
  func.func @transform_3(%arg0: i32, %arg1: i32, %arg2: i32) -> (i32, i32, i32) {
    %c0_i32 = arith.constant 0 : i32
    %c0_i32_0 = arith.constant 0 : i32
    return %arg0, %arg1, %c0_i32 : i32, i32, i32
  }
}

module attributes {stable_mosaic.version = 11 : i64} {
  func.func @_matmul_nok_kernel(%arg0: i32, %arg1: i32, %arg2: memref<16x32xf32, #tpu.memory_space<vmem>>, %arg3: memref<32x32xf32, #tpu.memory_space<vmem>>, %arg4: memref<1x32xf32, #tpu.memory_space<vmem>>, %arg5: memref<16x32xf32, #tpu.memory_space<vmem>>) attributes {dimension_semantics = [#tpu.dimension_semantics<parallel>, #tpu.dimension_semantics<parallel>], iteration_bounds = array<i64: 1, 1>, scalar_prefetch = 0 : i64, scratch_operands = 0 : i64, tpu.core_type = #tpu.core_type<tc>, window_params = [{transform_indices = @transform_0, window_bounds = array<i64: 16, 32>}, {transform_indices = @transform_1, window_bounds = array<i64: 32, 32>}, {transform_indices = @transform_2, window_bounds = array<i64: 1, 32>}, {transform_indices = @transform_3, window_bounds = array<i64: 16, 32>}]} {
    %c0 = arith.constant 0 : index
    %c0_0 = arith.constant 0 : index
    %0 = vector.load %arg2[%c0, %c0_0] : memref<16x32xf32, #tpu.memory_space<vmem>>, vector<16x32xf32>
    %c0_1 = arith.constant 0 : index
    %c0_2 = arith.constant 0 : index
    %1 = vector.load %arg3[%c0_1, %c0_2] : memref<32x32xf32, #tpu.memory_space<vmem>>, vector<32x32xf32>
    %cst = arith.constant dense<0.000000e+00> : vector<16x32xf32>
    %2 = tpu.matmul %0, %1, %cst {dimension_numbers = #tpu.dot_dimension_numbers<[1], [0], [0], [1], [0, 0, 1, 1], [], []>} : vector<16x32xf32>, vector<32x32xf32>, vector<16x32xf32> -> vector<16x32xf32>
    %c0_3 = arith.constant 0 : index
    %c0_4 = arith.constant 0 : index
    %3 = vector.load %arg4[%c0_3, %c0_4] : memref<1x32xf32, #tpu.memory_space<vmem>>, vector<1x32xf32>
    %4 = vector.broadcast %3 : vector<1x32xf32> to vector<16x32xf32>
    %5 = arith.addf %2, %4 : vector<16x32xf32>
    %c0_5 = arith.constant 0 : index
    %c0_6 = arith.constant 0 : index
    %6 = vector.load %arg5[%c0_5, %c0_6] : memref<16x32xf32, #tpu.memory_space<vmem>>, vector<16x32xf32>
    tpu.vector_store %arg5[%c0_5, %c0_6], %5 {strides = array<i32>} : memref<16x32xf32, #tpu.memory_space<vmem>>, vector<16x32xf32>,
    return
  }
  func.func @transform_0(%arg0: i32, %arg1: i32) -> (i32, i32) {
    %c0_i32 = arith.constant 0 : i32
    %c0_i32_0 = arith.constant 0 : i32
    return %arg0, %c0_i32 : i32, i32
  }
  func.func @transform_1(%arg0: i32, %arg1: i32) -> (i32, i32) {
    %c0_i32 = arith.constant 0 : i32
    %c0_i32_0 = arith.constant 0 : i32
    return %c0_i32, %arg1 : i32, i32
  }
  func.func @transform_2(%arg0: i32, %arg1: i32) -> (i32, i32) {
    %c0_i32 = arith.constant 0 : i32
    %c0_i32_0 = arith.constant 0 : i32
    return %c0_i32, %arg1 : i32, i32
  }
  func.func @transform_3(%arg0: i32, %arg1: i32) -> (i32, i32) {
    %c0_i32 = arith.constant 0 : i32
    return %arg0, %arg1 : i32, i32
  }
}

module attributes {stable_mosaic.version = 11 : i64} {
  func.func @_add_layernorm_kernel(%arg0: i32, %arg1: memref<16x32xf32, #tpu.memory_space<vmem>>, %arg2: memref<16x32xf32, #tpu.memory_space<vmem>>, %arg3: memref<1x32xf32, #tpu.memory_space<vmem>>, %arg4: memref<1x32xf32, #tpu.memory_space<vmem>>, %arg5: memref<16x32xf32, #tpu.memory_space<vmem>>) attributes {dimension_semantics = [#tpu.dimension_semantics<parallel>], iteration_bounds = array<i64: 1>, scalar_prefetch = 0 : i64, scratch_operands = 0 : i64, tpu.core_type = #tpu.core_type<tc>, window_params = [{transform_indices = @transform_0, window_bounds = array<i64: 16, 32>}, {transform_indices = @transform_1, window_bounds = array<i64: 16, 32>}, {pipeline_mode = #tpu.pipeline_mode<synchronous>, transform_indices = @transform_2, window_bounds = array<i64: 1, 32>}, {pipeline_mode = #tpu.pipeline_mode<synchronous>, transform_indices = @transform_3, window_bounds = array<i64: 1, 32>}, {transform_indices = @transform_4, window_bounds = array<i64: 16, 32>}]} {
    %c0 = arith.constant 0 : index
    %c0_0 = arith.constant 0 : index
    %0 = vector.load %arg1[%c0, %c0_0] : memref<16x32xf32, #tpu.memory_space<vmem>>, vector<16x32xf32>
    %c0_1 = arith.constant 0 : index
    %c0_2 = arith.constant 0 : index
    %1 = vector.load %arg2[%c0_1, %c0_2] : memref<16x32xf32, #tpu.memory_space<vmem>>, vector<16x32xf32>
    %2 = arith.addf %0, %1 : vector<16x32xf32>
    %cst = arith.constant dense<0.000000e+00> : vector<16xf32>
    %3 = vector.multi_reduction <add>, %2, %cst [1] : vector<16x32xf32> to vector<16xf32>
    %4 = vector.shape_cast %3 : vector<16xf32> to vector<16x1xf32>
    %cst_3 = arith.constant 3.200000e+01 : f32
    %5 = vector.broadcast %cst_3 : f32 to vector<16x1xf32>
    %6 = arith.divf %4, %5 : vector<16x1xf32>
    %7 = vector.broadcast %6 : vector<16x1xf32> to vector<16x32xf32>
    %8 = arith.subf %2, %7 : vector<16x32xf32>
    %9 = arith.mulf %8, %8 : vector<16x32xf32>
    %cst_4 = arith.constant dense<0.000000e+00> : vector<16xf32>
    %10 = vector.multi_reduction <add>, %9, %cst_4 [1] : vector<16x32xf32> to vector<16xf32>
    %11 = vector.shape_cast %10 : vector<16xf32> to vector<16x1xf32>
    %cst_5 = arith.constant 3.200000e+01 : f32
    %12 = vector.broadcast %cst_5 : f32 to vector<16x1xf32>
    %13 = arith.divf %11, %12 : vector<16x1xf32>
    %14 = vector.broadcast %6 : vector<16x1xf32> to vector<16x32xf32>
    %15 = arith.subf %2, %14 : vector<16x32xf32>
    %cst_6 = arith.constant 9.99999974E-6 : f32
    %16 = vector.broadcast %cst_6 : f32 to vector<16x1xf32>
    %17 = arith.addf %13, %16 : vector<16x1xf32>
    %18 = math.rsqrt %17 : vector<16x1xf32>
    %19 = vector.broadcast %18 : vector<16x1xf32> to vector<16x32xf32>
    %20 = arith.mulf %15, %19 : vector<16x32xf32>
    %c0_7 = arith.constant 0 : index
    %c0_8 = arith.constant 0 : index
    %21 = vector.load %arg3[%c0_7, %c0_8] : memref<1x32xf32, #tpu.memory_space<vmem>>, vector<1x32xf32>
    %22 = vector.broadcast %21 : vector<1x32xf32> to vector<16x32xf32>
    %23 = arith.mulf %20, %22 : vector<16x32xf32>
    %c0_9 = arith.constant 0 : index
    %c0_10 = arith.constant 0 : index
    %24 = vector.load %arg4[%c0_9, %c0_10] : memref<1x32xf32, #tpu.memory_space<vmem>>, vector<1x32xf32>
    %25 = vector.broadcast %24 : vector<1x32xf32> to vector<16x32xf32>
    %26 = arith.addf %23, %25 : vector<16x32xf32>
    %c0_11 = arith.constant 0 : index
    %c0_12 = arith.constant 0 : index
    %27 = vector.load %arg5[%c0_11, %c0_12] : memref<16x32xf32, #tpu.memory_space<vmem>>, vector<16x32xf32>
    tpu.vector_store %arg5[%c0_11, %c0_12], %26 {strides = array<i32>} : memref<16x32xf32, #tpu.memory_space<vmem>>, vector<16x32xf32>,
    return
  }
  func.func @transform_0(%arg0: i32) -> (i32, i32) {
    %c0_i32 = arith.constant 0 : i32
    %c0_i32_0 = arith.constant 0 : i32
    return %arg0, %c0_i32 : i32, i32
  }
  func.func @transform_1(%arg0: i32) -> (i32, i32) {
    %c0_i32 = arith.constant 0 : i32
    %c0_i32_0 = arith.constant 0 : i32
    return %arg0, %c0_i32 : i32, i32
  }
  func.func @transform_2(%arg0: i32) -> (i32, i32) {
    %c0_i32 = arith.constant 0 : i32
    %c0_i32_0 = arith.constant 0 : i32
    %c0_i32_1 = arith.constant 0 : i32
    return %c0_i32, %c0_i32_0 : i32, i32
  }
  func.func @transform_3(%arg0: i32) -> (i32, i32) {
    %c0_i32 = arith.constant 0 : i32
    %c0_i32_0 = arith.constant 0 : i32
    %c0_i32_1 = arith.constant 0 : i32
    return %c0_i32, %c0_i32_0 : i32, i32
  }
  func.func @transform_4(%arg0: i32) -> (i32, i32) {
    %c0_i32 = arith.constant 0 : i32
    %c0_i32_0 = arith.constant 0 : i32
    return %arg0, %c0_i32 : i32, i32
  }
}

module attributes {stable_mosaic.version = 11 : i64} {
  func.func @_ffn_kernel(%arg0: i32, %arg1: memref<16x32xf32, #tpu.memory_space<vmem>>, %arg2: memref<32x64xf32, #tpu.memory_space<vmem>>, %arg3: memref<1x64xf32, #tpu.memory_space<vmem>>, %arg4: memref<64x32xf32, #tpu.memory_space<vmem>>, %arg5: memref<1x32xf32, #tpu.memory_space<vmem>>, %arg6: memref<16x32xf32, #tpu.memory_space<vmem>>) attributes {dimension_semantics = [#tpu.dimension_semantics<parallel>], iteration_bounds = array<i64: 1>, scalar_prefetch = 0 : i64, scratch_operands = 0 : i64, tpu.core_type = #tpu.core_type<tc>, window_params = [{transform_indices = @transform_0, window_bounds = array<i64: 16, 32>}, {pipeline_mode = #tpu.pipeline_mode<synchronous>, transform_indices = @transform_1, window_bounds = array<i64: 32, 64>}, {pipeline_mode = #tpu.pipeline_mode<synchronous>, transform_indices = @transform_2, window_bounds = array<i64: 1, 64>}, {pipeline_mode = #tpu.pipeline_mode<synchronous>, transform_indices = @transform_3, window_bounds = array<i64: 64, 32>}, {pipeline_mode = #tpu.pipeline_mode<synchronous>, transform_indices = @transform_4, window_bounds = array<i64: 1, 32>}, {transform_indices = @transform_5, window_bounds = array<i64: 16, 32>}]} {
    %c0 = arith.constant 0 : index
    %c0_0 = arith.constant 0 : index
    %0 = vector.load %arg1[%c0, %c0_0] : memref<16x32xf32, #tpu.memory_space<vmem>>, vector<16x32xf32>
    %c0_1 = arith.constant 0 : index
    %c0_2 = arith.constant 0 : index
    %1 = vector.load %arg2[%c0_1, %c0_2] : memref<32x64xf32, #tpu.memory_space<vmem>>, vector<32x64xf32>
    %cst = arith.constant dense<0.000000e+00> : vector<16x64xf32>
    %2 = tpu.matmul %0, %1, %cst {dimension_numbers = #tpu.dot_dimension_numbers<[1], [0], [0], [1], [0, 0, 1, 1], [], []>} : vector<16x32xf32>, vector<32x64xf32>, vector<16x64xf32> -> vector<16x64xf32>
    %c0_3 = arith.constant 0 : index
    %c0_4 = arith.constant 0 : index
    %3 = vector.load %arg3[%c0_3, %c0_4] : memref<1x64xf32, #tpu.memory_space<vmem>>, vector<1x64xf32>
    %4 = vector.broadcast %3 : vector<1x64xf32> to vector<16x64xf32>
    %5 = arith.addf %2, %4 : vector<16x64xf32>
    %cst_5 = arith.constant 0.000000e+00 : f32
    %6 = vector.broadcast %cst_5 : f32 to vector<16x64xf32>
    %7 = arith.maximumf %5, %6 : vector<16x64xf32>
    %c0_6 = arith.constant 0 : index
    %c0_7 = arith.constant 0 : index
    %8 = vector.load %arg4[%c0_6, %c0_7] : memref<64x32xf32, #tpu.memory_space<vmem>>, vector<64x32xf32>
    %cst_8 = arith.constant dense<0.000000e+00> : vector<16x32xf32>
    %9 = tpu.matmul %7, %8, %cst_8 {dimension_numbers = #tpu.dot_dimension_numbers<[1], [0], [0], [1], [0, 0, 1, 1], [], []>} : vector<16x64xf32>, vector<64x32xf32>, vector<16x32xf32> -> vector<16x32xf32>
    %c0_9 = arith.constant 0 : index
    %c0_10 = arith.constant 0 : index
    %10 = vector.load %arg5[%c0_9, %c0_10] : memref<1x32xf32, #tpu.memory_space<vmem>>, vector<1x32xf32>
    %11 = vector.broadcast %10 : vector<1x32xf32> to vector<16x32xf32>
    %12 = arith.addf %9, %11 : vector<16x32xf32>
    %c0_11 = arith.constant 0 : index
    %c0_12 = arith.constant 0 : index
    %13 = vector.load %arg6[%c0_11, %c0_12] : memref<16x32xf32, #tpu.memory_space<vmem>>, vector<16x32xf32>
    tpu.vector_store %arg6[%c0_11, %c0_12], %12 {strides = array<i32>} : memref<16x32xf32, #tpu.memory_space<vmem>>, vector<16x32xf32>,
    return
  }
  func.func @transform_0(%arg0: i32) -> (i32, i32) {
    %c0_i32 = arith.constant 0 : i32
    %c0_i32_0 = arith.constant 0 : i32
    return %arg0, %c0_i32 : i32, i32
  }
  func.func @transform_1(%arg0: i32) -> (i32, i32) {
    %c0_i32 = arith.constant 0 : i32
    %c0_i32_0 = arith.constant 0 : i32
    %c0_i32_1 = arith.constant 0 : i32
    return %c0_i32, %c0_i32_0 : i32, i32
  }
  func.func @transform_2(%arg0: i32) -> (i32, i32) {
    %c0_i32 = arith.constant 0 : i32
    %c0_i32_0 = arith.constant 0 : i32
    %c0_i32_1 = arith.constant 0 : i32
    return %c0_i32, %c0_i32_0 : i32, i32
  }
  func.func @transform_3(%arg0: i32) -> (i32, i32) {
    %c0_i32 = arith.constant 0 : i32
    %c0_i32_0 = arith.constant 0 : i32
    %c0_i32_1 = arith.constant 0 : i32
    return %c0_i32, %c0_i32_0 : i32, i32
  }
  func.func @transform_4(%arg0: i32) -> (i32, i32) {
    %c0_i32 = arith.constant 0 : i32
    %c0_i32_0 = arith.constant 0 : i32
    %c0_i32_1 = arith.constant 0 : i32
    return %c0_i32, %c0_i32_0 : i32, i32
  }
  func.func @transform_5(%arg0: i32) -> (i32, i32) {
    %c0_i32 = arith.constant 0 : i32
    %c0_i32_0 = arith.constant 0 : i32
    return %arg0, %c0_i32 : i32, i32
  }
}

module attributes {stable_mosaic.version = 11 : i64} {
  func.func @_matmul_nok_kernel(%arg0: i32, %arg1: i32, %arg2: memref<16x32xf32, #tpu.memory_space<vmem>>, %arg3: memref<32x64xf32, #tpu.memory_space<vmem>>, %arg4: memref<1x64xf32, #tpu.memory_space<vmem>>, %arg5: memref<16x64xf32, #tpu.memory_space<vmem>>) attributes {dimension_semantics = [#tpu.dimension_semantics<parallel>, #tpu.dimension_semantics<parallel>], iteration_bounds = array<i64: 1, 1>, scalar_prefetch = 0 : i64, scratch_operands = 0 : i64, tpu.core_type = #tpu.core_type<tc>, window_params = [{transform_indices = @transform_0, window_bounds = array<i64: 16, 32>}, {transform_indices = @transform_1, window_bounds = array<i64: 32, 64>}, {transform_indices = @transform_2, window_bounds = array<i64: 1, 64>}, {transform_indices = @transform_3, window_bounds = array<i64: 16, 64>}]} {
    %c0 = arith.constant 0 : index
    %c0_0 = arith.constant 0 : index
    %0 = vector.load %arg2[%c0, %c0_0] : memref<16x32xf32, #tpu.memory_space<vmem>>, vector<16x32xf32>
    %c0_1 = arith.constant 0 : index
    %c0_2 = arith.constant 0 : index
    %1 = vector.load %arg3[%c0_1, %c0_2] : memref<32x64xf32, #tpu.memory_space<vmem>>, vector<32x64xf32>
    %cst = arith.constant dense<0.000000e+00> : vector<16x64xf32>
    %2 = tpu.matmul %0, %1, %cst {dimension_numbers = #tpu.dot_dimension_numbers<[1], [0], [0], [1], [0, 0, 1, 1], [], []>} : vector<16x32xf32>, vector<32x64xf32>, vector<16x64xf32> -> vector<16x64xf32>
    %c0_3 = arith.constant 0 : index
    %c0_4 = arith.constant 0 : index
    %3 = vector.load %arg4[%c0_3, %c0_4] : memref<1x64xf32, #tpu.memory_space<vmem>>, vector<1x64xf32>
    %4 = vector.broadcast %3 : vector<1x64xf32> to vector<16x64xf32>
    %5 = arith.addf %2, %4 : vector<16x64xf32>
    %c0_5 = arith.constant 0 : index
    %c0_6 = arith.constant 0 : index
    %6 = vector.load %arg5[%c0_5, %c0_6] : memref<16x64xf32, #tpu.memory_space<vmem>>, vector<16x64xf32>
    tpu.vector_store %arg5[%c0_5, %c0_6], %5 {strides = array<i32>} : memref<16x64xf32, #tpu.memory_space<vmem>>, vector<16x64xf32>,
    return
  }
  func.func @transform_0(%arg0: i32, %arg1: i32) -> (i32, i32) {
    %c0_i32 = arith.constant 0 : i32
    %c0_i32_0 = arith.constant 0 : i32
    return %arg0, %c0_i32 : i32, i32
  }
  func.func @transform_1(%arg0: i32, %arg1: i32) -> (i32, i32) {
    %c0_i32 = arith.constant 0 : i32
    %c0_i32_0 = arith.constant 0 : i32
    return %c0_i32, %arg1 : i32, i32
  }
  func.func @transform_2(%arg0: i32, %arg1: i32) -> (i32, i32) {
    %c0_i32 = arith.constant 0 : i32
    %c0_i32_0 = arith.constant 0 : i32
    return %c0_i32, %arg1 : i32, i32
  }
  func.func @transform_3(%arg0: i32, %arg1: i32) -> (i32, i32) {
    %c0_i32 = arith.constant 0 : i32
    return %arg0, %arg1 : i32, i32
  }
}

module attributes {stable_mosaic.version = 11 : i64} {
  func.func @_flash_attn_kernel(%arg0: i32, %arg1: i32, %arg2: i32, %arg3: memref<8x8x128xf32, #tpu.memory_space<vmem>>, %arg4: memref<8x8x128xf32, #tpu.memory_space<vmem>>, %arg5: memref<8x8x128xf32, #tpu.memory_space<vmem>>, %arg6: memref<8x8x128xf32, #tpu.memory_space<vmem>>, %arg7: memref<8x8x1xf32, #tpu.memory_space<vmem>>, %arg8: memref<8x8x1xf32, #tpu.memory_space<vmem>>, %arg9: memref<8x8x128xf32, #tpu.memory_space<vmem>>) attributes {dimension_semantics = [#tpu.dimension_semantics<parallel>, #tpu.dimension_semantics<parallel>, #tpu.dimension_semantics<arbitrary>], iteration_bounds = array<i64: 1, 1, 1>, scalar_prefetch = 0 : i64, scratch_operands = 3 : i64, tpu.core_type = #tpu.core_type<tc>, window_params = [{transform_indices = @transform_0, window_bounds = array<i64: 8, 8, 128>}, {transform_indices = @transform_1, window_bounds = array<i64: 8, 8, 128>}, {transform_indices = @transform_2, window_bounds = array<i64: 8, 8, 128>}, {transform_indices = @transform_3, window_bounds = array<i64: 8, 8, 128>}]} {
    %c0_i32 = arith.constant 0 : i32
    %0 = arith.cmpi eq, %arg2, %c0_i32 : i32
    %1 = arith.extui %0 : i1 to i32
    %c0_i32_0 = arith.constant 0 : i32
    %2 = arith.cmpi ne, %1, %c0_i32_0 : i32
    scf.if %2 {
      %cst_33 = arith.constant 0xFF800000 : f32
      %34 = vector.broadcast %cst_33 : f32 to vector<8x8x1xf32>
      %c0_34 = arith.constant 0 : index
      %c0_35 = arith.constant 0 : index
      %c0_36 = arith.constant 0 : index
      %35 = vector.load %arg7[%c0_34, %c0_35, %c0_36] : memref<8x8x1xf32, #tpu.memory_space<vmem>>, vector<8x8x1xf32>
      tpu.vector_store %arg7[%c0_34, %c0_35, %c0_36], %34 {strides = array<i32>} : memref<8x8x1xf32, #tpu.memory_space<vmem>>, vector<8x8x1xf32>,
      %cst_37 = arith.constant 0.000000e+00 : f32
      %36 = vector.broadcast %cst_37 : f32 to vector<8x8x1xf32>
      %c0_38 = arith.constant 0 : index
      %c0_39 = arith.constant 0 : index
      %c0_40 = arith.constant 0 : index
      %37 = vector.load %arg8[%c0_38, %c0_39, %c0_40] : memref<8x8x1xf32, #tpu.memory_space<vmem>>, vector<8x8x1xf32>
      tpu.vector_store %arg8[%c0_38, %c0_39, %c0_40], %36 {strides = array<i32>} : memref<8x8x1xf32, #tpu.memory_space<vmem>>, vector<8x8x1xf32>,
      %cst_41 = arith.constant 0.000000e+00 : f32
      %38 = vector.broadcast %cst_41 : f32 to vector<8x8x128xf32>
      %c0_42 = arith.constant 0 : index
      %c0_43 = arith.constant 0 : index
      %c0_44 = arith.constant 0 : index
      %39 = vector.load %arg9[%c0_42, %c0_43, %c0_44] : memref<8x8x128xf32, #tpu.memory_space<vmem>>, vector<8x8x128xf32>
      tpu.vector_store %arg9[%c0_42, %c0_43, %c0_44], %38 {strides = array<i32>} : memref<8x8x128xf32, #tpu.memory_space<vmem>>, vector<8x8x128xf32>,
    } else {
    }
    %c0 = arith.constant 0 : index
    %c0_1 = arith.constant 0 : index
    %c0_2 = arith.constant 0 : index
    %3 = vector.load %arg3[%c0, %c0_1, %c0_2] : memref<8x8x128xf32, #tpu.memory_space<vmem>>, vector<8x8x128xf32>
    %c0_3 = arith.constant 0 : index
    %c0_4 = arith.constant 0 : index
    %c0_5 = arith.constant 0 : index
    %4 = vector.load %arg4[%c0_3, %c0_4, %c0_5] : memref<8x8x128xf32, #tpu.memory_space<vmem>>, vector<8x8x128xf32>
    "tpu.trace_start"() <{level = 10 : i32, message = "bqd,bkd->bqk"}> : () -> ()
    %cst = arith.constant dense<0.000000e+00> : vector<8x8x8xf32>
    %5 = tpu.matmul %3, %4, %cst {dimension_numbers = #tpu.dot_dimension_numbers<[2], [2], [1], [1], [0, 0, 0, 1, 1, 1], [0], [0]>} : vector<8x8x128xf32>, vector<8x8x128xf32>, vector<8x8x8xf32> -> vector<8x8x8xf32>
    "tpu.trace_stop"() : () -> ()
    %cst_6 = arith.constant 0.353553385 : f32
    %6 = vector.broadcast %cst_6 : f32 to vector<8x8x8xf32>
    %7 = arith.mulf %5, %6 : vector<8x8x8xf32>
    %c0_7 = arith.constant 0 : index
    %c0_8 = arith.constant 0 : index
    %c0_9 = arith.constant 0 : index
    %8 = vector.load %arg7[%c0_7, %c0_8, %c0_9] : memref<8x8x1xf32, #tpu.memory_space<vmem>>, vector<8x8x1xf32>
    %cst_10 = arith.constant dense<0xFF800000> : vector<8x8xf32>
    %9 = vector.multi_reduction <maximumf>, %7, %cst_10 [2] : vector<8x8x8xf32> to vector<8x8xf32>
    %10 = vector.shape_cast %9 : vector<8x8xf32> to vector<8x8x1xf32>
    %11 = arith.maximumf %8, %10 : vector<8x8x1xf32>
    %12 = arith.subf %8, %11 : vector<8x8x1xf32>
    %13 = math.exp %12 : vector<8x8x1xf32>
    %14 = vector.broadcast %11 : vector<8x8x1xf32> to vector<8x8x8xf32>
    %15 = arith.subf %7, %14 : vector<8x8x8xf32>
    %16 = math.exp %15 : vector<8x8x8xf32>
    %c0_11 = arith.constant 0 : index
    %c0_12 = arith.constant 0 : index
    %c0_13 = arith.constant 0 : index
    %17 = vector.load %arg8[%c0_11, %c0_12, %c0_13] : memref<8x8x1xf32, #tpu.memory_space<vmem>>, vector<8x8x1xf32>
    %18 = arith.mulf %13, %17 : vector<8x8x1xf32>
    %cst_14 = arith.constant dense<0.000000e+00> : vector<8x8xf32>
    %19 = vector.multi_reduction <add>, %16, %cst_14 [2] : vector<8x8x8xf32> to vector<8x8xf32>
    %20 = vector.shape_cast %19 : vector<8x8xf32> to vector<8x8x1xf32>
    %21 = arith.addf %18, %20 : vector<8x8x1xf32>
    %c0_15 = arith.constant 0 : index
    %c0_16 = arith.constant 0 : index
    %c0_17 = arith.constant 0 : index
    %22 = vector.load %arg8[%c0_15, %c0_16, %c0_17] : memref<8x8x1xf32, #tpu.memory_space<vmem>>, vector<8x8x1xf32>
    tpu.vector_store %arg8[%c0_15, %c0_16, %c0_17], %21 {strides = array<i32>} : memref<8x8x1xf32, #tpu.memory_space<vmem>>, vector<8x8x1xf32>,
    %c0_18 = arith.constant 0 : index
    %c0_19 = arith.constant 0 : index
    %c0_20 = arith.constant 0 : index
    %23 = vector.load %arg9[%c0_18, %c0_19, %c0_20] : memref<8x8x128xf32, #tpu.memory_space<vmem>>, vector<8x8x128xf32>
    %24 = vector.broadcast %13 : vector<8x8x1xf32> to vector<8x8x128xf32>
    %25 = arith.mulf %24, %23 : vector<8x8x128xf32>
    %c0_21 = arith.constant 0 : index
    %c0_22 = arith.constant 0 : index
    %c0_23 = arith.constant 0 : index
    %26 = vector.load %arg5[%c0_21, %c0_22, %c0_23] : memref<8x8x128xf32, #tpu.memory_space<vmem>>, vector<8x8x128xf32>
    "tpu.trace_start"() <{level = 10 : i32, message = "bqk,bkd->bqd"}> : () -> ()
    %cst_24 = arith.constant dense<0.000000e+00> : vector<8x8x128xf32>
    %27 = tpu.matmul %16, %26, %cst_24 {dimension_numbers = #tpu.dot_dimension_numbers<[2], [1], [1], [2], [0, 0, 0, 1, 1, 2], [0], [0]>} : vector<8x8x8xf32>, vector<8x8x128xf32>, vector<8x8x128xf32> -> vector<8x8x128xf32>
    "tpu.trace_stop"() : () -> ()
    %28 = arith.addf %25, %27 : vector<8x8x128xf32>
    %c0_25 = arith.constant 0 : index
    %c0_26 = arith.constant 0 : index
    %c0_27 = arith.constant 0 : index
    %29 = vector.load %arg9[%c0_25, %c0_26, %c0_27] : memref<8x8x128xf32, #tpu.memory_space<vmem>>, vector<8x8x128xf32>
    tpu.vector_store %arg9[%c0_25, %c0_26, %c0_27], %28 {strides = array<i32>} : memref<8x8x128xf32, #tpu.memory_space<vmem>>, vector<8x8x128xf32>,
    %c0_28 = arith.constant 0 : index
    %c0_29 = arith.constant 0 : index
    %c0_30 = arith.constant 0 : index
    %30 = vector.load %arg7[%c0_28, %c0_29, %c0_30] : memref<8x8x1xf32, #tpu.memory_space<vmem>>, vector<8x8x1xf32>
    tpu.vector_store %arg7[%c0_28, %c0_29, %c0_30], %11 {strides = array<i32>} : memref<8x8x1xf32, #tpu.memory_space<vmem>>, vector<8x8x1xf32>,
    %c0_i32_31 = arith.constant 0 : i32
    %31 = arith.cmpi eq, %arg2, %c0_i32_31 : i32
    %32 = arith.extui %31 : i1 to i32
    %c0_i32_32 = arith.constant 0 : i32
    %33 = arith.cmpi ne, %32, %c0_i32_32 : i32
    scf.if %33 {
      %c0_33 = arith.constant 0 : index
      %c0_34 = arith.constant 0 : index
      %c0_35 = arith.constant 0 : index
      %34 = vector.load %arg9[%c0_33, %c0_34, %c0_35] : memref<8x8x128xf32, #tpu.memory_space<vmem>>, vector<8x8x128xf32>
      %c0_36 = arith.constant 0 : index
      %c0_37 = arith.constant 0 : index
      %c0_38 = arith.constant 0 : index
      %35 = vector.load %arg8[%c0_36, %c0_37, %c0_38] : memref<8x8x1xf32, #tpu.memory_space<vmem>>, vector<8x8x1xf32>
      %36 = tpu.reciprocal %35 {approx = true} : vector<8x8x1xf32> -> vector<8x8x1xf32>
      %37 = vector.broadcast %36 : vector<8x8x1xf32> to vector<8x8x128xf32>
      %38 = arith.mulf %34, %37 : vector<8x8x128xf32>
      %c0_39 = arith.constant 0 : index
      %c0_40 = arith.constant 0 : index
      %c0_41 = arith.constant 0 : index
      %39 = vector.load %arg6[%c0_39, %c0_40, %c0_41] : memref<8x8x128xf32, #tpu.memory_space<vmem>>, vector<8x8x128xf32>
      tpu.vector_store %arg6[%c0_39, %c0_40, %c0_41], %38 {strides = array<i32>} : memref<8x8x128xf32, #tpu.memory_space<vmem>>, vector<8x8x128xf32>,
    } else {
    }
    return
  }
  func.func @transform_0(%arg0: i32, %arg1: i32, %arg2: i32) -> (i32, i32, i32) {
    %c0_i32 = arith.constant 0 : i32
    %c0_i32_0 = arith.constant 0 : i32
    return %arg0, %arg1, %c0_i32 : i32, i32, i32
  }
  func.func @transform_1(%arg0: i32, %arg1: i32, %arg2: i32) -> (i32, i32, i32) {
    %c0_i32 = arith.constant 0 : i32
    %c0_i32_0 = arith.constant 0 : i32
    return %arg0, %arg2, %c0_i32 : i32, i32, i32
  }
  func.func @transform_2(%arg0: i32, %arg1: i32, %arg2: i32) -> (i32, i32, i32) {
    %c0_i32 = arith.constant 0 : i32
    %c0_i32_0 = arith.constant 0 : i32
    return %arg0, %arg2, %c0_i32 : i32, i32, i32
  }
  func.func @transform_3(%arg0: i32, %arg1: i32, %arg2: i32) -> (i32, i32, i32) {
    %c0_i32 = arith.constant 0 : i32
    %c0_i32_0 = arith.constant 0 : i32
    return %arg0, %arg1, %c0_i32 : i32, i32, i32
  }
}

module attributes {stable_mosaic.version = 11 : i64} {
  func.func @_add_layernorm_kernel(%arg0: i32, %arg1: memref<16x32xf32, #tpu.memory_space<vmem>>, %arg2: memref<16x32xf32, #tpu.memory_space<vmem>>, %arg3: memref<1x32xf32, #tpu.memory_space<vmem>>, %arg4: memref<1x32xf32, #tpu.memory_space<vmem>>, %arg5: memref<16x32xf32, #tpu.memory_space<vmem>>) attributes {dimension_semantics = [#tpu.dimension_semantics<parallel>], iteration_bounds = array<i64: 1>, scalar_prefetch = 0 : i64, scratch_operands = 0 : i64, tpu.core_type = #tpu.core_type<tc>, window_params = [{transform_indices = @transform_0, window_bounds = array<i64: 16, 32>}, {transform_indices = @transform_1, window_bounds = array<i64: 16, 32>}, {pipeline_mode = #tpu.pipeline_mode<synchronous>, transform_indices = @transform_2, window_bounds = array<i64: 1, 32>}, {pipeline_mode = #tpu.pipeline_mode<synchronous>, transform_indices = @transform_3, window_bounds = array<i64: 1, 32>}, {transform_indices = @transform_4, window_bounds = array<i64: 16, 32>}]} {
    %c0 = arith.constant 0 : index
    %c0_0 = arith.constant 0 : index
    %0 = vector.load %arg1[%c0, %c0_0] : memref<16x32xf32, #tpu.memory_space<vmem>>, vector<16x32xf32>
    %c0_1 = arith.constant 0 : index
    %c0_2 = arith.constant 0 : index
    %1 = vector.load %arg2[%c0_1, %c0_2] : memref<16x32xf32, #tpu.memory_space<vmem>>, vector<16x32xf32>
    %2 = arith.addf %0, %1 : vector<16x32xf32>
    %cst = arith.constant dense<0.000000e+00> : vector<16xf32>
    %3 = vector.multi_reduction <add>, %2, %cst [1] : vector<16x32xf32> to vector<16xf32>
    %4 = vector.shape_cast %3 : vector<16xf32> to vector<16x1xf32>
    %cst_3 = arith.constant 3.200000e+01 : f32
    %5 = vector.broadcast %cst_3 : f32 to vector<16x1xf32>
    %6 = arith.divf %4, %5 : vector<16x1xf32>
    %7 = vector.broadcast %6 : vector<16x1xf32> to vector<16x32xf32>
    %8 = arith.subf %2, %7 : vector<16x32xf32>
    %9 = arith.mulf %8, %8 : vector<16x32xf32>
    %cst_4 = arith.constant dense<0.000000e+00> : vector<16xf32>
    %10 = vector.multi_reduction <add>, %9, %cst_4 [1] : vector<16x32xf32> to vector<16xf32>
    %11 = vector.shape_cast %10 : vector<16xf32> to vector<16x1xf32>
    %cst_5 = arith.constant 3.200000e+01 : f32
    %12 = vector.broadcast %cst_5 : f32 to vector<16x1xf32>
    %13 = arith.divf %11, %12 : vector<16x1xf32>
    %14 = vector.broadcast %6 : vector<16x1xf32> to vector<16x32xf32>
    %15 = arith.subf %2, %14 : vector<16x32xf32>
    %cst_6 = arith.constant 9.99999974E-6 : f32
    %16 = vector.broadcast %cst_6 : f32 to vector<16x1xf32>
    %17 = arith.addf %13, %16 : vector<16x1xf32>
    %18 = math.rsqrt %17 : vector<16x1xf32>
    %19 = vector.broadcast %18 : vector<16x1xf32> to vector<16x32xf32>
    %20 = arith.mulf %15, %19 : vector<16x32xf32>
    %c0_7 = arith.constant 0 : index
    %c0_8 = arith.constant 0 : index
    %21 = vector.load %arg3[%c0_7, %c0_8] : memref<1x32xf32, #tpu.memory_space<vmem>>, vector<1x32xf32>
    %22 = vector.broadcast %21 : vector<1x32xf32> to vector<16x32xf32>
    %23 = arith.mulf %20, %22 : vector<16x32xf32>
    %c0_9 = arith.constant 0 : index
    %c0_10 = arith.constant 0 : index
    %24 = vector.load %arg4[%c0_9, %c0_10] : memref<1x32xf32, #tpu.memory_space<vmem>>, vector<1x32xf32>
    %25 = vector.broadcast %24 : vector<1x32xf32> to vector<16x32xf32>
    %26 = arith.addf %23, %25 : vector<16x32xf32>
    %c0_11 = arith.constant 0 : index
    %c0_12 = arith.constant 0 : index
    %27 = vector.load %arg5[%c0_11, %c0_12] : memref<16x32xf32, #tpu.memory_space<vmem>>, vector<16x32xf32>
    tpu.vector_store %arg5[%c0_11, %c0_12], %26 {strides = array<i32>} : memref<16x32xf32, #tpu.memory_space<vmem>>, vector<16x32xf32>,
    return
  }
  func.func @transform_0(%arg0: i32) -> (i32, i32) {
    %c0_i32 = arith.constant 0 : i32
    %c0_i32_0 = arith.constant 0 : i32
    return %arg0, %c0_i32 : i32, i32
  }
  func.func @transform_1(%arg0: i32) -> (i32, i32) {
    %c0_i32 = arith.constant 0 : i32
    %c0_i32_0 = arith.constant 0 : i32
    return %arg0, %c0_i32 : i32, i32
  }
  func.func @transform_2(%arg0: i32) -> (i32, i32) {
    %c0_i32 = arith.constant 0 : i32
    %c0_i32_0 = arith.constant 0 : i32
    %c0_i32_1 = arith.constant 0 : i32
    return %c0_i32, %c0_i32_0 : i32, i32
  }
  func.func @transform_3(%arg0: i32) -> (i32, i32) {
    %c0_i32 = arith.constant 0 : i32
    %c0_i32_0 = arith.constant 0 : i32
    %c0_i32_1 = arith.constant 0 : i32
    return %c0_i32, %c0_i32_0 : i32, i32
  }
  func.func @transform_4(%arg0: i32) -> (i32, i32) {
    %c0_i32 = arith.constant 0 : i32
    %c0_i32_0 = arith.constant 0 : i32
    return %arg0, %c0_i32 : i32, i32
  }
}

</mosaic_0001>

<llo_original>
// kernel: _lambda_.46
$region0: #{_lambda_.46}
  #allocation0 [shape = 'u32[]', space=smem, size = 0x4, offset = 0x4, fixed_abs, tag = 'smem constant byte address 0x4 - core index']
  #allocation1 [shape = 'u32[144,128]{1,0:T(1,128)}', space=vmem, size = 0x12000, scoped, tag = 'internal scratch']
  %s0 = inlined_call_operand.vmem [shape: f32[16,32], index: 0, kind: input, shape index: {}]
  %s1 = inlined_call_operand.vmem [shape: f32[32,96], index: 1, kind: input, shape index: {}]
  %s2 = inlined_call_operand.vmem [shape: f32[1,96], index: 2, kind: input, shape index: {}]
  %s3 = inlined_call_operand.vmem [shape: f32[16,96], index: 3, kind: output, shape index: {}]
  %s4 = sld [smem:[#allocation0]]
  $region22: #{_lambda_.46} parent=0
    _
  %s6 = ssub.s32 1, %s4
  %s7 = scalar_select 0, %s6, %s4
  // Predicated region
  $region2: #{_lambda_.46} parent=0 // pred_check
    _
  $region3: #{_lambda_.46} parent=0 // pred_check_branch
    %9 = sbr.rel (0) target = $region5
  $region4: #{_lambda_.46} parent=0 // pred_region
    _
  $region5: #{_lambda_.46} parent=0 // pred_fallthru
    _
  // Predicated region
  $region6: #{_lambda_.46} parent=0 // pred_check
    _
  $region7: #{_lambda_.46} parent=0 // pred_check_branch
    %11 = sbr.rel (0) target = $region9
  $region8: #{_lambda_.46} parent=0 // pred_region
    _
  $region9: #{_lambda_.46} parent=0 // pred_fallthru
    _
  // Predicated region
  $region10: #{_lambda_.46} parent=0 // pred_check
    _
  $region11: #{_lambda_.46} parent=0 // pred_check_branch
    %13 = sbr.rel (0) target = $region13
  $region12: #{_lambda_.46} parent=0 // pred_region
    _
  $region13: #{_lambda_.46} parent=0 // pred_fallthru
    _
  %v14 = vld [vmem:[%s0] sm:$0xff]
  %v15 = vld [vmem:[%s0 + $0x8] sm:$0xff]
  %v16 = vld [vmem:[%s1] sm:$0xff]
  %v17 = vld [vmem:[%s1 + $0x8] sm:$0xff]
  %v18 = vld [vmem:[%s1 + $0x10] sm:$0xff]
  %v19 = vld [vmem:[%s1 + $0x18] sm:$0xff]
  %v20 = vld [vmem:[%s2] sm:$0x1]
  %v22 = vlaneseq
  %v23 = vshrl.u32 %v22, 7
  %v24 = vsub.s32 0, %v23
  %v25 = vrot.slane %v20, %v24
  %vm27 = vcmask 261120
  %v29 = vsel %vm27, %v14, 0
  %v32 = vsel %vm27, %v15, 0
  %34 = vmatprep.subr.mxu0 0.0
  %35 = vmatpush1.msra.mxu0 %v16
  %36 = vmatprep.subr.mxu0 0.0
  %37 = vmatpush1.msra.mxu0 %v17
  %38 = vmatprep.subr.mxu0 0.0
  %39 = vmatpush1.msra.mxu0 %v18
  %40 = vmatprep.subr.mxu0 0.0
  %41 = vmatpush1.msra.mxu0 %v19
  %42 = vmatprep.subr.mxu0 0.0
  %43 = vmatpush1.msra.mxu0 0.0
  %44 = vmatprep.subr.mxu0 0.0
  %45 = vmatpush1.msra.mxu0 0.0
  %46 = vmatprep.subr.mxu0 0.0
  %47 = vmatpush1.msra.mxu0 0.0
  %48 = vmatprep.subr.mxu0 0.0
  %49 = vmatpush1.msra.mxu0 0.0
  %50 = vmatprep.subr.mxu0 0.0
  %51 = vmatpush1.msra.mxu0 0.0
  %52 = vmatprep.subr.mxu0 0.0
  %53 = vmatpush1.msra.mxu0 0.0
  %54 = vmatprep.subr.mxu0 0.0
  %55 = vmatpush1.msra.mxu0 0.0
  %56 = vmatprep.subr.mxu0 0.0
  %57 = vmatpush1.msra.mxu0 0.0
  %58 = vmatprep.subr.mxu0 0.0
  %59 = vmatpush1.msra.mxu0 0.0
  %60 = vmatprep.subr.mxu0 0.0
  %61 = vmatpush1.msra.mxu0 0.0
  %62 = vmatprep.subr.mxu0 0.0
  %63 = vmatpush1.msra.mxu0 0.0
  %64 = vmatprep.subr.mxu0 0.0
  %65 = vmatpush1.msra.mxu0 0.0
  %66 = vmatprep.subr.mxu0 0.0
  %67 = vmatpush1.msra.mxu0 0.0
  %68 = vmatprep.subr.mxu0 0.0
  %69 = vmatpush1.msra.mxu0 0.0
  %70 = vmatprep.subr.mxu0 0.0
  %71 = vmatpush1.msra.mxu0 0.0
  %72 = vmatprep.subr.mxu0 0.0
  %73 = vmatpush1.msra.mxu0 0.0
  %74 = vmatprep.subr.mxu0 0.0
  %75 = vmatpush1.msra.mxu0 0.0
  %76 = vmatprep.subr.mxu0 0.0
  %77 = vmatpush1.msra.mxu0 0.0
  %78 = vmatprep.subr.mxu0 0.0
  %79 = vmatpush1.msra.mxu0 0.0
  %80 = vmatprep.subr.mxu0 0.0
  %81 = vmatpush1.msra.mxu0 0.0
  %82 = vmatprep.subr.mxu0 0.0
  %83 = vmatpush1.msra.mxu0 0.0
  %84 = vmatprep.subr.mxu0 0.0
  %85 = vmatpush1.msra.mxu0 0.0
  %86 = vmatprep.subr.mxu0 0.0
  %87 = vmatpush1.msra.mxu0 0.0
  %88 = vmatprep.subr.mxu0 0.0
  %89 = vmatpush1.msra.mxu0 0.0
  %90 = vmatprep.subr.mxu0 0.0
  %91 = vmatpush1.msra.mxu0 0.0
  %92 = vmatprep.subr.mxu0 0.0
  %93 = vmatpush1.msra.mxu0 0.0
  %94 = vmatprep.subr.mxu0 0.0
  %95 = vmatpush1.msra.mxu0 0.0
  %96 = vmatprep.subr.mxu0 0.0
  %97 = vmatpush1.msra.mxu0 0.0
  %98 = vmatprep.mubr.f32.mxu0 0.0
  %99 = vmatmul.mubr.f32.gmra.mrb[0].mxu0 %v29
  %v100 = vpop.f32.mrb[0].mxu0
  %v101 = vadd.f32 %v25, %v100
  %v102 = vpop.f32.mrb[0].mxu0
  %103 = vmatprep.mubr.f32.mxu0 0.0
  %104 = vmatmul.mubr.f32.gmra.mrb[0].mxu0 %v32
  %v105 = vpop.f32.mrb[0].mxu0
  %v106 = vadd.f32 %v25, %v105
  %v107 = vpop.f32.mrb[0].mxu0
  %108 = vdwg.mxu0
  %vm109 = vcmask 785408
  %110 = vst.msk [vmem:[%s3] sm:$0xff] %vm109, %v101
  %111 = vst.msk [vmem:[%s3 + $0x8] sm:$0xff] %vm109, %v106
  // Predicated region
  $region14: #{_lambda_.46} parent=0 // pred_check
    _
  $region15: #{_lambda_.46} parent=0 // pred_check_branch
    %113 = sbr.rel (0) target = $region17
  $region16: #{_lambda_.46} parent=0 // pred_region
    _
  $region17: #{_lambda_.46} parent=0 // pred_fallthru
    _
  // Predicated region
  $region18: #{_lambda_.46} parent=0 // pred_check
    _
  $region19: #{_lambda_.46} parent=0 // pred_check_branch
    %115 = sbr.rel (0) target = $region21
  $region20: #{_lambda_.46} parent=0 // pred_region
    _
  $region21: #{_lambda_.46} parent=0 // pred_fallthru
    _

// kernel: _lambda_.48
$region0: #{_lambda_.48}
  #allocation0 [shape = 'u32[]', space=smem, size = 0x4, offset = 0x4, fixed_abs, tag = 'smem constant byte address 0x4 - core index']
  #allocation1 [shape = 'u32[144,128]{1,0:T(1,128)}', space=vmem, size = 0x12000, scoped, tag = 'internal scratch']
  %s0 = inlined_call_operand.vmem [shape: f32[16,32], index: 0, kind: input, shape index: {}]
  %s1 = inlined_call_operand.vmem [shape: f32[32,32], index: 1, kind: input, shape index: {}]
  %s2 = inlined_call_operand.vmem [shape: f32[1,32], index: 2, kind: input, shape index: {}]
  %s3 = inlined_call_operand.vmem [shape: f32[16,32], index: 3, kind: output, shape index: {}]
  %s4 = sld [smem:[#allocation0]]
  $region22: #{_lambda_.48} parent=0
    _
  %s6 = ssub.s32 1, %s4
  %s7 = scalar_select 0, %s6, %s4
  // Predicated region
  $region2: #{_lambda_.48} parent=0 // pred_check
    _
  $region3: #{_lambda_.48} parent=0 // pred_check_branch
    %9 = sbr.rel (0) target = $region5
  $region4: #{_lambda_.48} parent=0 // pred_region
    _
  $region5: #{_lambda_.48} parent=0 // pred_fallthru
    _
  // Predicated region
  $region6: #{_lambda_.48} parent=0 // pred_check
    _
  $region7: #{_lambda_.48} parent=0 // pred_check_branch
    %11 = sbr.rel (0) target = $region9
  $region8: #{_lambda_.48} parent=0 // pred_region
    _
  $region9: #{_lambda_.48} parent=0 // pred_fallthru
    _
  // Predicated region
  $region10: #{_lambda_.48} parent=0 // pred_check
    _
  $region11: #{_lambda_.48} parent=0 // pred_check_branch
    %13 = sbr.rel (0) target = $region13
  $region12: #{_lambda_.48} parent=0 // pred_region
    _
  $region13: #{_lambda_.48} parent=0 // pred_fallthru
    _
  %v14 = vld [vmem:[%s0] sm:$0xff]
  %v15 = vld [vmem:[%s0 + $0x8] sm:$0xff]
  %v16 = vld [vmem:[%s1] sm:$0xff]
  %v17 = vld [vmem:[%s1 + $0x8] sm:$0xff]
  %v18 = vld [vmem:[%s1 + $0x10] sm:$0xff]
  %v19 = vld [vmem:[%s1 + $0x18] sm:$0xff]
  %v20 = vld [vmem:[%s2] sm:$0x1]
  %v22 = vlaneseq
  %v23 = vshrl.u32 %v22, 7
  %v24 = vsub.s32 0, %v23
  %v25 = vrot.slane %v20, %v24
  %vm27 = vcmask 261120
  %v29 = vsel %vm27, %v14, 0
  %v32 = vsel %vm27, %v15, 0
  %34 = vmatprep.subr.mxu0 0.0
  %35 = vmatpush1.msra.mxu0 %v16
  %36 = vmatprep.subr.mxu0 0.0
  %37 = vmatpush1.msra.mxu0 %v17
  %38 = vmatprep.subr.mxu0 0.0
  %39 = vmatpush1.msra.mxu0 %v18
  %40 = vmatprep.subr.mxu0 0.0
  %41 = vmatpush1.msra.mxu0 %v19
  %42 = vmatprep.subr.mxu0 0.0
  %43 = vmatpush1.msra.mxu0 0.0
  %44 = vmatprep.subr.mxu0 0.0
  %45 = vmatpush1.msra.mxu0 0.0
  %46 = vmatprep.subr.mxu0 0.0
  %47 = vmatpush1.msra.mxu0 0.0
  %48 = vmatprep.subr.mxu0 0.0
  %49 = vmatpush1.msra.mxu0 0.0
  %50 = vmatprep.subr.mxu0 0.0
  %51 = vmatpush1.msra.mxu0 0.0
  %52 = vmatprep.subr.mxu0 0.0
  %53 = vmatpush1.msra.mxu0 0.0
  %54 = vmatprep.subr.mxu0 0.0
  %55 = vmatpush1.msra.mxu0 0.0
  %56 = vmatprep.subr.mxu0 0.0
  %57 = vmatpush1.msra.mxu0 0.0
  %58 = vmatprep.subr.mxu0 0.0
  %59 = vmatpush1.msra.mxu0 0.0
  %60 = vmatprep.subr.mxu0 0.0
  %61 = vmatpush1.msra.mxu0 0.0
  %62 = vmatprep.subr.mxu0 0.0
  %63 = vmatpush1.msra.mxu0 0.0
  %64 = vmatprep.subr.mxu0 0.0
  %65 = vmatpush1.msra.mxu0 0.0
  %66 = vmatprep.subr.mxu0 0.0
  %67 = vmatpush1.msra.mxu0 0.0
  %68 = vmatprep.subr.mxu0 0.0
  %69 = vmatpush1.msra.mxu0 0.0
  %70 = vmatprep.subr.mxu0 0.0
  %71 = vmatpush1.msra.mxu0 0.0
  %72 = vmatprep.subr.mxu0 0.0
  %73 = vmatpush1.msra.mxu0 0.0
  %74 = vmatprep.subr.mxu0 0.0
  %75 = vmatpush1.msra.mxu0 0.0
  %76 = vmatprep.subr.mxu0 0.0
  %77 = vmatpush1.msra.mxu0 0.0
  %78 = vmatprep.subr.mxu0 0.0
  %79 = vmatpush1.msra.mxu0 0.0
  %80 = vmatprep.subr.mxu0 0.0
  %81 = vmatpush1.msra.mxu0 0.0
  %82 = vmatprep.subr.mxu0 0.0
  %83 = vmatpush1.msra.mxu0 0.0
  %84 = vmatprep.subr.mxu0 0.0
  %85 = vmatpush1.msra.mxu0 0.0
  %86 = vmatprep.subr.mxu0 0.0
  %87 = vmatpush1.msra.mxu0 0.0
  %88 = vmatprep.subr.mxu0 0.0
  %89 = vmatpush1.msra.mxu0 0.0
  %90 = vmatprep.subr.mxu0 0.0
  %91 = vmatpush1.msra.mxu0 0.0
  %92 = vmatprep.subr.mxu0 0.0
  %93 = vmatpush1.msra.mxu0 0.0
  %94 = vmatprep.subr.mxu0 0.0
  %95 = vmatpush1.msra.mxu0 0.0
  %96 = vmatprep.subr.mxu0 0.0
  %97 = vmatpush1.msra.mxu0 0.0
  %98 = vmatprep.mubr.f32.mxu0 0.0
  %99 = vmatmul.mubr.f32.gmra.mrb[0].mxu0 %v29
  %v100 = vpop.f32.mrb[0].mxu0
  %v101 = vadd.f32 %v25, %v100
  %v102 = vpop.f32.mrb[0].mxu0
  %103 = vmatprep.mubr.f32.mxu0 0.0
  %104 = vmatmul.mubr.f32.gmra.mrb[0].mxu0 %v32
  %v105 = vpop.f32.mrb[0].mxu0
  %v106 = vadd.f32 %v25, %v105
  %v107 = vpop.f32.mrb[0].mxu0
  %108 = vdwg.mxu0
  %109 = vst.msk [vmem:[%s3] sm:$0xff] %vm27, %v101
  %110 = vst.msk [vmem:[%s3 + $0x8] sm:$0xff] %vm27, %v106
  // Predicated region
  $region14: #{_lambda_.48} parent=0 // pred_check
    _
  $region15: #{_lambda_.48} parent=0 // pred_check_branch
    %112 = sbr.rel (0) target = $region17
  $region16: #{_lambda_.48} parent=0 // pred_region
    _
  $region17: #{_lambda_.48} parent=0 // pred_fallthru
    _
  // Predicated region
  $region18: #{_lambda_.48} parent=0 // pred_check
    _
  $region19: #{_lambda_.48} parent=0 // pred_check_branch
    %114 = sbr.rel (0) target = $region21
  $region20: #{_lambda_.48} parent=0 // pred_region
    _
  $region21: #{_lambda_.48} parent=0 // pred_fallthru
    _

// kernel: _lambda_.49
$region0: #{_lambda_.49}
  #allocation0 [shape = 'u32[]', space=smem, size = 0x4, offset = 0x4, fixed_abs, tag = 'smem constant byte address 0x4 - core index']
  #allocation1 [shape = 'u32[144,128]{1,0:T(1,128)}', space=vmem, size = 0x12000, scoped, tag = 'internal scratch']
  %s0 = inlined_call_operand.vmem [shape: f32[16,32], index: 0, kind: input, shape index: {}]
  %s1 = inlined_call_operand.vmem [shape: f32[16,32], index: 1, kind: input, shape index: {}]
  %s2 = inlined_call_operand.vmem [shape: f32[1,32], index: 2, kind: input, shape index: {}]
  %s3 = inlined_call_operand.vmem [shape: f32[1,32], index: 3, kind: input, shape index: {}]
  %s4 = inlined_call_operand.vmem [shape: f32[16,32], index: 4, kind: output, shape index: {}]
  %s5 = sld [smem:[#allocation0]]
  $region26: #{_lambda_.49} parent=0
    _
  %s7 = ssub.s32 1, %s5
  %s8 = scalar_select 0, %s7, %s5
  // Predicated region
  $region2: #{_lambda_.49} parent=0 // pred_check
    _
  $region3: #{_lambda_.49} parent=0 // pred_check_branch
    %10 = sbr.rel (0) target = $region5
  $region4: #{_lambda_.49} parent=0 // pred_region
    _
  $region5: #{_lambda_.49} parent=0 // pred_fallthru
    _
  // Predicated region
  $region6: #{_lambda_.49} parent=0 // pred_check
    _
  $region7: #{_lambda_.49} parent=0 // pred_check_branch
    %12 = sbr.rel (0) target = $region9
  $region8: #{_lambda_.49} parent=0 // pred_region
    _
  $region9: #{_lambda_.49} parent=0 // pred_fallthru
    _
  // Predicated region
  $region10: #{_lambda_.49} parent=0 // pred_check
    _
  $region11: #{_lambda_.49} parent=0 // pred_check_branch
    %14 = sbr.rel (0) target = $region13
  $region12: #{_lambda_.49} parent=0 // pred_region
    _
  $region13: #{_lambda_.49} parent=0 // pred_fallthru
    _
  // Predicated region
  $region14: #{_lambda_.49} parent=0 // pred_check
    _
  $region15: #{_lambda_.49} parent=0 // pred_check_branch
    %16 = sbr.rel (0) target = $region17
  $region16: #{_lambda_.49} parent=0 // pred_region
    _
  $region17: #{_lambda_.49} parent=0 // pred_fallthru
    _
  %v17 = vld [vmem:[%s0] sm:$0xff]
  %v18 = vld [vmem:[%s0 + $0x8] sm:$0xff]
  %v19 = vld [vmem:[%s1] sm:$0xff]
  %v20 = vld [vmem:[%s1 + $0x8] sm:$0xff]
  %v21 = vadd.f32 %v17, %v19
  %v22 = vadd.f32 %v18, %v20
  %vm23 = vcmask 261120
  %v24 = vsel %vm23, %v21, 0.0
  %25 = vadd.xlane.f32.xlu0 %v24
  %v26 = vpop.xlane.xlu0 %25
  %v27 = vsel %vm23, %v22, 0.0
  %28 = vadd.xlane.f32.xlu0 %v27
  %v29 = vpop.xlane.xlu0 %28
  %v30 = vrcp.pop 32.0
  %v31 = vmul.f32 %v26, %v30
  %v32 = vmul.f32 %v29, %v30
  %v33 = vsub.f32 %v21, %v31
  %v34 = vsub.f32 %v22, %v32
  %v35 = vmul.f32 %v33, %v33
  %v36 = vmul.f32 %v34, %v34
  %v37 = vsel %vm23, %v35, 0.0
  %38 = vadd.xlane.f32.xlu0 %v37
  %v39 = vpop.xlane.xlu0 %38
  %v40 = vsel %vm23, %v36, 0.0
  %41 = vadd.xlane.f32.xlu0 %v40
  %v42 = vpop.xlane.xlu0 %41
  %v43 = vmul.f32 %v39, %v30
  %v44 = vmul.f32 %v42, %v30
  %v45 = vadd.f32 %v43, 1e-05
  %v46 = vadd.f32 %v44, 1e-05
  %v47 = vrsqrt.pop %v45
  %v48 = vrsqrt.pop %v46
  %v49 = vmul.f32 %v33, %v47
  %v50 = vmul.f32 %v34, %v48
  %v51 = vld [vmem:[%s2] sm:$0x1]
  %v53 = vlaneseq
  %v54 = vshrl.u32 %v53, 7
  %v55 = vsub.s32 0, %v54
  %v56 = vrot.slane %v51, %v55
  %v58 = vmul.f32 %v49, %v56
  %v59 = vmul.f32 %v50, %v56
  %v60 = vld [vmem:[%s3] sm:$0x1]
  %v62 = vlaneseq
  %v63 = vshrl.u32 %v62, 7
  %v64 = vsub.s32 0, %v63
  %v65 = vrot.slane %v60, %v64
  %v67 = vadd.f32 %v58, %v65
  %v68 = vadd.f32 %v59, %v65
  %69 = vst.msk [vmem:[%s4] sm:$0xff] %vm23, %v67
  %70 = vst.msk [vmem:[%s4 + $0x8] sm:$0xff] %vm23, %v68
  // Predicated region
  $region18: #{_lambda_.49} parent=0 // pred_check
    _
  $region19: #{_lambda_.49} parent=0 // pred_check_branch
    %72 = sbr.rel (0) target = $region21
  $region20: #{_lambda_.49} parent=0 // pred_region
    _
  $region21: #{_lambda_.49} parent=0 // pred_fallthru
    _
  // Predicated region
  $region22: #{_lambda_.49} parent=0 // pred_check
    _
  $region23: #{_lambda_.49} parent=0 // pred_check_branch
    %74 = sbr.rel (0) target = $region25
  $region24: #{_lambda_.49} parent=0 // pred_region
    _
  $region25: #{_lambda_.49} parent=0 // pred_fallthru
    _

// kernel: _lambda_.38
$region0: #{_lambda_.38}
  #allocation0 [shape = 'u32[]', space=smem, size = 0x4, offset = 0x4, fixed_abs, tag = 'smem constant byte address 0x4 - core index']
  #allocation1 [shape = 'u32[144,128]{1,0:T(1,128)}', space=vmem, size = 0x12000, scoped, tag = 'internal scratch']
  %s0 = inlined_call_operand.vmem [shape: f32[16,32], index: 0, kind: input, shape index: {}]
  %s1 = inlined_call_operand.vmem [shape: f32[32,64], index: 1, kind: input, shape index: {}]
  %s2 = inlined_call_operand.vmem [shape: f32[1,64], index: 2, kind: input, shape index: {}]
  %s3 = inlined_call_operand.vmem [shape: f32[64,32], index: 3, kind: input, shape index: {}]
  %s4 = inlined_call_operand.vmem [shape: f32[1,32], index: 4, kind: input, shape index: {}]
  %s5 = inlined_call_operand.vmem [shape: f32[16,32], index: 5, kind: output, shape index: {}]
  %s6 = sld [smem:[#allocation0]]
  $region30: #{_lambda_.38} parent=0
    _
  %s8 = ssub.s32 1, %s6
  %s9 = scalar_select 0, %s8, %s6
  // Predicated region
  $region2: #{_lambda_.38} parent=0 // pred_check
    _
  $region3: #{_lambda_.38} parent=0 // pred_check_branch
    %11 = sbr.rel (0) target = $region5
  $region4: #{_lambda_.38} parent=0 // pred_region
    _
  $region5: #{_lambda_.38} parent=0 // pred_fallthru
    _
  // Predicated region
  $region6: #{_lambda_.38} parent=0 // pred_check
    _
  $region7: #{_lambda_.38} parent=0 // pred_check_branch
    %13 = sbr.rel (0) target = $region9
  $region8: #{_lambda_.38} parent=0 // pred_region
    _
  $region9: #{_lambda_.38} parent=0 // pred_fallthru
    _
  // Predicated region
  $region10: #{_lambda_.38} parent=0 // pred_check
    _
  $region11: #{_lambda_.38} parent=0 // pred_check_branch
    %15 = sbr.rel (0) target = $region13
  $region12: #{_lambda_.38} parent=0 // pred_region
    _
  $region13: #{_lambda_.38} parent=0 // pred_fallthru
    _
  // Predicated region
  $region14: #{_lambda_.38} parent=0 // pred_check
    _
  $region15: #{_lambda_.38} parent=0 // pred_check_branch
    %17 = sbr.rel (0) target = $region17
  $region16: #{_lambda_.38} parent=0 // pred_region
    _
  $region17: #{_lambda_.38} parent=0 // pred_fallthru
    _
  // Predicated region
  $region18: #{_lambda_.38} parent=0 // pred_check
    _
  $region19: #{_lambda_.38} parent=0 // pred_check_branch
    %19 = sbr.rel (0) target = $region21
  $region20: #{_lambda_.38} parent=0 // pred_region
    _
  $region21: #{_lambda_.38} parent=0 // pred_fallthru
    _
  %v20 = vld [vmem:[%s0] sm:$0xff]
  %v21 = vld [vmem:[%s0 + $0x8] sm:$0xff]
  %v22 = vld [vmem:[%s1] sm:$0xff]
  %v23 = vld [vmem:[%s1 + $0x8] sm:$0xff]
  %v24 = vld [vmem:[%s1 + $0x10] sm:$0xff]
  %v25 = vld [vmem:[%s1 + $0x18] sm:$0xff]
  %v26 = vld [vmem:[%s2] sm:$0x1]
  %v28 = vlaneseq
  %v29 = vshrl.u32 %v28, 7
  %v30 = vsub.s32 0, %v29
  %v31 = vrot.slane %v26, %v30
  %vm33 = vcmask 261120
  %v35 = vsel %vm33, %v20, 0
  %v38 = vsel %vm33, %v21, 0
  %40 = vmatprep.subr.mxu0 0.0
  %41 = vmatpush1.msra.mxu0 %v22
  %42 = vmatprep.subr.mxu0 0.0
  %43 = vmatpush1.msra.mxu0 %v23
  %44 = vmatprep.subr.mxu0 0.0
  %45 = vmatpush1.msra.mxu0 %v24
  %46 = vmatprep.subr.mxu0 0.0
  %47 = vmatpush1.msra.mxu0 %v25
  %48 = vmatprep.subr.mxu0 0.0
  %49 = vmatpush1.msra.mxu0 0.0
  %50 = vmatprep.subr.mxu0 0.0
  %51 = vmatpush1.msra.mxu0 0.0
  %52 = vmatprep.subr.mxu0 0.0
  %53 = vmatpush1.msra.mxu0 0.0
  %54 = vmatprep.subr.mxu0 0.0
  %55 = vmatpush1.msra.mxu0 0.0
  %56 = vmatprep.subr.mxu0 0.0
  %57 = vmatpush1.msra.mxu0 0.0
  %58 = vmatprep.subr.mxu0 0.0
  %59 = vmatpush1.msra.mxu0 0.0
  %60 = vmatprep.subr.mxu0 0.0
  %61 = vmatpush1.msra.mxu0 0.0
  %62 = vmatprep.subr.mxu0 0.0
  %63 = vmatpush1.msra.mxu0 0.0
  %64 = vmatprep.subr.mxu0 0.0
  %65 = vmatpush1.msra.mxu0 0.0
  %66 = vmatprep.subr.mxu0 0.0
  %67 = vmatpush1.msra.mxu0 0.0
  %68 = vmatprep.subr.mxu0 0.0
  %69 = vmatpush1.msra.mxu0 0.0
  %70 = vmatprep.subr.mxu0 0.0
  %71 = vmatpush1.msra.mxu0 0.0
  %72 = vmatprep.subr.mxu0 0.0
  %73 = vmatpush1.msra.mxu0 0.0
  %74 = vmatprep.subr.mxu0 0.0
  %75 = vmatpush1.msra.mxu0 0.0
  %76 = vmatprep.subr.mxu0 0.0
  %77 = vmatpush1.msra.mxu0 0.0
  %78 = vmatprep.subr.mxu0 0.0
  %79 = vmatpush1.msra.mxu0 0.0
  %80 = vmatprep.subr.mxu0 0.0
  %81 = vmatpush1.msra.mxu0 0.0
  %82 = vmatprep.subr.mxu0 0.0
  %83 = vmatpush1.msra.mxu0 0.0
  %84 = vmatprep.subr.mxu0 0.0
  %85 = vmatpush1.msra.mxu0 0.0
  %86 = vmatprep.subr.mxu0 0.0
  %87 = vmatpush1.msra.mxu0 0.0
  %88 = vmatprep.subr.mxu0 0.0
  %89 = vmatpush1.msra.mxu0 0.0
  %90 = vmatprep.subr.mxu0 0.0
  %91 = vmatpush1.msra.mxu0 0.0
  %92 = vmatprep.subr.mxu0 0.0
  %93 = vmatpush1.msra.mxu0 0.0
  %94 = vmatprep.subr.mxu0 0.0
  %95 = vmatpush1.msra.mxu0 0.0
  %96 = vmatprep.subr.mxu0 0.0
  %97 = vmatpush1.msra.mxu0 0.0
  %98 = vmatprep.subr.mxu0 0.0
  %99 = vmatpush1.msra.mxu0 0.0
  %100 = vmatprep.subr.mxu0 0.0
  %101 = vmatpush1.msra.mxu0 0.0
  %102 = vmatprep.subr.mxu0 0.0
  %103 = vmatpush1.msra.mxu0 0.0
  %104 = vmatprep.mubr.f32.mxu0 0.0
  %105 = vmatmul.mubr.f32.gmra.mrb[0].mxu0 %v35
  %v106 = vpop.f32.mrb[0].mxu0
  %v107 = vadd.f32 %v31, %v106
  %v108 = vpop.f32.mrb[0].mxu0
  %109 = vmatprep.mubr.f32.mxu0 0.0
  %110 = vmatmul.mubr.f32.gmra.mrb[0].mxu0 %v38
  %v111 = vpop.f32.mrb[0].mxu0
  %v112 = vadd.f32 %v31, %v111
  %v113 = vpop.f32.mrb[0].mxu0
  %114 = vdwg.mxu0
  %v115 = vmax.f32 %v107, 0.0
  %v116 = vmax.f32 %v112, 0.0
  %v117 = vld [vmem:[%s3] sm:$0xff]
  %v118 = vld [vmem:[%s3 + $0x8] sm:$0xff]
  %v119 = vld [vmem:[%s3 + $0x10] sm:$0xff]
  %v120 = vld [vmem:[%s3 + $0x18] sm:$0xff]
  %v121 = vld [vmem:[%s3 + $0x20] sm:$0xff]
  %v122 = vld [vmem:[%s3 + $0x28] sm:$0xff]
  %v123 = vld [vmem:[%s3 + $0x30] sm:$0xff]
  %v124 = vld [vmem:[%s3 + $0x38] sm:$0xff]
  %v125 = vld [vmem:[%s4] sm:$0x1]
  %v127 = vlaneseq
  %v128 = vshrl.u32 %v127, 7
  %v129 = vsub.s32 0, %v128
  %v130 = vrot.slane %v125, %v129
  %vm132 = vcmask 523264
  %v134 = vsel %vm132, %v115, 0
  %v137 = vsel %vm132, %v116, 0
  %139 = vmatprep.subr.mxu0 0.0
  %140 = vmatpush1.msra.mxu0 %v117
  %141 = vmatprep.subr.mxu0 0.0
  %142 = vmatpush1.msra.mxu0 %v118
  %143 = vmatprep.subr.mxu0 0.0
  %144 = vmatpush1.msra.mxu0 %v119
  %145 = vmatprep.subr.mxu0 0.0
  %146 = vmatpush1.msra.mxu0 %v120
  %147 = vmatprep.subr.mxu0 0.0
  %148 = vmatpush1.msra.mxu0 %v121
  %149 = vmatprep.subr.mxu0 0.0
  %150 = vmatpush1.msra.mxu0 %v122
  %151 = vmatprep.subr.mxu0 0.0
  %152 = vmatpush1.msra.mxu0 %v123
  %153 = vmatprep.subr.mxu0 0.0
  %154 = vmatpush1.msra.mxu0 %v124
  %155 = vmatprep.subr.mxu0 0.0
  %156 = vmatpush1.msra.mxu0 0.0
  %157 = vmatprep.subr.mxu0 0.0
  %158 = vmatpush1.msra.mxu0 0.0
  %159 = vmatprep.subr.mxu0 0.0
  %160 = vmatpush1.msra.mxu0 0.0
  %161 = vmatprep.subr.mxu0 0.0
  %162 = vmatpush1.msra.mxu0 0.0
  %163 = vmatprep.subr.mxu0 0.0
  %164 = vmatpush1.msra.mxu0 0.0
  %165 = vmatprep.subr.mxu0 0.0
  %166 = vmatpush1.msra.mxu0 0.0
  %167 = vmatprep.subr.mxu0 0.0
  %168 = vmatpush1.msra.mxu0 0.0
  %169 = vmatprep.subr.mxu0 0.0
  %170 = vmatpush1.msra.mxu0 0.0
  %171 = vmatprep.subr.mxu0 0.0
  %172 = vmatpush1.msra.mxu0 0.0
  %173 = vmatprep.subr.mxu0 0.0
  %174 = vmatpush1.msra.mxu0 0.0
  %175 = vmatprep.subr.mxu0 0.0
  %176 = vmatpush1.msra.mxu0 0.0
  %177 = vmatprep.subr.mxu0 0.0
  %178 = vmatpush1.msra.mxu0 0.0
  %179 = vmatprep.subr.mxu0 0.0
  %180 = vmatpush1.msra.mxu0 0.0
  %181 = vmatprep.subr.mxu0 0.0
  %182 = vmatpush1.msra.mxu0 0.0
  %183 = vmatprep.subr.mxu0 0.0
  %184 = vmatpush1.msra.mxu0 0.0
  %185 = vmatprep.subr.mxu0 0.0
  %186 = vmatpush1.msra.mxu0 0.0
  %187 = vmatprep.subr.mxu0 0.0
  %188 = vmatpush1.msra.mxu0 0.0
  %189 = vmatprep.subr.mxu0 0.0
  %190 = vmatpush1.msra.mxu0 0.0
  %191 = vmatprep.subr.mxu0 0.0
  %192 = vmatpush1.msra.mxu0 0.0
  %193 = vmatprep.subr.mxu0 0.0
  %194 = vmatpush1.msra.mxu0 0.0
  %195 = vmatprep.subr.mxu0 0.0
  %196 = vmatpush1.msra.mxu0 0.0
  %197 = vmatprep.subr.mxu0 0.0
  %198 = vmatpush1.msra.mxu0 0.0
  %199 = vmatprep.subr.mxu0 0.0
  %200 = vmatpush1.msra.mxu0 0.0
  %201 = vmatprep.subr.mxu0 0.0
  %202 = vmatpush1.msra.mxu0 0.0
  %203 = vmatprep.mubr.f32.mxu0 0.0
  %204 = vmatmul.mubr.f32.gmra.mrb[0].mxu0 %v134
  %v205 = vpop.f32.mrb[0].mxu0
  %v206 = vadd.f32 %v130, %v205
  %v207 = vpop.f32.mrb[0].mxu0
  %208 = vmatprep.mubr.f32.mxu0 0.0
  %209 = vmatmul.mubr.f32.gmra.mrb[0].mxu0 %v137
  %v210 = vpop.f32.mrb[0].mxu0
  %v211 = vadd.f32 %v130, %v210
  %v212 = vpop.f32.mrb[0].mxu0
  %213 = vdwg.mxu0
  %214 = vst.msk [vmem:[%s5] sm:$0xff] %vm33, %v206
  %215 = vst.msk [vmem:[%s5 + $0x8] sm:$0xff] %vm33, %v211
  // Predicated region
  $region22: #{_lambda_.38} parent=0 // pred_check
    _
  $region23: #{_lambda_.38} parent=0 // pred_check_branch
    %217 = sbr.rel (0) target = $region25
  $region24: #{_lambda_.38} parent=0 // pred_region
    _
  $region25: #{_lambda_.38} parent=0 // pred_fallthru
    _
  // Predicated region
  $region26: #{_lambda_.38} parent=0 // pred_check
    _
  $region27: #{_lambda_.38} parent=0 // pred_check_branch
    %219 = sbr.rel (0) target = $region29
  $region28: #{_lambda_.38} parent=0 // pred_region
    _
  $region29: #{_lambda_.38} parent=0 // pred_fallthru
    _

// kernel: _lambda_.47
$region0: #{_lambda_.47}
  #allocation0 [shape = 'u32[]', space=smem, size = 0x4, offset = 0x4, fixed_abs, tag = 'smem constant byte address 0x4 - core index']
  #allocation1 [shape = 'u32[144,128]{1,0:T(1,128)}', space=vmem, size = 0x12000, scoped, tag = 'internal scratch']
  #allocation2 [shape = 'f32[8,8,1]{2,1,0:T(8,128)}', space=vmem, size = 0x8000, scoped, tag = 'scratch operand']
  #allocation3 [shape = 'f32[8,8,1]{2,1,0:T(8,128)}', space=vmem, size = 0x8000, scoped, tag = 'scratch operand']
  #allocation4 [shape = 'f32[8,8,128]{2,1,0:T(8,128)}', space=vmem, size = 0x8000, scoped, tag = 'scratch operand']
  %s0 = inlined_call_operand.vmem [shape: f32[8,8,128], index: 0, kind: input, shape index: {}]
  %s1 = inlined_call_operand.vmem [shape: f32[8,8,128], index: 1, kind: input, shape index: {}]
  %s2 = inlined_call_operand.vmem [shape: f32[8,8,128], index: 2, kind: input, shape index: {}]
  %s3 = inlined_call_operand.vmem [shape: f32[8,8,128], index: 3, kind: output, shape index: {}]
  %s4 = sld [smem:[#allocation0]]
  $region30: #{_lambda_.47} parent=0
    _
  %s6 = ssub.s32 1, %s4
  %s7 = scalar_select 0, %s6, %s4
  // Predicated region
  $region2: #{_lambda_.47} parent=0 // pred_check
    _
  $region3: #{_lambda_.47} parent=0 // pred_check_branch
    %9 = sbr.rel (0) target = $region5
  $region4: #{_lambda_.47} parent=0 // pred_region
    _
  $region5: #{_lambda_.47} parent=0 // pred_fallthru
    _
  // Predicated region
  $region6: #{_lambda_.47} parent=0 // pred_check
    _
  $region7: #{_lambda_.47} parent=0 // pred_check_branch
    %11 = sbr.rel (0) target = $region9
  $region8: #{_lambda_.47} parent=0 // pred_region
    _
  $region9: #{_lambda_.47} parent=0 // pred_fallthru
    _
  // Predicated region
  $region10: #{_lambda_.47} parent=0 // pred_check
    _
  $region11: #{_lambda_.47} parent=0 // pred_check_branch
    %13 = sbr.rel (0) target = $region13
  $region12: #{_lambda_.47} parent=0 // pred_region
    _
  $region13: #{_lambda_.47} parent=0 // pred_fallthru
    _
  %p14 = scmp.eq.s32.totalorder 0, 0
  // Predicated region
  $region14: #{_lambda_.47} parent=0 // pred_check
    %p15 = pneg %p14
  $region15: #{_lambda_.47} parent=0 // pred_check_branch
    %17 = sbr.rel (%p15) target = $region17
  $region16: #{_lambda_.47} parent=0 // pred_region
    %vm18 = vcmask 7168
    %19 = vst.msk [vmem:[#allocation2] sm:$0xff] %vm18, -inf
    %20 = vst.msk [vmem:[#allocation2 + $0x8] sm:$0xff] %vm18, -inf
    %21 = vst.msk [vmem:[#allocation2 + $0x10] sm:$0xff] %vm18, -inf
    %22 = vst.msk [vmem:[#allocation2 + $0x18] sm:$0xff] %vm18, -inf
    %23 = vst.msk [vmem:[#allocation2 + $0x20] sm:$0xff] %vm18, -inf
    %24 = vst.msk [vmem:[#allocation2 + $0x28] sm:$0xff] %vm18, -inf
    %25 = vst.msk [vmem:[#allocation2 + $0x30] sm:$0xff] %vm18, -inf
    %26 = vst.msk [vmem:[#allocation2 + $0x38] sm:$0xff] %vm18, -inf
    %27 = vst.msk [vmem:[#allocation3] sm:$0xff] %vm18, 0.0
    %28 = vst.msk [vmem:[#allocation3 + $0x8] sm:$0xff] %vm18, 0.0
    %29 = vst.msk [vmem:[#allocation3 + $0x10] sm:$0xff] %vm18, 0.0
    %30 = vst.msk [vmem:[#allocation3 + $0x18] sm:$0xff] %vm18, 0.0
    %31 = vst.msk [vmem:[#allocation3 + $0x20] sm:$0xff] %vm18, 0.0
    %32 = vst.msk [vmem:[#allocation3 + $0x28] sm:$0xff] %vm18, 0.0
    %33 = vst.msk [vmem:[#allocation3 + $0x30] sm:$0xff] %vm18, 0.0
    %34 = vst.msk [vmem:[#allocation3 + $0x38] sm:$0xff] %vm18, 0.0
    %35 = vst [vmem:[#allocation4] sm:$0xff] 0.0
    %36 = vst [vmem:[#allocation4 + $0x8] sm:$0xff] 0.0
    %37 = vst [vmem:[#allocation4 + $0x10] sm:$0xff] 0.0
    %38 = vst [vmem:[#allocation4 + $0x18] sm:$0xff] 0.0
    %39 = vst [vmem:[#allocation4 + $0x20] sm:$0xff] 0.0
    %40 = vst [vmem:[#allocation4 + $0x28] sm:$0xff] 0.0
    %41 = vst [vmem:[#allocation4 + $0x30] sm:$0xff] 0.0
    %42 = vst [vmem:[#allocation4 + $0x38] sm:$0xff] 0.0
  $region17: #{_lambda_.47} parent=0 // pred_fallthru
    _
  %v43 = vld [vmem:[%s0] sm:$0xff]
  %v44 = vld [vmem:[%s0 + $0x8] sm:$0xff]
  %v45 = vld [vmem:[%s0 + $0x10] sm:$0xff]
  %v46 = vld [vmem:[%s0 + $0x18] sm:$0xff]
  %v47 = vld [vmem:[%s0 + $0x20] sm:$0xff]
  %v48 = vld [vmem:[%s0 + $0x28] sm:$0xff]
  %v49 = vld [vmem:[%s0 + $0x30] sm:$0xff]
  %v50 = vld [vmem:[%s0 + $0x38] sm:$0xff]
  %v51 = vld [vmem:[%s1] sm:$0xff]
  %v52 = vld [vmem:[%s1 + $0x8] sm:$0xff]
  %v53 = vld [vmem:[%s1 + $0x10] sm:$0xff]
  %v54 = vld [vmem:[%s1 + $0x18] sm:$0xff]
  %v55 = vld [vmem:[%s1 + $0x20] sm:$0xff]
  %v56 = vld [vmem:[%s1 + $0x28] sm:$0xff]
  %v57 = vld [vmem:[%s1 + $0x30] sm:$0xff]
  %v58 = vld [vmem:[%s1 + $0x38] sm:$0xff]
  %59 = vmatprep.subr.mxu0 0.0
  %60 = vmatpush1.xpose.msra.mxu0 %v51
  %61 = vmatprep.subr.mxu0 0.0
  %62 = vmatpush1.xpose.msra.mxu0 0.0
  %63 = vmatprep.subr.mxu0 0.0
  %64 = vmatpush1.xpose.msra.mxu0 0.0
  %65 = vmatprep.subr.mxu0 0.0
  %66 = vmatpush1.xpose.msra.mxu0 0.0
  %67 = vmatprep.subr.mxu0 0.0
  %68 = vmatpush1.xpose.msra.mxu0 0.0
  %69 = vmatprep.subr.mxu0 0.0
  %70 = vmatpush1.xpose.msra.mxu0 0.0
  %71 = vmatprep.subr.mxu0 0.0
  %72 = vmatpush1.xpose.msra.mxu0 0.0
  %73 = vmatprep.subr.mxu0 0.0
  %74 = vmatpush1.xpose.msra.mxu0 0.0
  %75 = vmatprep.subr.mxu0 0.0
  %76 = vmatpush1.xpose.msra.mxu0 0.0
  %77 = vmatprep.subr.mxu0 0.0
  %78 = vmatpush1.xpose.msra.mxu0 0.0
  %79 = vmatprep.subr.mxu0 0.0
  %80 = vmatpush1.xpose.msra.mxu0 0.0
  %81 = vmatprep.subr.mxu0 0.0
  %82 = vmatpush1.xpose.msra.mxu0 0.0
  %83 = vmatprep.subr.mxu0 0.0
  %84 = vmatpush1.xpose.msra.mxu0 0.0
  %85 = vmatprep.subr.mxu0 0.0
  %86 = vmatpush1.xpose.msra.mxu0 0.0
  %87 = vmatprep.subr.mxu0 0.0
  %88 = vmatpush1.xpose.msra.mxu0 0.0
  %89 = vmatprep.subr.mxu0 0.0
  %90 = vmatpush1.xpose.msra.mxu0 0.0
  %91 = vmatprep.subr.mxu0 0.0
  %92 = vmatpush1.xpose.msra.mxu0 0.0
  %93 = vmatprep.subr.mxu0 0.0
  %94 = vmatpush1.xpose.msra.mxu0 0.0
  %95 = vmatprep.subr.mxu0 0.0
  %96 = vmatpush1.xpose.msra.mxu0 0.0
  %97 = vmatprep.subr.mxu0 0.0
  %98 = vmatpush1.xpose.msra.mxu0 0.0
  %99 = vmatprep.subr.mxu0 0.0
  %100 = vmatpush1.xpose.msra.mxu0 0.0
  %101 = vmatprep.subr.mxu0 0.0
  %102 = vmatpush1.xpose.msra.mxu0 0.0
  %103 = vmatprep.subr.mxu0 0.0
  %104 = vmatpush1.xpose.msra.mxu0 0.0
  %105 = vmatprep.subr.mxu0 0.0
  %106 = vmatpush1.xpose.msra.mxu0 0.0
  %107 = vmatprep.subr.mxu0 0.0
  %108 = vmatpush1.xpose.msra.mxu0 0.0
  %109 = vmatprep.subr.mxu0 0.0
  %110 = vmatpush1.xpose.msra.mxu0 0.0
  %111 = vmatprep.subr.mxu0 0.0
  %112 = vmatpush1.xpose.msra.mxu0 0.0
  %113 = vmatprep.subr.mxu0 0.0
  %114 = vmatpush1.xpose.msra.mxu0 0.0
  %115 = vmatprep.subr.mxu0 0.0
  %116 = vmatpush1.xpose.msra.mxu0 0.0
  %117 = vmatprep.subr.mxu0 0.0
  %118 = vmatpush1.xpose.msra.mxu0 0.0
  %119 = vmatprep.subr.mxu0 0.0
  %120 = vmatpush1.xpose.msra.mxu0 0.0
  %121 = vmatprep.subr.mxu0 0.0
  %122 = vmatpush1.xpose.msra.mxu0 0.0
  %123 = vmatprep.mubr.f32.mxu0 0.0
  %124 = vmatmul.mubr.f32.gmra.mrb[0].mxu0 %v43
  %v125 = vpop.f32.mrb[0].mxu0
  %v126 = vadd.f32 0.0, %v125
  %v127 = vpop.f32.mrb[0].mxu0
  %128 = vdwg.mxu0
  %129 = vmatprep.subr.mxu0 0.0
  %130 = vmatpush1.xpose.msra.mxu0 %v52
  %131 = vmatprep.subr.mxu0 0.0
  %132 = vmatpush1.xpose.msra.mxu0 0.0
  %133 = vmatprep.subr.mxu0 0.0
  %134 = vmatpush1.xpose.msra.mxu0 0.0
  %135 = vmatprep.subr.mxu0 0.0
  %136 = vmatpush1.xpose.msra.mxu0 0.0
  %137 = vmatprep.subr.mxu0 0.0
  %138 = vmatpush1.xpose.msra.mxu0 0.0
  %139 = vmatprep.subr.mxu0 0.0
  %140 = vmatpush1.xpose.msra.mxu0 0.0
  %141 = vmatprep.subr.mxu0 0.0
  %142 = vmatpush1.xpose.msra.mxu0 0.0
  %143 = vmatprep.subr.mxu0 0.0
  %144 = vmatpush1.xpose.msra.mxu0 0.0
  %145 = vmatprep.subr.mxu0 0.0
  %146 = vmatpush1.xpose.msra.mxu0 0.0
  %147 = vmatprep.subr.mxu0 0.0
  %148 = vmatpush1.xpose.msra.mxu0 0.0
  %149 = vmatprep.subr.mxu0 0.0
  %150 = vmatpush1.xpose.msra.mxu0 0.0
  %151 = vmatprep.subr.mxu0 0.0
  %152 = vmatpush1.xpose.msra.mxu0 0.0
  %153 = vmatprep.subr.mxu0 0.0
  %154 = vmatpush1.xpose.msra.mxu0 0.0
  %155 = vmatprep.subr.mxu0 0.0
  %156 = vmatpush1.xpose.msra.mxu0 0.0
  %157 = vmatprep.subr.mxu0 0.0
  %158 = vmatpush1.xpose.msra.mxu0 0.0
  %159 = vmatprep.subr.mxu0 0.0
  %160 = vmatpush1.xpose.msra.mxu0 0.0
  %161 = vmatprep.subr.mxu0 0.0
  %162 = vmatpush1.xpose.msra.mxu0 0.0
  %163 = vmatprep.subr.mxu0 0.0
  %164 = vmatpush1.xpose.msra.mxu0 0.0
  %165 = vmatprep.subr.mxu0 0.0
  %166 = vmatpush1.xpose.msra.mxu0 0.0
  %167 = vmatprep.subr.mxu0 0.0
  %168 = vmatpush1.xpose.msra.mxu0 0.0
  %169 = vmatprep.subr.mxu0 0.0
  %170 = vmatpush1.xpose.msra.mxu0 0.0
  %171 = vmatprep.subr.mxu0 0.0
  %172 = vmatpush1.xpose.msra.mxu0 0.0
  %173 = vmatprep.subr.mxu0 0.0
  %174 = vmatpush1.xpose.msra.mxu0 0.0
  %175 = vmatprep.subr.mxu0 0.0
  %176 = vmatpush1.xpose.msra.mxu0 0.0
  %177 = vmatprep.subr.mxu0 0.0
  %178 = vmatpush1.xpose.msra.mxu0 0.0
  %179 = vmatprep.subr.mxu0 0.0
  %180 = vmatpush1.xpose.msra.mxu0 0.0
  %181 = vmatprep.subr.mxu0 0.0
  %182 = vmatpush1.xpose.msra.mxu0 0.0
  %183 = vmatprep.subr.mxu0 0.0
  %184 = vmatpush1.xpose.msra.mxu0 0.0
  %185 = vmatprep.subr.mxu0 0.0
  %186 = vmatpush1.xpose.msra.mxu0 0.0
  %187 = vmatprep.subr.mxu0 0.0
  %188 = vmatpush1.xpose.msra.mxu0 0.0
  %189 = vmatprep.subr.mxu0 0.0
  %190 = vmatpush1.xpose.msra.mxu0 0.0
  %191 = vmatprep.subr.mxu0 0.0
  %192 = vmatpush1.xpose.msra.mxu0 0.0
  %193 = vmatprep.mubr.f32.mxu0 0.0
  %194 = vmatmul.mubr.f32.gmra.mrb[0].mxu0 %v44
  %v195 = vpop.f32.mrb[0].mxu0
  %v196 = vadd.f32 0.0, %v195
  %v197 = vpop.f32.mrb[0].mxu0
  %198 = vdwg.mxu0
  %199 = vmatprep.subr.mxu0 0.0
  %200 = vmatpush1.xpose.msra.mxu0 %v53
  %201 = vmatprep.subr.mxu0 0.0
  %202 = vmatpush1.xpose.msra.mxu0 0.0
  %203 = vmatprep.subr.mxu0 0.0
  %204 = vmatpush1.xpose.msra.mxu0 0.0
  %205 = vmatprep.subr.mxu0 0.0
  %206 = vmatpush1.xpose.msra.mxu0 0.0
  %207 = vmatprep.subr.mxu0 0.0
  %208 = vmatpush1.xpose.msra.mxu0 0.0
  %209 = vmatprep.subr.mxu0 0.0
  %210 = vmatpush1.xpose.msra.mxu0 0.0
  %211 = vmatprep.subr.mxu0 0.0
  %212 = vmatpush1.xpose.msra.mxu0 0.0
  %213 = vmatprep.subr.mxu0 0.0
  %214 = vmatpush1.xpose.msra.mxu0 0.0
  %215 = vmatprep.subr.mxu0 0.0
  %216 = vmatpush1.xpose.msra.mxu0 0.0
  %217 = vmatprep.subr.mxu0 0.0
  %218 = vmatpush1.xpose.msra.mxu0 0.0
  %219 = vmatprep.subr.mxu0 0.0
  %220 = vmatpush1.xpose.msra.mxu0 0.0
  %221 = vmatprep.subr.mxu0 0.0
  %222 = vmatpush1.xpose.msra.mxu0 0.0
  %223 = vmatprep.subr.mxu0 0.0
  %224 = vmatpush1.xpose.msra.mxu0 0.0
  %225 = vmatprep.subr.mxu0 0.0
  %226 = vmatpush1.xpose.msra.mxu0 0.0
  %227 = vmatprep.subr.mxu0 0.0
  %228 = vmatpush1.xpose.msra.mxu0 0.0
  %229 = vmatprep.subr.mxu0 0.0
  %230 = vmatpush1.xpose.msra.mxu0 0.0
  %231 = vmatprep.subr.mxu0 0.0
  %232 = vmatpush1.xpose.msra.mxu0 0.0
  %233 = vmatprep.subr.mxu0 0.0
  %234 = vmatpush1.xpose.msra.mxu0 0.0
  %235 = vmatprep.subr.mxu0 0.0
  %236 = vmatpush1.xpose.msra.mxu0 0.0
  %237 = vmatprep.subr.mxu0 0.0
  %238 = vmatpush1.xpose.msra.mxu0 0.0
  %239 = vmatprep.subr.mxu0 0.0
  %240 = vmatpush1.xpose.msra.mxu0 0.0
  %241 = vmatprep.subr.mxu0 0.0
  %242 = vmatpush1.xpose.msra.mxu0 0.0
  %243 = vmatprep.subr.mxu0 0.0
  %244 = vmatpush1.xpose.msra.mxu0 0.0
  %245 = vmatprep.subr.mxu0 0.0
  %246 = vmatpush1.xpose.msra.mxu0 0.0
  %247 = vmatprep.subr.mxu0 0.0
  %248 = vmatpush1.xpose.msra.mxu0 0.0
  %249 = vmatprep.subr.mxu0 0.0
  %250 = vmatpush1.xpose.msra.mxu0 0.0
  %251 = vmatprep.subr.mxu0 0.0
  %252 = vmatpush1.xpose.msra.mxu0 0.0
  %253 = vmatprep.subr.mxu0 0.0
  %254 = vmatpush1.xpose.msra.mxu0 0.0
  %255 = vmatprep.subr.mxu0 0.0
  %256 = vmatpush1.xpose.msra.mxu0 0.0
  %257 = vmatprep.subr.mxu0 0.0
  %258 = vmatpush1.xpose.msra.mxu0 0.0
  %259 = vmatprep.subr.mxu0 0.0
  %260 = vmatpush1.xpose.msra.mxu0 0.0
  %261 = vmatprep.subr.mxu0 0.0
  %262 = vmatpush1.xpose.msra.mxu0 0.0
  %263 = vmatprep.mubr.f32.mxu0 0.0
  %264 = vmatmul.mubr.f32.gmra.mrb[0].mxu0 %v45
  %v265 = vpop.f32.mrb[0].mxu0
  %v266 = vadd.f32 0.0, %v265
  %v267 = vpop.f32.mrb[0].mxu0
  %268 = vdwg.mxu0
  %269 = vmatprep.subr.mxu0 0.0
  %270 = vmatpush1.xpose.msra.mxu0 %v54
  %271 = vmatprep.subr.mxu0 0.0
  %272 = vmatpush1.xpose.msra.mxu0 0.0
  %273 = vmatprep.subr.mxu0 0.0
  %274 = vmatpush1.xpose.msra.mxu0 0.0
  %275 = vmatprep.subr.mxu0 0.0
  %276 = vmatpush1.xpose.msra.mxu0 0.0
  %277 = vmatprep.subr.mxu0 0.0
  %278 = vmatpush1.xpose.msra.mxu0 0.0
  %279 = vmatprep.subr.mxu0 0.0
  %280 = vmatpush1.xpose.msra.mxu0 0.0
  %281 = vmatprep.subr.mxu0 0.0
  %282 = vmatpush1.xpose.msra.mxu0 0.0
  %283 = vmatprep.subr.mxu0 0.0
  %284 = vmatpush1.xpose.msra.mxu0 0.0
  %285 = vmatprep.subr.mxu0 0.0
  %286 = vmatpush1.xpose.msra.mxu0 0.0
  %287 = vmatprep.subr.mxu0 0.0
  %288 = vmatpush1.xpose.msra.mxu0 0.0
  %289 = vmatprep.subr.mxu0 0.0
  %290 = vmatpush1.xpose.msra.mxu0 0.0
  %291 = vmatprep.subr.mxu0 0.0
  %292 = vmatpush1.xpose.msra.mxu0 0.0
  %293 = vmatprep.subr.mxu0 0.0
  %294 = vmatpush1.xpose.msra.mxu0 0.0
  %295 = vmatprep.subr.mxu0 0.0
  %296 = vmatpush1.xpose.msra.mxu0 0.0
  %297 = vmatprep.subr.mxu0 0.0
  %298 = vmatpush1.xpose.msra.mxu0 0.0
  %299 = vmatprep.subr.mxu0 0.0
  %300 = vmatpush1.xpose.msra.mxu0 0.0
  %301 = vmatprep.subr.mxu0 0.0
  %302 = vmatpush1.xpose.msra.mxu0 0.0
  %303 = vmatprep.subr.mxu0 0.0
  %304 = vmatpush1.xpose.msra.mxu0 0.0
  %305 = vmatprep.subr.mxu0 0.0
  %306 = vmatpush1.xpose.msra.mxu0 0.0
  %307 = vmatprep.subr.mxu0 0.0
  %308 = vmatpush1.xpose.msra.mxu0 0.0
  %309 = vmatprep.subr.mxu0 0.0
  %310 = vmatpush1.xpose.msra.mxu0 0.0
  %311 = vmatprep.subr.mxu0 0.0
  %312 = vmatpush1.xpose.msra.mxu0 0.0
  %313 = vmatprep.subr.mxu0 0.0
  %314 = vmatpush1.xpose.msra.mxu0 0.0
  %315 = vmatprep.subr.mxu0 0.0
  %316 = vmatpush1.xpose.msra.mxu0 0.0
  %317 = vmatprep.subr.mxu0 0.0
  %318 = vmatpush1.xpose.msra.mxu0 0.0
  %319 = vmatprep.subr.mxu0 0.0
  %320 = vmatpush1.xpose.msra.mxu0 0.0
  %321 = vmatprep.subr.mxu0 0.0
  %322 = vmatpush1.xpose.msra.mxu0 0.0
  %323 = vmatprep.subr.mxu0 0.0
  %324 = vmatpush1.xpose.msra.mxu0 0.0
  %325 = vmatprep.subr.mxu0 0.0
  %326 = vmatpush1.xpose.msra.mxu0 0.0
  %327 = vmatprep.subr.mxu0 0.0
  %328 = vmatpush1.xpose.msra.mxu0 0.0
  %329 = vmatprep.subr.mxu0 0.0
  %330 = vmatpush1.xpose.msra.mxu0 0.0
  %331 = vmatprep.subr.mxu0 0.0
  %332 = vmatpush1.xpose.msra.mxu0 0.0
  %333 = vmatprep.mubr.f32.mxu0 0.0
  %334 = vmatmul.mubr.f32.gmra.mrb[0].mxu0 %v46
  %v335 = vpop.f32.mrb[0].mxu0
  %v336 = vadd.f32 0.0, %v335
  %v337 = vpop.f32.mrb[0].mxu0
  %338 = vdwg.mxu0
  %339 = vmatprep.subr.mxu0 0.0
  %340 = vmatpush1.xpose.msra.mxu0 %v55
  %341 = vmatprep.subr.mxu0 0.0
  %342 = vmatpush1.xpose.msra.mxu0 0.0
  %343 = vmatprep.subr.mxu0 0.0
  %344 = vmatpush1.xpose.msra.mxu0 0.0
  %345 = vmatprep.subr.mxu0 0.0
  %346 = vmatpush1.xpose.msra.mxu0 0.0
  %347 = vmatprep.subr.mxu0 0.0
  %348 = vmatpush1.xpose.msra.mxu0 0.0
  %349 = vmatprep.subr.mxu0 0.0
  %350 = vmatpush1.xpose.msra.mxu0 0.0
  %351 = vmatprep.subr.mxu0 0.0
  %352 = vmatpush1.xpose.msra.mxu0 0.0
  %353 = vmatprep.subr.mxu0 0.0
  %354 = vmatpush1.xpose.msra.mxu0 0.0
  %355 = vmatprep.subr.mxu0 0.0
  %356 = vmatpush1.xpose.msra.mxu0 0.0
  %357 = vmatprep.subr.mxu0 0.0
  %358 = vmatpush1.xpose.msra.mxu0 0.0
  %359 = vmatprep.subr.mxu0 0.0
  %360 = vmatpush1.xpose.msra.mxu0 0.0
  %361 = vmatprep.subr.mxu0 0.0
  %362 = vmatpush1.xpose.msra.mxu0 0.0
  %363 = vmatprep.subr.mxu0 0.0
  %364 = vmatpush1.xpose.msra.mxu0 0.0
  %365 = vmatprep.subr.mxu0 0.0
  %366 = vmatpush1.xpose.msra.mxu0 0.0
  %367 = vmatprep.subr.mxu0 0.0
  %368 = vmatpush1.xpose.msra.mxu0 0.0
  %369 = vmatprep.subr.mxu0 0.0
  %370 = vmatpush1.xpose.msra.mxu0 0.0
  %371 = vmatprep.subr.mxu0 0.0
  %372 = vmatpush1.xpose.msra.mxu0 0.0
  %373 = vmatprep.subr.mxu0 0.0
  %374 = vmatpush1.xpose.msra.mxu0 0.0
  %375 = vmatprep.subr.mxu0 0.0
  %376 = vmatpush1.xpose.msra.mxu0 0.0
  %377 = vmatprep.subr.mxu0 0.0
  %378 = vmatpush1.xpose.msra.mxu0 0.0
  %379 = vmatprep.subr.mxu0 0.0
  %380 = vmatpush1.xpose.msra.mxu0 0.0
  %381 = vmatprep.subr.mxu0 0.0
  %382 = vmatpush1.xpose.msra.mxu0 0.0
  %383 = vmatprep.subr.mxu0 0.0
  %384 = vmatpush1.xpose.msra.mxu0 0.0
  %385 = vmatprep.subr.mxu0 0.0
  %386 = vmatpush1.xpose.msra.mxu0 0.0
  %387 = vmatprep.subr.mxu0 0.0
  %388 = vmatpush1.xpose.msra.mxu0 0.0
  %389 = vmatprep.subr.mxu0 0.0
  %390 = vmatpush1.xpose.msra.mxu0 0.0
  %391 = vmatprep.subr.mxu0 0.0
  %392 = vmatpush1.xpose.msra.mxu0 0.0
  %393 = vmatprep.subr.mxu0 0.0
  %394 = vmatpush1.xpose.msra.mxu0 0.0
  %395 = vmatprep.subr.mxu0 0.0
  %396 = vmatpush1.xpose.msra.mxu0 0.0
  %397 = vmatprep.subr.mxu0 0.0
  %398 = vmatpush1.xpose.msra.mxu0 0.0
  %399 = vmatprep.subr.mxu0 0.0
  %400 = vmatpush1.xpose.msra.mxu0 0.0
  %401 = vmatprep.subr.mxu0 0.0
  %402 = vmatpush1.xpose.msra.mxu0 0.0
  %403 = vmatprep.mubr.f32.mxu0 0.0
  %404 = vmatmul.mubr.f32.gmra.mrb[0].mxu0 %v47
  %v405 = vpop.f32.mrb[0].mxu0
  %v406 = vadd.f32 0.0, %v405
  %v407 = vpop.f32.mrb[0].mxu0
  %408 = vdwg.mxu0
  %409 = vmatprep.subr.mxu0 0.0
  %410 = vmatpush1.xpose.msra.mxu0 %v56
  %411 = vmatprep.subr.mxu0 0.0
  %412 = vmatpush1.xpose.msra.mxu0 0.0
  %413 = vmatprep.subr.mxu0 0.0
  %414 = vmatpush1.xpose.msra.mxu0 0.0
  %415 = vmatprep.subr.mxu0 0.0
  %416 = vmatpush1.xpose.msra.mxu0 0.0
  %417 = vmatprep.subr.mxu0 0.0
  %418 = vmatpush1.xpose.msra.mxu0 0.0
  %419 = vmatprep.subr.mxu0 0.0
  %420 = vmatpush1.xpose.msra.mxu0 0.0
  %421 = vmatprep.subr.mxu0 0.0
  %422 = vmatpush1.xpose.msra.mxu0 0.0
  %423 = vmatprep.subr.mxu0 0.0
  %424 = vmatpush1.xpose.msra.mxu0 0.0
  %425 = vmatprep.subr.mxu0 0.0
  %426 = vmatpush1.xpose.msra.mxu0 0.0
  %427 = vmatprep.subr.mxu0 0.0
  %428 = vmatpush1.xpose.msra.mxu0 0.0
  %429 = vmatprep.subr.mxu0 0.0
  %430 = vmatpush1.xpose.msra.mxu0 0.0
  %431 = vmatprep.subr.mxu0 0.0
  %432 = vmatpush1.xpose.msra.mxu0 0.0
  %433 = vmatprep.subr.mxu0 0.0
  %434 = vmatpush1.xpose.msra.mxu0 0.0
  %435 = vmatprep.subr.mxu0 0.0
  %436 = vmatpush1.xpose.msra.mxu0 0.0
  %437 = vmatprep.subr.mxu0 0.0
  %438 = vmatpush1.xpose.msra.mxu0 0.0
  %439 = vmatprep.subr.mxu0 0.0
  %440 = vmatpush1.xpose.msra.mxu0 0.0
  %441 = vmatprep.subr.mxu0 0.0
  %442 = vmatpush1.xpose.msra.mxu0 0.0
  %443 = vmatprep.subr.mxu0 0.0
  %444 = vmatpush1.xpose.msra.mxu0 0.0
  %445 = vmatprep.subr.mxu0 0.0
  %446 = vmatpush1.xpose.msra.mxu0 0.0
  %447 = vmatprep.subr.mxu0 0.0
  %448 = vmatpush1.xpose.msra.mxu0 0.0
  %449 = vmatprep.subr.mxu0 0.0
  %450 = vmatpush1.xpose.msra.mxu0 0.0
  %451 = vmatprep.subr.mxu0 0.0
  %452 = vmatpush1.xpose.msra.mxu0 0.0
  %453 = vmatprep.subr.mxu0 0.0
  %454 = vmatpush1.xpose.msra.mxu0 0.0
  %455 = vmatprep.subr.mxu0 0.0
  %456 = vmatpush1.xpose.msra.mxu0 0.0
  %457 = vmatprep.subr.mxu0 0.0
  %458 = vmatpush1.xpose.msra.mxu0 0.0
  %459 = vmatprep.subr.mxu0 0.0
  %460 = vmatpush1.xpose.msra.mxu0 0.0
  %461 = vmatprep.subr.mxu0 0.0
  %462 = vmatpush1.xpose.msra.mxu0 0.0
  %463 = vmatprep.subr.mxu0 0.0
  %464 = vmatpush1.xpose.msra.mxu0 0.0
  %465 = vmatprep.subr.mxu0 0.0
  %466 = vmatpush1.xpose.msra.mxu0 0.0
  %467 = vmatprep.subr.mxu0 0.0
  %468 = vmatpush1.xpose.msra.mxu0 0.0
  %469 = vmatprep.subr.mxu0 0.0
  %470 = vmatpush1.xpose.msra.mxu0 0.0
  %471 = vmatprep.subr.mxu0 0.0
  %472 = vmatpush1.xpose.msra.mxu0 0.0
  %473 = vmatprep.mubr.f32.mxu0 0.0
  %474 = vmatmul.mubr.f32.gmra.mrb[0].mxu0 %v48
  %v475 = vpop.f32.mrb[0].mxu0
  %v476 = vadd.f32 0.0, %v475
  %v477 = vpop.f32.mrb[0].mxu0
  %478 = vdwg.mxu0
  %479 = vmatprep.subr.mxu0 0.0
  %480 = vmatpush1.xpose.msra.mxu0 %v57
  %481 = vmatprep.subr.mxu0 0.0
  %482 = vmatpush1.xpose.msra.mxu0 0.0
  %483 = vmatprep.subr.mxu0 0.0
  %484 = vmatpush1.xpose.msra.mxu0 0.0
  %485 = vmatprep.subr.mxu0 0.0
  %486 = vmatpush1.xpose.msra.mxu0 0.0
  %487 = vmatprep.subr.mxu0 0.0
  %488 = vmatpush1.xpose.msra.mxu0 0.0
  %489 = vmatprep.subr.mxu0 0.0
  %490 = vmatpush1.xpose.msra.mxu0 0.0
  %491 = vmatprep.subr.mxu0 0.0
  %492 = vmatpush1.xpose.msra.mxu0 0.0
  %493 = vmatprep.subr.mxu0 0.0
  %494 = vmatpush1.xpose.msra.mxu0 0.0
  %495 = vmatprep.subr.mxu0 0.0
  %496 = vmatpush1.xpose.msra.mxu0 0.0
  %497 = vmatprep.subr.mxu0 0.0
  %498 = vmatpush1.xpose.msra.mxu0 0.0
  %499 = vmatprep.subr.mxu0 0.0
  %500 = vmatpush1.xpose.msra.mxu0 0.0
  %501 = vmatprep.subr.mxu0 0.0
  %502 = vmatpush1.xpose.msra.mxu0 0.0
  %503 = vmatprep.subr.mxu0 0.0
  %504 = vmatpush1.xpose.msra.mxu0 0.0
  %505 = vmatprep.subr.mxu0 0.0
  %506 = vmatpush1.xpose.msra.mxu0 0.0
  %507 = vmatprep.subr.mxu0 0.0
  %508 = vmatpush1.xpose.msra.mxu0 0.0
  %509 = vmatprep.subr.mxu0 0.0
  %510 = vmatpush1.xpose.msra.mxu0 0.0
  %511 = vmatprep.subr.mxu0 0.0
  %512 = vmatpush1.xpose.msra.mxu0 0.0
  %513 = vmatprep.subr.mxu0 0.0
  %514 = vmatpush1.xpose.msra.mxu0 0.0
  %515 = vmatprep.subr.mxu0 0.0
  %516 = vmatpush1.xpose.msra.mxu0 0.0
  %517 = vmatprep.subr.mxu0 0.0
  %518 = vmatpush1.xpose.msra.mxu0 0.0
  %519 = vmatprep.subr.mxu0 0.0
  %520 = vmatpush1.xpose.msra.mxu0 0.0
  %521 = vmatprep.subr.mxu0 0.0
  %522 = vmatpush1.xpose.msra.mxu0 0.0
  %523 = vmatprep.subr.mxu0 0.0
  %524 = vmatpush1.xpose.msra.mxu0 0.0
  %525 = vmatprep.subr.mxu0 0.0
  %526 = vmatpush1.xpose.msra.mxu0 0.0
  %527 = vmatprep.subr.mxu0 0.0
  %528 = vmatpush1.xpose.msra.mxu0 0.0
  %529 = vmatprep.subr.mxu0 0.0
  %530 = vmatpush1.xpose.msra.mxu0 0.0
  %531 = vmatprep.subr.mxu0 0.0
  %532 = vmatpush1.xpose.msra.mxu0 0.0
  %533 = vmatprep.subr.mxu0 0.0
  %534 = vmatpush1.xpose.msra.mxu0 0.0
  %535 = vmatprep.subr.mxu0 0.0
  %536 = vmatpush1.xpose.msra.mxu0 0.0
  %537 = vmatprep.subr.mxu0 0.0
  %538 = vmatpush1.xpose.msra.mxu0 0.0
  %539 = vmatprep.subr.mxu0 0.0
  %540 = vmatpush1.xpose.msra.mxu0 0.0
  %541 = vmatprep.subr.mxu0 0.0
  %542 = vmatpush1.xpose.msra.mxu0 0.0
  %543 = vmatprep.mubr.f32.mxu0 0.0
  %544 = vmatmul.mubr.f32.gmra.mrb[0].mxu0 %v49
  %v545 = vpop.f32.mrb[0].mxu0
  %v546 = vadd.f32 0.0, %v545
  %v547 = vpop.f32.mrb[0].mxu0
  %548 = vdwg.mxu0
  %549 = vmatprep.subr.mxu0 0.0
  %550 = vmatpush1.xpose.msra.mxu0 %v58
  %551 = vmatprep.subr.mxu0 0.0
  %552 = vmatpush1.xpose.msra.mxu0 0.0
  %553 = vmatprep.subr.mxu0 0.0
  %554 = vmatpush1.xpose.msra.mxu0 0.0
  %555 = vmatprep.subr.mxu0 0.0
  %556 = vmatpush1.xpose.msra.mxu0 0.0
  %557 = vmatprep.subr.mxu0 0.0
  %558 = vmatpush1.xpose.msra.mxu0 0.0
  %559 = vmatprep.subr.mxu0 0.0
  %560 = vmatpush1.xpose.msra.mxu0 0.0
  %561 = vmatprep.subr.mxu0 0.0
  %562 = vmatpush1.xpose.msra.mxu0 0.0
  %563 = vmatprep.subr.mxu0 0.0
  %564 = vmatpush1.xpose.msra.mxu0 0.0
  %565 = vmatprep.subr.mxu0 0.0
  %566 = vmatpush1.xpose.msra.mxu0 0.0
  %567 = vmatprep.subr.mxu0 0.0
  %568 = vmatpush1.xpose.msra.mxu0 0.0
  %569 = vmatprep.subr.mxu0 0.0
  %570 = vmatpush1.xpose.msra.mxu0 0.0
  %571 = vmatprep.subr.mxu0 0.0
  %572 = vmatpush1.xpose.msra.mxu0 0.0
  %573 = vmatprep.subr.mxu0 0.0
  %574 = vmatpush1.xpose.msra.mxu0 0.0
  %575 = vmatprep.subr.mxu0 0.0
  %576 = vmatpush1.xpose.msra.mxu0 0.0
  %577 = vmatprep.subr.mxu0 0.0
  %578 = vmatpush1.xpose.msra.mxu0 0.0
  %579 = vmatprep.subr.mxu0 0.0
  %580 = vmatpush1.xpose.msra.mxu0 0.0
  %581 = vmatprep.subr.mxu0 0.0
  %582 = vmatpush1.xpose.msra.mxu0 0.0
  %583 = vmatprep.subr.mxu0 0.0
  %584 = vmatpush1.xpose.msra.mxu0 0.0
  %585 = vmatprep.subr.mxu0 0.0
  %586 = vmatpush1.xpose.msra.mxu0 0.0
  %587 = vmatprep.subr.mxu0 0.0
  %588 = vmatpush1.xpose.msra.mxu0 0.0
  %589 = vmatprep.subr.mxu0 0.0
  %590 = vmatpush1.xpose.msra.mxu0 0.0
  %591 = vmatprep.subr.mxu0 0.0
  %592 = vmatpush1.xpose.msra.mxu0 0.0
  %593 = vmatprep.subr.mxu0 0.0
  %594 = vmatpush1.xpose.msra.mxu0 0.0
  %595 = vmatprep.subr.mxu0 0.0
  %596 = vmatpush1.xpose.msra.mxu0 0.0
  %597 = vmatprep.subr.mxu0 0.0
  %598 = vmatpush1.xpose.msra.mxu0 0.0
  %599 = vmatprep.subr.mxu0 0.0
  %600 = vmatpush1.xpose.msra.mxu0 0.0
  %601 = vmatprep.subr.mxu0 0.0
  %602 = vmatpush1.xpose.msra.mxu0 0.0
  %603 = vmatprep.subr.mxu0 0.0
  %604 = vmatpush1.xpose.msra.mxu0 0.0
  %605 = vmatprep.subr.mxu0 0.0
  %606 = vmatpush1.xpose.msra.mxu0 0.0
  %607 = vmatprep.subr.mxu0 0.0
  %608 = vmatpush1.xpose.msra.mxu0 0.0
  %609 = vmatprep.subr.mxu0 0.0
  %610 = vmatpush1.xpose.msra.mxu0 0.0
  %611 = vmatprep.subr.mxu0 0.0
  %612 = vmatpush1.xpose.msra.mxu0 0.0
  %613 = vmatprep.mubr.f32.mxu0 0.0
  %614 = vmatmul.mubr.f32.gmra.mrb[0].mxu0 %v50
  %v615 = vpop.f32.mrb[0].mxu0
  %v616 = vadd.f32 0.0, %v615
  %v617 = vpop.f32.mrb[0].mxu0
  %618 = vdwg.mxu0
  %v619 = vmul.f32 %v126, 0.35355338
  %v620 = vmul.f32 %v196, 0.35355338
  %v621 = vmul.f32 %v266, 0.35355338
  %v622 = vmul.f32 %v336, 0.35355338
  %v623 = vmul.f32 %v406, 0.35355338
  %v624 = vmul.f32 %v476, 0.35355338
  %v625 = vmul.f32 %v546, 0.35355338
  %v626 = vmul.f32 %v616, 0.35355338
  %s627 = smul.u32 0, 8
  %v628 = vlaneseq
  %v629 = vand.u32 %v628, 127
  %v630 = vstv %s627
  %v631 = vadd.s32 %v630, %v629
  %vm632 = vcmp.lt.s32.totalorder %v631, 8
  %s633 = smul.u32 0, 8
  %v634 = vlaneseq
  %v635 = vshrl.u32 %v634, 7
  %v636 = vstv %s633
  %v637 = vadd.s32 %v636, %v635
  %vm638 = vcmp.le.s32.totalorder %v631, %v637
  %vm639 = vmand %vm632, %vm638
  %v640 = vsel %vm639, 1, 0
  %vm641 = vcmp.eq.s32.totalorder %v640, 1
  %v642 = vsel %vm641, %v619, -1e+30
  %v643 = vsel %vm641, %v620, -1e+30
  %v644 = vsel %vm641, %v621, -1e+30
  %v645 = vsel %vm641, %v622, -1e+30
  %v646 = vsel %vm641, %v623, -1e+30
  %v647 = vsel %vm641, %v624, -1e+30
  %v648 = vsel %vm641, %v625, -1e+30
  %v649 = vsel %vm641, %v626, -1e+30
  %v650 = vld [vmem:[#allocation2] sm:$0xff]
  %v651 = vld [vmem:[#allocation2 + $0x8] sm:$0xff]
  %v652 = vld [vmem:[#allocation2 + $0x10] sm:$0xff]
  %v653 = vld [vmem:[#allocation2 + $0x18] sm:$0xff]
  %v654 = vld [vmem:[#allocation2 + $0x20] sm:$0xff]
  %v655 = vld [vmem:[#allocation2 + $0x28] sm:$0xff]
  %v656 = vld [vmem:[#allocation2 + $0x30] sm:$0xff]
  %v657 = vld [vmem:[#allocation2 + $0x38] sm:$0xff]
  %vm658 = vcmask 64512
  %v659 = vsel %vm658, %v642, -inf
  %660 = vmax.xlane.f32.xlu0 %v659
  %v661 = vpop.xlane.xlu0 %660
  %v662 = vsel %vm658, %v643, -inf
  %663 = vmax.xlane.f32.xlu0 %v662
  %v664 = vpop.xlane.xlu0 %663
  %v665 = vsel %vm658, %v644, -inf
  %666 = vmax.xlane.f32.xlu0 %v665
  %v667 = vpop.xlane.xlu0 %666
  %v668 = vsel %vm658, %v645, -inf
  %669 = vmax.xlane.f32.xlu0 %v668
  %v670 = vpop.xlane.xlu0 %669
  %v671 = vsel %vm658, %v646, -inf
  %672 = vmax.xlane.f32.xlu0 %v671
  %v673 = vpop.xlane.xlu0 %672
  %v674 = vsel %vm658, %v647, -inf
  %675 = vmax.xlane.f32.xlu0 %v674
  %v676 = vpop.xlane.xlu0 %675
  %v677 = vsel %vm658, %v648, -inf
  %678 = vmax.xlane.f32.xlu0 %v677
  %v679 = vpop.xlane.xlu0 %678
  %v680 = vsel %vm658, %v649, -inf
  %681 = vmax.xlane.f32.xlu0 %v680
  %v682 = vpop.xlane.xlu0 %681
  %v683 = vmax.f32 %v650, %v661
  %v684 = vmax.f32 %v651, %v664
  %v685 = vmax.f32 %v652, %v667
  %v686 = vmax.f32 %v653, %v670
  %v687 = vmax.f32 %v654, %v673
  %v688 = vmax.f32 %v655, %v676
  %v689 = vmax.f32 %v656, %v679
  %v690 = vmax.f32 %v657, %v682
  %v691 = vsub.f32 %v650, %v683
  %v692 = vsub.f32 %v651, %v684
  %v693 = vsub.f32 %v652, %v685
  %v694 = vsub.f32 %v653, %v686
  %v695 = vsub.f32 %v654, %v687
  %v696 = vsub.f32 %v655, %v688
  %v697 = vsub.f32 %v656, %v689
  %v698 = vsub.f32 %v657, %v690
  %v699 = vmul.f32 %v691, 1.442695
  %v700 = vpow.pop %v699
  %v701 = vmul.f32 %v692, 1.442695
  %v702 = vpow.pop %v701
  %v703 = vmul.f32 %v693, 1.442695
  %v704 = vpow.pop %v703
  %v705 = vmul.f32 %v694, 1.442695
  %v706 = vpow.pop %v705
  %v707 = vmul.f32 %v695, 1.442695
  %v708 = vpow.pop %v707
  %v709 = vmul.f32 %v696, 1.442695
  %v710 = vpow.pop %v709
  %v711 = vmul.f32 %v697, 1.442695
  %v712 = vpow.pop %v711
  %v713 = vmul.f32 %v698, 1.442695
  %v714 = vpow.pop %v713
  %716 = vset.pattern.permute.xlu0 0
  %717 = vperm.xlu0 %716, %v683
  %v718 = vpop.permute.xlu0 %717
  %721 = vset.pattern.permute.xlu0 0
  %722 = vperm.xlu0 %721, %v684
  %v723 = vpop.permute.xlu0 %722
  %726 = vset.pattern.permute.xlu0 0
  %727 = vperm.xlu0 %726, %v685
  %v728 = vpop.permute.xlu0 %727
  %731 = vset.pattern.permute.xlu0 0
  %732 = vperm.xlu0 %731, %v686
  %v733 = vpop.permute.xlu0 %732
  %736 = vset.pattern.permute.xlu0 0
  %737 = vperm.xlu0 %736, %v687
  %v738 = vpop.permute.xlu0 %737
  %741 = vset.pattern.permute.xlu0 0
  %742 = vperm.xlu0 %741, %v688
  %v743 = vpop.permute.xlu0 %742
  %746 = vset.pattern.permute.xlu0 0
  %747 = vperm.xlu0 %746, %v689
  %v748 = vpop.permute.xlu0 %747
  %751 = vset.pattern.permute.xlu0 0
  %752 = vperm.xlu0 %751, %v690
  %v753 = vpop.permute.xlu0 %752
  %v755 = vsub.f32 %v642, %v718
  %v756 = vsub.f32 %v643, %v723
  %v757 = vsub.f32 %v644, %v728
  %v758 = vsub.f32 %v645, %v733
  %v759 = vsub.f32 %v646, %v738
  %v760 = vsub.f32 %v647, %v743
  %v761 = vsub.f32 %v648, %v748
  %v762 = vsub.f32 %v649, %v753
  %v763 = vmul.f32 %v755, 1.442695
  %v764 = vpow.pop %v763
  %v765 = vmul.f32 %v756, 1.442695
  %v766 = vpow.pop %v765
  %v767 = vmul.f32 %v757, 1.442695
  %v768 = vpow.pop %v767
  %v769 = vmul.f32 %v758, 1.442695
  %v770 = vpow.pop %v769
  %v771 = vmul.f32 %v759, 1.442695
  %v772 = vpow.pop %v771
  %v773 = vmul.f32 %v760, 1.442695
  %v774 = vpow.pop %v773
  %v775 = vmul.f32 %v761, 1.442695
  %v776 = vpow.pop %v775
  %v777 = vmul.f32 %v762, 1.442695
  %v778 = vpow.pop %v777
  %v779 = vld [vmem:[#allocation3] sm:$0xff]
  %v780 = vld [vmem:[#allocation3 + $0x8] sm:$0xff]
  %v781 = vld [vmem:[#allocation3 + $0x10] sm:$0xff]
  %v782 = vld [vmem:[#allocation3 + $0x18] sm:$0xff]
  %v783 = vld [vmem:[#allocation3 + $0x20] sm:$0xff]
  %v784 = vld [vmem:[#allocation3 + $0x28] sm:$0xff]
  %v785 = vld [vmem:[#allocation3 + $0x30] sm:$0xff]
  %v786 = vld [vmem:[#allocation3 + $0x38] sm:$0xff]
  %v787 = vmul.f32 %v700, %v779
  %v788 = vmul.f32 %v702, %v780
  %v789 = vmul.f32 %v704, %v781
  %v790 = vmul.f32 %v706, %v782
  %v791 = vmul.f32 %v708, %v783
  %v792 = vmul.f32 %v710, %v784
  %v793 = vmul.f32 %v712, %v785
  %v794 = vmul.f32 %v714, %v786
  %v795 = vsel %vm658, %v764, 0.0
  %796 = vadd.xlane.f32.xlu0 %v795
  %v797 = vpop.xlane.xlu0 %796
  %v798 = vsel %vm658, %v766, 0.0
  %799 = vadd.xlane.f32.xlu0 %v798
  %v800 = vpop.xlane.xlu0 %799
  %v801 = vsel %vm658, %v768, 0.0
  %802 = vadd.xlane.f32.xlu0 %v801
  %v803 = vpop.xlane.xlu0 %802
  %v804 = vsel %vm658, %v770, 0.0
  %805 = vadd.xlane.f32.xlu0 %v804
  %v806 = vpop.xlane.xlu0 %805
  %v807 = vsel %vm658, %v772, 0.0
  %808 = vadd.xlane.f32.xlu0 %v807
  %v809 = vpop.xlane.xlu0 %808
  %v810 = vsel %vm658, %v774, 0.0
  %811 = vadd.xlane.f32.xlu0 %v810
  %v812 = vpop.xlane.xlu0 %811
  %v813 = vsel %vm658, %v776, 0.0
  %814 = vadd.xlane.f32.xlu0 %v813
  %v815 = vpop.xlane.xlu0 %814
  %v816 = vsel %vm658, %v778, 0.0
  %817 = vadd.xlane.f32.xlu0 %v816
  %v818 = vpop.xlane.xlu0 %817
  %v819 = vadd.f32 %v787, %v797
  %v820 = vadd.f32 %v788, %v800
  %v821 = vadd.f32 %v789, %v803
  %v822 = vadd.f32 %v790, %v806
  %v823 = vadd.f32 %v791, %v809
  %v824 = vadd.f32 %v792, %v812
  %v825 = vadd.f32 %v793, %v815
  %v826 = vadd.f32 %v794, %v818
  %vm827 = vcmask 7168
  %828 = vst.msk [vmem:[#allocation3] sm:$0xff] %vm827, %v819
  %829 = vst.msk [vmem:[#allocation3 + $0x8] sm:$0xff] %vm827, %v820
  %830 = vst.msk [vmem:[#allocation3 + $0x10] sm:$0xff] %vm827, %v821
  %831 = vst.msk [vmem:[#allocation3 + $0x18] sm:$0xff] %vm827, %v822
  %832 = vst.msk [vmem:[#allocation3 + $0x20] sm:$0xff] %vm827, %v823
  %833 = vst.msk [vmem:[#allocation3 + $0x28] sm:$0xff] %vm827, %v824
  %834 = vst.msk [vmem:[#allocation3 + $0x30] sm:$0xff] %vm827, %v825
  %835 = vst.msk [vmem:[#allocation3 + $0x38] sm:$0xff] %vm827, %v826
  %v836 = vld [vmem:[#allocation4] sm:$0xff]
  %v837 = vld [vmem:[#allocation4 + $0x8] sm:$0xff]
  %v838 = vld [vmem:[#allocation4 + $0x10] sm:$0xff]
  %v839 = vld [vmem:[#allocation4 + $0x18] sm:$0xff]
  %v840 = vld [vmem:[#allocation4 + $0x20] sm:$0xff]
  %v841 = vld [vmem:[#allocation4 + $0x28] sm:$0xff]
  %v842 = vld [vmem:[#allocation4 + $0x30] sm:$0xff]
  %v843 = vld [vmem:[#allocation4 + $0x38] sm:$0xff]
  %845 = vset.pattern.permute.xlu0 0
  %846 = vperm.xlu0 %845, %v700
  %v847 = vpop.permute.xlu0 %846
  %850 = vset.pattern.permute.xlu0 0
  %851 = vperm.xlu0 %850, %v702
  %v852 = vpop.permute.xlu0 %851
  %855 = vset.pattern.permute.xlu0 0
  %856 = vperm.xlu0 %855, %v704
  %v857 = vpop.permute.xlu0 %856
  %860 = vset.pattern.permute.xlu0 0
  %861 = vperm.xlu0 %860, %v706
  %v862 = vpop.permute.xlu0 %861
  %865 = vset.pattern.permute.xlu0 0
  %866 = vperm.xlu0 %865, %v708
  %v867 = vpop.permute.xlu0 %866
  %870 = vset.pattern.permute.xlu0 0
  %871 = vperm.xlu0 %870, %v710
  %v872 = vpop.permute.xlu0 %871
  %875 = vset.pattern.permute.xlu0 0
  %876 = vperm.xlu0 %875, %v712
  %v877 = vpop.permute.xlu0 %876
  %880 = vset.pattern.permute.xlu0 0
  %881 = vperm.xlu0 %880, %v714
  %v882 = vpop.permute.xlu0 %881
  %v884 = vmul.f32 %v847, %v836
  %v885 = vmul.f32 %v852, %v837
  %v886 = vmul.f32 %v857, %v838
  %v887 = vmul.f32 %v862, %v839
  %v888 = vmul.f32 %v867, %v840
  %v889 = vmul.f32 %v872, %v841
  %v890 = vmul.f32 %v877, %v842
  %v891 = vmul.f32 %v882, %v843
  %v892 = vld [vmem:[%s2] sm:$0xff]
  %v893 = vld [vmem:[%s2 + $0x8] sm:$0xff]
  %v894 = vld [vmem:[%s2 + $0x10] sm:$0xff]
  %v895 = vld [vmem:[%s2 + $0x18] sm:$0xff]
  %v896 = vld [vmem:[%s2 + $0x20] sm:$0xff]
  %v897 = vld [vmem:[%s2 + $0x28] sm:$0xff]
  %v898 = vld [vmem:[%s2 + $0x30] sm:$0xff]
  %v899 = vld [vmem:[%s2 + $0x38] sm:$0xff]
  %v901 = vsel %vm658, %v764, 0
  %903 = vmatprep.subr.mxu0 0.0
  %904 = vmatpush1.msra.mxu0 %v892
  %905 = vmatprep.subr.mxu0 0.0
  %906 = vmatpush1.msra.mxu0 0.0
  %907 = vmatprep.subr.mxu0 0.0
  %908 = vmatpush1.msra.mxu0 0.0
  %909 = vmatprep.subr.mxu0 0.0
  %910 = vmatpush1.msra.mxu0 0.0
  %911 = vmatprep.subr.mxu0 0.0
  %912 = vmatpush1.msra.mxu0 0.0
  %913 = vmatprep.subr.mxu0 0.0
  %914 = vmatpush1.msra.mxu0 0.0
  %915 = vmatprep.subr.mxu0 0.0
  %916 = vmatpush1.msra.mxu0 0.0
  %917 = vmatprep.subr.mxu0 0.0
  %918 = vmatpush1.msra.mxu0 0.0
  %919 = vmatprep.subr.mxu0 0.0
  %920 = vmatpush1.msra.mxu0 0.0
  %921 = vmatprep.subr.mxu0 0.0
  %922 = vmatpush1.msra.mxu0 0.0
  %923 = vmatprep.subr.mxu0 0.0
  %924 = vmatpush1.msra.mxu0 0.0
  %925 = vmatprep.subr.mxu0 0.0
  %926 = vmatpush1.msra.mxu0 0.0
  %927 = vmatprep.subr.mxu0 0.0
  %928 = vmatpush1.msra.mxu0 0.0
  %929 = vmatprep.subr.mxu0 0.0
  %930 = vmatpush1.msra.mxu0 0.0
  %931 = vmatprep.subr.mxu0 0.0
  %932 = vmatpush1.msra.mxu0 0.0
  %933 = vmatprep.subr.mxu0 0.0
  %934 = vmatpush1.msra.mxu0 0.0
  %935 = vmatprep.subr.mxu0 0.0
  %936 = vmatpush1.msra.mxu0 0.0
  %937 = vmatprep.subr.mxu0 0.0
  %938 = vmatpush1.msra.mxu0 0.0
  %939 = vmatprep.subr.mxu0 0.0
  %940 = vmatpush1.msra.mxu0 0.0
  %941 = vmatprep.subr.mxu0 0.0
  %942 = vmatpush1.msra.mxu0 0.0
  %943 = vmatprep.subr.mxu0 0.0
  %944 = vmatpush1.msra.mxu0 0.0
  %945 = vmatprep.subr.mxu0 0.0
  %946 = vmatpush1.msra.mxu0 0.0
  %947 = vmatprep.subr.mxu0 0.0
  %948 = vmatpush1.msra.mxu0 0.0
  %949 = vmatprep.subr.mxu0 0.0
  %950 = vmatpush1.msra.mxu0 0.0
  %951 = vmatprep.subr.mxu0 0.0
  %952 = vmatpush1.msra.mxu0 0.0
  %953 = vmatprep.subr.mxu0 0.0
  %954 = vmatpush1.msra.mxu0 0.0
  %955 = vmatprep.subr.mxu0 0.0
  %956 = vmatpush1.msra.mxu0 0.0
  %957 = vmatprep.subr.mxu0 0.0
  %958 = vmatpush1.msra.mxu0 0.0
  %959 = vmatprep.subr.mxu0 0.0
  %960 = vmatpush1.msra.mxu0 0.0
  %961 = vmatprep.subr.mxu0 0.0
  %962 = vmatpush1.msra.mxu0 0.0
  %963 = vmatprep.subr.mxu0 0.0
  %964 = vmatpush1.msra.mxu0 0.0
  %965 = vmatprep.subr.mxu0 0.0
  %966 = vmatpush1.msra.mxu0 0.0
  %967 = vmatprep.mubr.f32.mxu0 0.0
  %968 = vmatmul.mubr.f32.gmra.mrb[0].mxu0 %v901
  %v969 = vpop.f32.mrb[0].mxu0
  %v970 = vadd.f32 0.0, %v969
  %v971 = vpop.f32.mrb[0].mxu0
  %972 = vdwg.mxu0
  %v974 = vsel %vm658, %v766, 0
  %976 = vmatprep.subr.mxu0 0.0
  %977 = vmatpush1.msra.mxu0 %v893
  %978 = vmatprep.subr.mxu0 0.0
  %979 = vmatpush1.msra.mxu0 0.0
  %980 = vmatprep.subr.mxu0 0.0
  %981 = vmatpush1.msra.mxu0 0.0
  %982 = vmatprep.subr.mxu0 0.0
  %983 = vmatpush1.msra.mxu0 0.0
  %984 = vmatprep.subr.mxu0 0.0
  %985 = vmatpush1.msra.mxu0 0.0
  %986 = vmatprep.subr.mxu0 0.0
  %987 = vmatpush1.msra.mxu0 0.0
  %988 = vmatprep.subr.mxu0 0.0
  %989 = vmatpush1.msra.mxu0 0.0
  %990 = vmatprep.subr.mxu0 0.0
  %991 = vmatpush1.msra.mxu0 0.0
  %992 = vmatprep.subr.mxu0 0.0
  %993 = vmatpush1.msra.mxu0 0.0
  %994 = vmatprep.subr.mxu0 0.0
  %995 = vmatpush1.msra.mxu0 0.0
  %996 = vmatprep.subr.mxu0 0.0
  %997 = vmatpush1.msra.mxu0 0.0
  %998 = vmatprep.subr.mxu0 0.0
  %999 = vmatpush1.msra.mxu0 0.0
  %1000 = vmatprep.subr.mxu0 0.0
  %1001 = vmatpush1.msra.mxu0 0.0
  %1002 = vmatprep.subr.mxu0 0.0
  %1003 = vmatpush1.msra.mxu0 0.0
  %1004 = vmatprep.subr.mxu0 0.0
  %1005 = vmatpush1.msra.mxu0 0.0
  %1006 = vmatprep.subr.mxu0 0.0
  %1007 = vmatpush1.msra.mxu0 0.0
  %1008 = vmatprep.subr.mxu0 0.0
  %1009 = vmatpush1.msra.mxu0 0.0
  %1010 = vmatprep.subr.mxu0 0.0
  %1011 = vmatpush1.msra.mxu0 0.0
  %1012 = vmatprep.subr.mxu0 0.0
  %1013 = vmatpush1.msra.mxu0 0.0
  %1014 = vmatprep.subr.mxu0 0.0
  %1015 = vmatpush1.msra.mxu0 0.0
  %1016 = vmatprep.subr.mxu0 0.0
  %1017 = vmatpush1.msra.mxu0 0.0
  %1018 = vmatprep.subr.mxu0 0.0
  %1019 = vmatpush1.msra.mxu0 0.0
  %1020 = vmatprep.subr.mxu0 0.0
  %1021 = vmatpush1.msra.mxu0 0.0
  %1022 = vmatprep.subr.mxu0 0.0
  %1023 = vmatpush1.msra.mxu0 0.0
  %1024 = vmatprep.subr.mxu0 0.0
  %1025 = vmatpush1.msra.mxu0 0.0
  %1026 = vmatprep.subr.mxu0 0.0
  %1027 = vmatpush1.msra.mxu0 0.0
  %1028 = vmatprep.subr.mxu0 0.0
  %1029 = vmatpush1.msra.mxu0 0.0
  %1030 = vmatprep.subr.mxu0 0.0
  %1031 = vmatpush1.msra.mxu0 0.0
  %1032 = vmatprep.subr.mxu0 0.0
  %1033 = vmatpush1.msra.mxu0 0.0
  %1034 = vmatprep.subr.mxu0 0.0
  %1035 = vmatpush1.msra.mxu0 0.0
  %1036 = vmatprep.subr.mxu0 0.0
  %1037 = vmatpush1.msra.mxu0 0.0
  %1038 = vmatprep.subr.mxu0 0.0
  %1039 = vmatpush1.msra.mxu0 0.0
  %1040 = vmatprep.mubr.f32.mxu0 0.0
  %1041 = vmatmul.mubr.f32.gmra.mrb[0].mxu0 %v974
  %v1042 = vpop.f32.mrb[0].mxu0
  %v1043 = vadd.f32 0.0, %v1042
  %v1044 = vpop.f32.mrb[0].mxu0
  %1045 = vdwg.mxu0
  %v1047 = vsel %vm658, %v768, 0
  %1049 = vmatprep.subr.mxu0 0.0
  %1050 = vmatpush1.msra.mxu0 %v894
  %1051 = vmatprep.subr.mxu0 0.0
  %1052 = vmatpush1.msra.mxu0 0.0
  %1053 = vmatprep.subr.mxu0 0.0
  %1054 = vmatpush1.msra.mxu0 0.0
  %1055 = vmatprep.subr.mxu0 0.0
  %1056 = vmatpush1.msra.mxu0 0.0
  %1057 = vmatprep.subr.mxu0 0.0
  %1058 = vmatpush1.msra.mxu0 0.0
  %1059 = vmatprep.subr.mxu0 0.0
  %1060 = vmatpush1.msra.mxu0 0.0
  %1061 = vmatprep.subr.mxu0 0.0
  %1062 = vmatpush1.msra.mxu0 0.0
  %1063 = vmatprep.subr.mxu0 0.0
  %1064 = vmatpush1.msra.mxu0 0.0
  %1065 = vmatprep.subr.mxu0 0.0
  %1066 = vmatpush1.msra.mxu0 0.0
  %1067 = vmatprep.subr.mxu0 0.0
  %1068 = vmatpush1.msra.mxu0 0.0
  %1069 = vmatprep.subr.mxu0 0.0
  %1070 = vmatpush1.msra.mxu0 0.0
  %1071 = vmatprep.subr.mxu0 0.0
  %1072 = vmatpush1.msra.mxu0 0.0
  %1073 = vmatprep.subr.mxu0 0.0
  %1074 = vmatpush1.msra.mxu0 0.0
  %1075 = vmatprep.subr.mxu0 0.0
  %1076 = vmatpush1.msra.mxu0 0.0
  %1077 = vmatprep.subr.mxu0 0.0
  %1078 = vmatpush1.msra.mxu0 0.0
  %1079 = vmatprep.subr.mxu0 0.0
  %1080 = vmatpush1.msra.mxu0 0.0
  %1081 = vmatprep.subr.mxu0 0.0
  %1082 = vmatpush1.msra.mxu0 0.0
  %1083 = vmatprep.subr.mxu0 0.0
  %1084 = vmatpush1.msra.mxu0 0.0
  %1085 = vmatprep.subr.mxu0 0.0
  %1086 = vmatpush1.msra.mxu0 0.0
  %1087 = vmatprep.subr.mxu0 0.0
  %1088 = vmatpush1.msra.mxu0 0.0
  %1089 = vmatprep.subr.mxu0 0.0
  %1090 = vmatpush1.msra.mxu0 0.0
  %1091 = vmatprep.subr.mxu0 0.0
  %1092 = vmatpush1.msra.mxu0 0.0
  %1093 = vmatprep.subr.mxu0 0.0
  %1094 = vmatpush1.msra.mxu0 0.0
  %1095 = vmatprep.subr.mxu0 0.0
  %1096 = vmatpush1.msra.mxu0 0.0
  %1097 = vmatprep.subr.mxu0 0.0
  %1098 = vmatpush1.msra.mxu0 0.0
  %1099 = vmatprep.subr.mxu0 0.0
  %1100 = vmatpush1.msra.mxu0 0.0
  %1101 = vmatprep.subr.mxu0 0.0
  %1102 = vmatpush1.msra.mxu0 0.0
  %1103 = vmatprep.subr.mxu0 0.0
  %1104 = vmatpush1.msra.mxu0 0.0
  %1105 = vmatprep.subr.mxu0 0.0
  %1106 = vmatpush1.msra.mxu0 0.0
  %1107 = vmatprep.subr.mxu0 0.0
  %1108 = vmatpush1.msra.mxu0 0.0
  %1109 = vmatprep.subr.mxu0 0.0
  %1110 = vmatpush1.msra.mxu0 0.0
  %1111 = vmatprep.subr.mxu0 0.0
  %1112 = vmatpush1.msra.mxu0 0.0
  %1113 = vmatprep.mubr.f32.mxu0 0.0
  %1114 = vmatmul.mubr.f32.gmra.mrb[0].mxu0 %v1047
  %v1115 = vpop.f32.mrb[0].mxu0
  %v1116 = vadd.f32 0.0, %v1115
  %v1117 = vpop.f32.mrb[0].mxu0
  %1118 = vdwg.mxu0
  %v1120 = vsel %vm658, %v770, 0
  %1122 = vmatprep.subr.mxu0 0.0
  %1123 = vmatpush1.msra.mxu0 %v895
  %1124 = vmatprep.subr.mxu0 0.0
  %1125 = vmatpush1.msra.mxu0 0.0
  %1126 = vmatprep.subr.mxu0 0.0
  %1127 = vmatpush1.msra.mxu0 0.0
  %1128 = vmatprep.subr.mxu0 0.0
  %1129 = vmatpush1.msra.mxu0 0.0
  %1130 = vmatprep.subr.mxu0 0.0
  %1131 = vmatpush1.msra.mxu0 0.0
  %1132 = vmatprep.subr.mxu0 0.0
  %1133 = vmatpush1.msra.mxu0 0.0
  %1134 = vmatprep.subr.mxu0 0.0
  %1135 = vmatpush1.msra.mxu0 0.0
  %1136 = vmatprep.subr.mxu0 0.0
  %1137 = vmatpush1.msra.mxu0 0.0
  %1138 = vmatprep.subr.mxu0 0.0
  %1139 = vmatpush1.msra.mxu0 0.0
  %1140 = vmatprep.subr.mxu0 0.0
  %1141 = vmatpush1.msra.mxu0 0.0
  %1142 = vmatprep.subr.mxu0 0.0
  %1143 = vmatpush1.msra.mxu0 0.0
  %1144 = vmatprep.subr.mxu0 0.0
  %1145 = vmatpush1.msra.mxu0 0.0
  %1146 = vmatprep.subr.mxu0 0.0
  %1147 = vmatpush1.msra.mxu0 0.0
  %1148 = vmatprep.subr.mxu0 0.0
  %1149 = vmatpush1.msra.mxu0 0.0
  %1150 = vmatprep.subr.mxu0 0.0
  %1151 = vmatpush1.msra.mxu0 0.0
  %1152 = vmatprep.subr.mxu0 0.0
  %1153 = vmatpush1.msra.mxu0 0.0
  %1154 = vmatprep.subr.mxu0 0.0
  %1155 = vmatpush1.msra.mxu0 0.0
  %1156 = vmatprep.subr.mxu0 0.0
  %1157 = vmatpush1.msra.mxu0 0.0
  %1158 = vmatprep.subr.mxu0 0.0
  %1159 = vmatpush1.msra.mxu0 0.0
  %1160 = vmatprep.subr.mxu0 0.0
  %1161 = vmatpush1.msra.mxu0 0.0
  %1162 = vmatprep.subr.mxu0 0.0
  %1163 = vmatpush1.msra.mxu0 0.0
  %1164 = vmatprep.subr.mxu0 0.0
  %1165 = vmatpush1.msra.mxu0 0.0
  %1166 = vmatprep.subr.mxu0 0.0
  %1167 = vmatpush1.msra.mxu0 0.0
  %1168 = vmatprep.subr.mxu0 0.0
  %1169 = vmatpush1.msra.mxu0 0.0
  %1170 = vmatprep.subr.mxu0 0.0
  %1171 = vmatpush1.msra.mxu0 0.0
  %1172 = vmatprep.subr.mxu0 0.0
  %1173 = vmatpush1.msra.mxu0 0.0
  %1174 = vmatprep.subr.mxu0 0.0
  %1175 = vmatpush1.msra.mxu0 0.0
  %1176 = vmatprep.subr.mxu0 0.0
  %1177 = vmatpush1.msra.mxu0 0.0
  %1178 = vmatprep.subr.mxu0 0.0
  %1179 = vmatpush1.msra.mxu0 0.0
  %1180 = vmatprep.subr.mxu0 0.0
  %1181 = vmatpush1.msra.mxu0 0.0
  %1182 = vmatprep.subr.mxu0 0.0
  %1183 = vmatpush1.msra.mxu0 0.0
  %1184 = vmatprep.subr.mxu0 0.0
  %1185 = vmatpush1.msra.mxu0 0.0
  %1186 = vmatprep.mubr.f32.mxu0 0.0
  %1187 = vmatmul.mubr.f32.gmra.mrb[0].mxu0 %v1120
  %v1188 = vpop.f32.mrb[0].mxu0
  %v1189 = vadd.f32 0.0, %v1188
  %v1190 = vpop.f32.mrb[0].mxu0
  %1191 = vdwg.mxu0
  %v1193 = vsel %vm658, %v772, 0
  %1195 = vmatprep.subr.mxu0 0.0
  %1196 = vmatpush1.msra.mxu0 %v896
  %1197 = vmatprep.subr.mxu0 0.0
  %1198 = vmatpush1.msra.mxu0 0.0
  %1199 = vmatprep.subr.mxu0 0.0
  %1200 = vmatpush1.msra.mxu0 0.0
  %1201 = vmatprep.subr.mxu0 0.0
  %1202 = vmatpush1.msra.mxu0 0.0
  %1203 = vmatprep.subr.mxu0 0.0
  %1204 = vmatpush1.msra.mxu0 0.0
  %1205 = vmatprep.subr.mxu0 0.0
  %1206 = vmatpush1.msra.mxu0 0.0
  %1207 = vmatprep.subr.mxu0 0.0
  %1208 = vmatpush1.msra.mxu0 0.0
  %1209 = vmatprep.subr.mxu0 0.0
  %1210 = vmatpush1.msra.mxu0 0.0
  %1211 = vmatprep.subr.mxu0 0.0
  %1212 = vmatpush1.msra.mxu0 0.0
  %1213 = vmatprep.subr.mxu0 0.0
  %1214 = vmatpush1.msra.mxu0 0.0
  %1215 = vmatprep.subr.mxu0 0.0
  %1216 = vmatpush1.msra.mxu0 0.0
  %1217 = vmatprep.subr.mxu0 0.0
  %1218 = vmatpush1.msra.mxu0 0.0
  %1219 = vmatprep.subr.mxu0 0.0
  %1220 = vmatpush1.msra.mxu0 0.0
  %1221 = vmatprep.subr.mxu0 0.0
  %1222 = vmatpush1.msra.mxu0 0.0
  %1223 = vmatprep.subr.mxu0 0.0
  %1224 = vmatpush1.msra.mxu0 0.0
  %1225 = vmatprep.subr.mxu0 0.0
  %1226 = vmatpush1.msra.mxu0 0.0
  %1227 = vmatprep.subr.mxu0 0.0
  %1228 = vmatpush1.msra.mxu0 0.0
  %1229 = vmatprep.subr.mxu0 0.0
  %1230 = vmatpush1.msra.mxu0 0.0
  %1231 = vmatprep.subr.mxu0 0.0
  %1232 = vmatpush1.msra.mxu0 0.0
  %1233 = vmatprep.subr.mxu0 0.0
  %1234 = vmatpush1.msra.mxu0 0.0
  %1235 = vmatprep.subr.mxu0 0.0
  %1236 = vmatpush1.msra.mxu0 0.0
  %1237 = vmatprep.subr.mxu0 0.0
  %1238 = vmatpush1.msra.mxu0 0.0
  %1239 = vmatprep.subr.mxu0 0.0
  %1240 = vmatpush1.msra.mxu0 0.0
  %1241 = vmatprep.subr.mxu0 0.0
  %1242 = vmatpush1.msra.mxu0 0.0
  %1243 = vmatprep.subr.mxu0 0.0
  %1244 = vmatpush1.msra.mxu0 0.0
  %1245 = vmatprep.subr.mxu0 0.0
  %1246 = vmatpush1.msra.mxu0 0.0
  %1247 = vmatprep.subr.mxu0 0.0
  %1248 = vmatpush1.msra.mxu0 0.0
  %1249 = vmatprep.subr.mxu0 0.0
  %1250 = vmatpush1.msra.mxu0 0.0
  %1251 = vmatprep.subr.mxu0 0.0
  %1252 = vmatpush1.msra.mxu0 0.0
  %1253 = vmatprep.subr.mxu0 0.0
  %1254 = vmatpush1.msra.mxu0 0.0
  %1255 = vmatprep.subr.mxu0 0.0
  %1256 = vmatpush1.msra.mxu0 0.0
  %1257 = vmatprep.subr.mxu0 0.0
  %1258 = vmatpush1.msra.mxu0 0.0
  %1259 = vmatprep.mubr.f32.mxu0 0.0
  %1260 = vmatmul.mubr.f32.gmra.mrb[0].mxu0 %v1193
  %v1261 = vpop.f32.mrb[0].mxu0
  %v1262 = vadd.f32 0.0, %v1261
  %v1263 = vpop.f32.mrb[0].mxu0
  %1264 = vdwg.mxu0
  %v1266 = vsel %vm658, %v774, 0
  %1268 = vmatprep.subr.mxu0 0.0
  %1269 = vmatpush1.msra.mxu0 %v897
  %1270 = vmatprep.subr.mxu0 0.0
  %1271 = vmatpush1.msra.mxu0 0.0
  %1272 = vmatprep.subr.mxu0 0.0
  %1273 = vmatpush1.msra.mxu0 0.0
  %1274 = vmatprep.subr.mxu0 0.0
  %1275 = vmatpush1.msra.mxu0 0.0
  %1276 = vmatprep.subr.mxu0 0.0
  %1277 = vmatpush1.msra.mxu0 0.0
  %1278 = vmatprep.subr.mxu0 0.0
  %1279 = vmatpush1.msra.mxu0 0.0
  %1280 = vmatprep.subr.mxu0 0.0
  %1281 = vmatpush1.msra.mxu0 0.0
  %1282 = vmatprep.subr.mxu0 0.0
  %1283 = vmatpush1.msra.mxu0 0.0
  %1284 = vmatprep.subr.mxu0 0.0
  %1285 = vmatpush1.msra.mxu0 0.0
  %1286 = vmatprep.subr.mxu0 0.0
  %1287 = vmatpush1.msra.mxu0 0.0
  %1288 = vmatprep.subr.mxu0 0.0
  %1289 = vmatpush1.msra.mxu0 0.0
  %1290 = vmatprep.subr.mxu0 0.0
  %1291 = vmatpush1.msra.mxu0 0.0
  %1292 = vmatprep.subr.mxu0 0.0
  %1293 = vmatpush1.msra.mxu0 0.0
  %1294 = vmatprep.subr.mxu0 0.0
  %1295 = vmatpush1.msra.mxu0 0.0
  %1296 = vmatprep.subr.mxu0 0.0
  %1297 = vmatpush1.msra.mxu0 0.0
  %1298 = vmatprep.subr.mxu0 0.0
  %1299 = vmatpush1.msra.mxu0 0.0
  %1300 = vmatprep.subr.mxu0 0.0
  %1301 = vmatpush1.msra.mxu0 0.0
  %1302 = vmatprep.subr.mxu0 0.0
  %1303 = vmatpush1.msra.mxu0 0.0
  %1304 = vmatprep.subr.mxu0 0.0
  %1305 = vmatpush1.msra.mxu0 0.0
  %1306 = vmatprep.subr.mxu0 0.0
  %1307 = vmatpush1.msra.mxu0 0.0
  %1308 = vmatprep.subr.mxu0 0.0
  %1309 = vmatpush1.msra.mxu0 0.0
  %1310 = vmatprep.subr.mxu0 0.0
  %1311 = vmatpush1.msra.mxu0 0.0
  %1312 = vmatprep.subr.mxu0 0.0
  %1313 = vmatpush1.msra.mxu0 0.0
  %1314 = vmatprep.subr.mxu0 0.0
  %1315 = vmatpush1.msra.mxu0 0.0
  %1316 = vmatprep.subr.mxu0 0.0
  %1317 = vmatpush1.msra.mxu0 0.0
  %1318 = vmatprep.subr.mxu0 0.0
  %1319 = vmatpush1.msra.mxu0 0.0
  %1320 = vmatprep.subr.mxu0 0.0
  %1321 = vmatpush1.msra.mxu0 0.0
  %1322 = vmatprep.subr.mxu0 0.0
  %1323 = vmatpush1.msra.mxu0 0.0
  %1324 = vmatprep.subr.mxu0 0.0
  %1325 = vmatpush1.msra.mxu0 0.0
  %1326 = vmatprep.subr.mxu0 0.0
  %1327 = vmatpush1.msra.mxu0 0.0
  %1328 = vmatprep.subr.mxu0 0.0
  %1329 = vmatpush1.msra.mxu0 0.0
  %1330 = vmatprep.subr.mxu0 0.0
  %1331 = vmatpush1.msra.mxu0 0.0
  %1332 = vmatprep.mubr.f32.mxu0 0.0
  %1333 = vmatmul.mubr.f32.gmra.mrb[0].mxu0 %v1266
  %v1334 = vpop.f32.mrb[0].mxu0
  %v1335 = vadd.f32 0.0, %v1334
  %v1336 = vpop.f32.mrb[0].mxu0
  %1337 = vdwg.mxu0
  %v1339 = vsel %vm658, %v776, 0
  %1341 = vmatprep.subr.mxu0 0.0
  %1342 = vmatpush1.msra.mxu0 %v898
  %1343 = vmatprep.subr.mxu0 0.0
  %1344 = vmatpush1.msra.mxu0 0.0
  %1345 = vmatprep.subr.mxu0 0.0
  %1346 = vmatpush1.msra.mxu0 0.0
  %1347 = vmatprep.subr.mxu0 0.0
  %1348 = vmatpush1.msra.mxu0 0.0
  %1349 = vmatprep.subr.mxu0 0.0
  %1350 = vmatpush1.msra.mxu0 0.0
  %1351 = vmatprep.subr.mxu0 0.0
  %1352 = vmatpush1.msra.mxu0 0.0
  %1353 = vmatprep.subr.mxu0 0.0
  %1354 = vmatpush1.msra.mxu0 0.0
  %1355 = vmatprep.subr.mxu0 0.0
  %1356 = vmatpush1.msra.mxu0 0.0
  %1357 = vmatprep.subr.mxu0 0.0
  %1358 = vmatpush1.msra.mxu0 0.0
  %1359 = vmatprep.subr.mxu0 0.0
  %1360 = vmatpush1.msra.mxu0 0.0
  %1361 = vmatprep.subr.mxu0 0.0
  %1362 = vmatpush1.msra.mxu0 0.0
  %1363 = vmatprep.subr.mxu0 0.0
  %1364 = vmatpush1.msra.mxu0 0.0
  %1365 = vmatprep.subr.mxu0 0.0
  %1366 = vmatpush1.msra.mxu0 0.0
  %1367 = vmatprep.subr.mxu0 0.0
  %1368 = vmatpush1.msra.mxu0 0.0
  %1369 = vmatprep.subr.mxu0 0.0
  %1370 = vmatpush1.msra.mxu0 0.0
  %1371 = vmatprep.subr.mxu0 0.0
  %1372 = vmatpush1.msra.mxu0 0.0
  %1373 = vmatprep.subr.mxu0 0.0
  %1374 = vmatpush1.msra.mxu0 0.0
  %1375 = vmatprep.subr.mxu0 0.0
  %1376 = vmatpush1.msra.mxu0 0.0
  %1377 = vmatprep.subr.mxu0 0.0
  %1378 = vmatpush1.msra.mxu0 0.0
  %1379 = vmatprep.subr.mxu0 0.0
  %1380 = vmatpush1.msra.mxu0 0.0
  %1381 = vmatprep.subr.mxu0 0.0
  %1382 = vmatpush1.msra.mxu0 0.0
  %1383 = vmatprep.subr.mxu0 0.0
  %1384 = vmatpush1.msra.mxu0 0.0
  %1385 = vmatprep.subr.mxu0 0.0
  %1386 = vmatpush1.msra.mxu0 0.0
  %1387 = vmatprep.subr.mxu0 0.0
  %1388 = vmatpush1.msra.mxu0 0.0
  %1389 = vmatprep.subr.mxu0 0.0
  %1390 = vmatpush1.msra.mxu0 0.0
  %1391 = vmatprep.subr.mxu0 0.0
  %1392 = vmatpush1.msra.mxu0 0.0
  %1393 = vmatprep.subr.mxu0 0.0
  %1394 = vmatpush1.msra.mxu0 0.0
  %1395 = vmatprep.subr.mxu0 0.0
  %1396 = vmatpush1.msra.mxu0 0.0
  %1397 = vmatprep.subr.mxu0 0.0
  %1398 = vmatpush1.msra.mxu0 0.0
  %1399 = vmatprep.subr.mxu0 0.0
  %1400 = vmatpush1.msra.mxu0 0.0
  %1401 = vmatprep.subr.mxu0 0.0
  %1402 = vmatpush1.msra.mxu0 0.0
  %1403 = vmatprep.subr.mxu0 0.0
  %1404 = vmatpush1.msra.mxu0 0.0
  %1405 = vmatprep.mubr.f32.mxu0 0.0
  %1406 = vmatmul.mubr.f32.gmra.mrb[0].mxu0 %v1339
  %v1407 = vpop.f32.mrb[0].mxu0
  %v1408 = vadd.f32 0.0, %v1407
  %v1409 = vpop.f32.mrb[0].mxu0
  %1410 = vdwg.mxu0
  %v1412 = vsel %vm658, %v778, 0
  %1414 = vmatprep.subr.mxu0 0.0
  %1415 = vmatpush1.msra.mxu0 %v899
  %1416 = vmatprep.subr.mxu0 0.0
  %1417 = vmatpush1.msra.mxu0 0.0
  %1418 = vmatprep.subr.mxu0 0.0
  %1419 = vmatpush1.msra.mxu0 0.0
  %1420 = vmatprep.subr.mxu0 0.0
  %1421 = vmatpush1.msra.mxu0 0.0
  %1422 = vmatprep.subr.mxu0 0.0
  %1423 = vmatpush1.msra.mxu0 0.0
  %1424 = vmatprep.subr.mxu0 0.0
  %1425 = vmatpush1.msra.mxu0 0.0
  %1426 = vmatprep.subr.mxu0 0.0
  %1427 = vmatpush1.msra.mxu0 0.0
  %1428 = vmatprep.subr.mxu0 0.0
  %1429 = vmatpush1.msra.mxu0 0.0
  %1430 = vmatprep.subr.mxu0 0.0
  %1431 = vmatpush1.msra.mxu0 0.0
  %1432 = vmatprep.subr.mxu0 0.0
  %1433 = vmatpush1.msra.mxu0 0.0
  %1434 = vmatprep.subr.mxu0 0.0
  %1435 = vmatpush1.msra.mxu0 0.0
  %1436 = vmatprep.subr.mxu0 0.0
  %1437 = vmatpush1.msra.mxu0 0.0
  %1438 = vmatprep.subr.mxu0 0.0
  %1439 = vmatpush1.msra.mxu0 0.0
  %1440 = vmatprep.subr.mxu0 0.0
  %1441 = vmatpush1.msra.mxu0 0.0
  %1442 = vmatprep.subr.mxu0 0.0
  %1443 = vmatpush1.msra.mxu0 0.0
  %1444 = vmatprep.subr.mxu0 0.0
  %1445 = vmatpush1.msra.mxu0 0.0
  %1446 = vmatprep.subr.mxu0 0.0
  %1447 = vmatpush1.msra.mxu0 0.0
  %1448 = vmatprep.subr.mxu0 0.0
  %1449 = vmatpush1.msra.mxu0 0.0
  %1450 = vmatprep.subr.mxu0 0.0
  %1451 = vmatpush1.msra.mxu0 0.0
  %1452 = vmatprep.subr.mxu0 0.0
  %1453 = vmatpush1.msra.mxu0 0.0
  %1454 = vmatprep.subr.mxu0 0.0
  %1455 = vmatpush1.msra.mxu0 0.0
  %1456 = vmatprep.subr.mxu0 0.0
  %1457 = vmatpush1.msra.mxu0 0.0
  %1458 = vmatprep.subr.mxu0 0.0
  %1459 = vmatpush1.msra.mxu0 0.0
  %1460 = vmatprep.subr.mxu0 0.0
  %1461 = vmatpush1.msra.mxu0 0.0
  %1462 = vmatprep.subr.mxu0 0.0
  %1463 = vmatpush1.msra.mxu0 0.0
  %1464 = vmatprep.subr.mxu0 0.0
  %1465 = vmatpush1.msra.mxu0 0.0
  %1466 = vmatprep.subr.mxu0 0.0
  %1467 = vmatpush1.msra.mxu0 0.0
  %1468 = vmatprep.subr.mxu0 0.0
  %1469 = vmatpush1.msra.mxu0 0.0
  %1470 = vmatprep.subr.mxu0 0.0
  %1471 = vmatpush1.msra.mxu0 0.0
  %1472 = vmatprep.subr.mxu0 0.0
  %1473 = vmatpush1.msra.mxu0 0.0
  %1474 = vmatprep.subr.mxu0 0.0
  %1475 = vmatpush1.msra.mxu0 0.0
  %1476 = vmatprep.subr.mxu0 0.0
  %1477 = vmatpush1.msra.mxu0 0.0
  %1478 = vmatprep.mubr.f32.mxu0 0.0
  %1479 = vmatmul.mubr.f32.gmra.mrb[0].mxu0 %v1412
  %v1480 = vpop.f32.mrb[0].mxu0
  %v1481 = vadd.f32 0.0, %v1480
  %v1482 = vpop.f32.mrb[0].mxu0
  %1483 = vdwg.mxu0
  %v1484 = vadd.f32 %v884, %v970
  %v1485 = vadd.f32 %v885, %v1043
  %v1486 = vadd.f32 %v886, %v1116
  %v1487 = vadd.f32 %v887, %v1189
  %v1488 = vadd.f32 %v888, %v1262
  %v1489 = vadd.f32 %v889, %v1335
  %v1490 = vadd.f32 %v890, %v1408
  %v1491 = vadd.f32 %v891, %v1481
  %1492 = vst [vmem:[#allocation4] sm:$0xff] %v1484
  %1493 = vst [vmem:[#allocation4 + $0x8] sm:$0xff] %v1485
  %1494 = vst [vmem:[#allocation4 + $0x10] sm:$0xff] %v1486
  %1495 = vst [vmem:[#allocation4 + $0x18] sm:$0xff] %v1487
  %1496 = vst [vmem:[#allocation4 + $0x20] sm:$0xff] %v1488
  %1497 = vst [vmem:[#allocation4 + $0x28] sm:$0xff] %v1489
  %1498 = vst [vmem:[#allocation4 + $0x30] sm:$0xff] %v1490
  %1499 = vst [vmem:[#allocation4 + $0x38] sm:$0xff] %v1491
  %1500 = vst.msk [vmem:[#allocation2] sm:$0xff] %vm827, %v683
  %1501 = vst.msk [vmem:[#allocation2 + $0x8] sm:$0xff] %vm827, %v684
  %1502 = vst.msk [vmem:[#allocation2 + $0x10] sm:$0xff] %vm827, %v685
  %1503 = vst.msk [vmem:[#allocation2 + $0x18] sm:$0xff] %vm827, %v686
  %1504 = vst.msk [vmem:[#allocation2 + $0x20] sm:$0xff] %vm827, %v687
  %1505 = vst.msk [vmem:[#allocation2 + $0x28] sm:$0xff] %vm827, %v688
  %1506 = vst.msk [vmem:[#allocation2 + $0x30] sm:$0xff] %vm827, %v689
  %1507 = vst.msk [vmem:[#allocation2 + $0x38] sm:$0xff] %vm827, %v690
  // Predicated region
  $region18: #{_lambda_.47} parent=0 // pred_check
    %p1508 = pneg %p14
  $region19: #{_lambda_.47} parent=0 // pred_check_branch
    %1510 = sbr.rel (%p1508) target = $region21
  $region20: #{_lambda_.47} parent=0 // pred_region
    %v1511 = vld [vmem:[#allocation4] sm:$0xff]
    %v1512 = vld [vmem:[#allocation4 + $0x8] sm:$0xff]
    %v1513 = vld [vmem:[#allocation4 + $0x10] sm:$0xff]
    %v1514 = vld [vmem:[#allocation4 + $0x18] sm:$0xff]
    %v1515 = vld [vmem:[#allocation4 + $0x20] sm:$0xff]
    %v1516 = vld [vmem:[#allocation4 + $0x28] sm:$0xff]
    %v1517 = vld [vmem:[#allocation4 + $0x30] sm:$0xff]
    %v1518 = vld [vmem:[#allocation4 + $0x38] sm:$0xff]
    %v1519 = vld [vmem:[#allocation3] sm:$0xff]
    %v1520 = vld [vmem:[#allocation3 + $0x8] sm:$0xff]
    %v1521 = vld [vmem:[#allocation3 + $0x10] sm:$0xff]
    %v1522 = vld [vmem:[#allocation3 + $0x18] sm:$0xff]
    %v1523 = vld [vmem:[#allocation3 + $0x20] sm:$0xff]
    %v1524 = vld [vmem:[#allocation3 + $0x28] sm:$0xff]
    %v1525 = vld [vmem:[#allocation3 + $0x30] sm:$0xff]
    %v1526 = vld [vmem:[#allocation3 + $0x38] sm:$0xff]
    %v1527 = vrcp.pop %v1519
    %v1528 = vrcp.pop %v1520
    %v1529 = vrcp.pop %v1521
    %v1530 = vrcp.pop %v1522
    %v1531 = vrcp.pop %v1523
    %v1532 = vrcp.pop %v1524
    %v1533 = vrcp.pop %v1525
    %v1534 = vrcp.pop %v1526
    %1536 = vset.pattern.permute.xlu0 0
    %1537 = vperm.xlu0 %1536, %v1527
    %v1538 = vpop.permute.xlu0 %1537
    %1541 = vset.pattern.permute.xlu0 0
    %1542 = vperm.xlu0 %1541, %v1528
    %v1543 = vpop.permute.xlu0 %1542
    %1546 = vset.pattern.permute.xlu0 0
    %1547 = vperm.xlu0 %1546, %v1529
    %v1548 = vpop.permute.xlu0 %1547
    %1551 = vset.pattern.permute.xlu0 0
    %1552 = vperm.xlu0 %1551, %v1530
    %v1553 = vpop.permute.xlu0 %1552
    %1556 = vset.pattern.permute.xlu0 0
    %1557 = vperm.xlu0 %1556, %v1531
    %v1558 = vpop.permute.xlu0 %1557
    %1561 = vset.pattern.permute.xlu0 0
    %1562 = vperm.xlu0 %1561, %v1532
    %v1563 = vpop.permute.xlu0 %1562
    %1566 = vset.pattern.permute.xlu0 0
    %1567 = vperm.xlu0 %1566, %v1533
    %v1568 = vpop.permute.xlu0 %1567
    %1571 = vset.pattern.permute.xlu0 0
    %1572 = vperm.xlu0 %1571, %v1534
    %v1573 = vpop.permute.xlu0 %1572
    %v1575 = vmul.f32 %v1511, %v1538
    %v1576 = vmul.f32 %v1512, %v1543
    %v1577 = vmul.f32 %v1513, %v1548
    %v1578 = vmul.f32 %v1514, %v1553
    %v1579 = vmul.f32 %v1515, %v1558
    %v1580 = vmul.f32 %v1516, %v1563
    %v1581 = vmul.f32 %v1517, %v1568
    %v1582 = vmul.f32 %v1518, %v1573
    %1583 = vst [vmem:[%s3] sm:$0xff] %v1575
    %1584 = vst [vmem:[%s3 + $0x8] sm:$0xff] %v1576
    %1585 = vst [vmem:[%s3 + $0x10] sm:$0xff] %v1577
    %1586 = vst [vmem:[%s3 + $0x18] sm:$0xff] %v1578
    %1587 = vst [vmem:[%s3 + $0x20] sm:$0xff] %v1579
    %1588 = vst [vmem:[%s3 + $0x28] sm:$0xff] %v1580
    %1589 = vst [vmem:[%s3 + $0x30] sm:$0xff] %v1581
    %1590 = vst [vmem:[%s3 + $0x38] sm:$0xff] %v1582
  $region21: #{_lambda_.47} parent=0 // pred_fallthru
    _
  // Predicated region
  $region22: #{_lambda_.47} parent=0 // pred_check
    _
  $region23: #{_lambda_.47} parent=0 // pred_check_branch
    %1592 = sbr.rel (0) target = $region25
  $region24: #{_lambda_.47} parent=0 // pred_region
    _
  $region25: #{_lambda_.47} parent=0 // pred_fallthru
    _
  // Predicated region
  $region26: #{_lambda_.47} parent=0 // pred_check
    _
  $region27: #{_lambda_.47} parent=0 // pred_check_branch
    %1594 = sbr.rel (0) target = $region29
  $region28: #{_lambda_.47} parent=0 // pred_region
    _
  $region29: #{_lambda_.47} parent=0 // pred_fallthru
    _

// kernel: _lambda_.51
$region0: #{_lambda_.51}
  #allocation0 [shape = 'u32[]', space=smem, size = 0x4, offset = 0x4, fixed_abs, tag = 'smem constant byte address 0x4 - core index']
  #allocation1 [shape = 'u32[144,128]{1,0:T(1,128)}', space=vmem, size = 0x12000, scoped, tag = 'internal scratch']
  %s0 = inlined_call_operand.vmem [shape: f32[16,32], index: 0, kind: input, shape index: {}]
  %s1 = inlined_call_operand.vmem [shape: f32[32,64], index: 1, kind: input, shape index: {}]
  %s2 = inlined_call_operand.vmem [shape: f32[1,64], index: 2, kind: input, shape index: {}]
  %s3 = inlined_call_operand.vmem [shape: f32[16,64], index: 3, kind: output, shape index: {}]
  %s4 = sld [smem:[#allocation0]]
  $region22: #{_lambda_.51} parent=0
    _
  %s6 = ssub.s32 1, %s4
  %s7 = scalar_select 0, %s6, %s4
  // Predicated region
  $region2: #{_lambda_.51} parent=0 // pred_check
    _
  $region3: #{_lambda_.51} parent=0 // pred_check_branch
    %9 = sbr.rel (0) target = $region5
  $region4: #{_lambda_.51} parent=0 // pred_region
    _
  $region5: #{_lambda_.51} parent=0 // pred_fallthru
    _
  // Predicated region
  $region6: #{_lambda_.51} parent=0 // pred_check
    _
  $region7: #{_lambda_.51} parent=0 // pred_check_branch
    %11 = sbr.rel (0) target = $region9
  $region8: #{_lambda_.51} parent=0 // pred_region
    _
  $region9: #{_lambda_.51} parent=0 // pred_fallthru
    _
  // Predicated region
  $region10: #{_lambda_.51} parent=0 // pred_check
    _
  $region11: #{_lambda_.51} parent=0 // pred_check_branch
    %13 = sbr.rel (0) target = $region13
  $region12: #{_lambda_.51} parent=0 // pred_region
    _
  $region13: #{_lambda_.51} parent=0 // pred_fallthru
    _
  %v14 = vld [vmem:[%s0] sm:$0xff]
  %v15 = vld [vmem:[%s0 + $0x8] sm:$0xff]
  %v16 = vld [vmem:[%s1] sm:$0xff]
  %v17 = vld [vmem:[%s1 + $0x8] sm:$0xff]
  %v18 = vld [vmem:[%s1 + $0x10] sm:$0xff]
  %v19 = vld [vmem:[%s1 + $0x18] sm:$0xff]
  %v20 = vld [vmem:[%s2] sm:$0x1]
  %v22 = vlaneseq
  %v23 = vshrl.u32 %v22, 7
  %v24 = vsub.s32 0, %v23
  %v25 = vrot.slane %v20, %v24
  %vm27 = vcmask 261120
  %v29 = vsel %vm27, %v14, 0
  %v32 = vsel %vm27, %v15, 0
  %34 = vmatprep.subr.mxu0 0.0
  %35 = vmatpush1.msra.mxu0 %v16
  %36 = vmatprep.subr.mxu0 0.0
  %37 = vmatpush1.msra.mxu0 %v17
  %38 = vmatprep.subr.mxu0 0.0
  %39 = vmatpush1.msra.mxu0 %v18
  %40 = vmatprep.subr.mxu0 0.0
  %41 = vmatpush1.msra.mxu0 %v19
  %42 = vmatprep.subr.mxu0 0.0
  %43 = vmatpush1.msra.mxu0 0.0
  %44 = vmatprep.subr.mxu0 0.0
  %45 = vmatpush1.msra.mxu0 0.0
  %46 = vmatprep.subr.mxu0 0.0
  %47 = vmatpush1.msra.mxu0 0.0
  %48 = vmatprep.subr.mxu0 0.0
  %49 = vmatpush1.msra.mxu0 0.0
  %50 = vmatprep.subr.mxu0 0.0
  %51 = vmatpush1.msra.mxu0 0.0
  %52 = vmatprep.subr.mxu0 0.0
  %53 = vmatpush1.msra.mxu0 0.0
  %54 = vmatprep.subr.mxu0 0.0
  %55 = vmatpush1.msra.mxu0 0.0
  %56 = vmatprep.subr.mxu0 0.0
  %57 = vmatpush1.msra.mxu0 0.0
  %58 = vmatprep.subr.mxu0 0.0
  %59 = vmatpush1.msra.mxu0 0.0
  %60 = vmatprep.subr.mxu0 0.0
  %61 = vmatpush1.msra.mxu0 0.0
  %62 = vmatprep.subr.mxu0 0.0
  %63 = vmatpush1.msra.mxu0 0.0
  %64 = vmatprep.subr.mxu0 0.0
  %65 = vmatpush1.msra.mxu0 0.0
  %66 = vmatprep.subr.mxu0 0.0
  %67 = vmatpush1.msra.mxu0 0.0
  %68 = vmatprep.subr.mxu0 0.0
  %69 = vmatpush1.msra.mxu0 0.0
  %70 = vmatprep.subr.mxu0 0.0
  %71 = vmatpush1.msra.mxu0 0.0
  %72 = vmatprep.subr.mxu0 0.0
  %73 = vmatpush1.msra.mxu0 0.0
  %74 = vmatprep.subr.mxu0 0.0
  %75 = vmatpush1.msra.mxu0 0.0
  %76 = vmatprep.subr.mxu0 0.0
  %77 = vmatpush1.msra.mxu0 0.0
  %78 = vmatprep.subr.mxu0 0.0
  %79 = vmatpush1.msra.mxu0 0.0
  %80 = vmatprep.subr.mxu0 0.0
  %81 = vmatpush1.msra.mxu0 0.0
  %82 = vmatprep.subr.mxu0 0.0
  %83 = vmatpush1.msra.mxu0 0.0
  %84 = vmatprep.subr.mxu0 0.0
  %85 = vmatpush1.msra.mxu0 0.0
  %86 = vmatprep.subr.mxu0 0.0
  %87 = vmatpush1.msra.mxu0 0.0
  %88 = vmatprep.subr.mxu0 0.0
  %89 = vmatpush1.msra.mxu0 0.0
  %90 = vmatprep.subr.mxu0 0.0
  %91 = vmatpush1.msra.mxu0 0.0
  %92 = vmatprep.subr.mxu0 0.0
  %93 = vmatpush1.msra.mxu0 0.0
  %94 = vmatprep.subr.mxu0 0.0
  %95 = vmatpush1.msra.mxu0 0.0
  %96 = vmatprep.subr.mxu0 0.0
  %97 = vmatpush1.msra.mxu0 0.0
  %98 = vmatprep.mubr.f32.mxu0 0.0
  %99 = vmatmul.mubr.f32.gmra.mrb[0].mxu0 %v29
  %v100 = vpop.f32.mrb[0].mxu0
  %v101 = vadd.f32 %v25, %v100
  %v102 = vpop.f32.mrb[0].mxu0
  %103 = vmatprep.mubr.f32.mxu0 0.0
  %104 = vmatmul.mubr.f32.gmra.mrb[0].mxu0 %v32
  %v105 = vpop.f32.mrb[0].mxu0
  %v106 = vadd.f32 %v25, %v105
  %v107 = vpop.f32.mrb[0].mxu0
  %108 = vdwg.mxu0
  %vm109 = vcmask 523264
  %110 = vst.msk [vmem:[%s3] sm:$0xff] %vm109, %v101
  %111 = vst.msk [vmem:[%s3 + $0x8] sm:$0xff] %vm109, %v106
  // Predicated region
  $region14: #{_lambda_.51} parent=0 // pred_check
    _
  $region15: #{_lambda_.51} parent=0 // pred_check_branch
    %113 = sbr.rel (0) target = $region17
  $region16: #{_lambda_.51} parent=0 // pred_region
    _
  $region17: #{_lambda_.51} parent=0 // pred_fallthru
    _
  // Predicated region
  $region18: #{_lambda_.51} parent=0 // pred_check
    _
  $region19: #{_lambda_.51} parent=0 // pred_check_branch
    %115 = sbr.rel (0) target = $region21
  $region20: #{_lambda_.51} parent=0 // pred_region
    _
  $region21: #{_lambda_.51} parent=0 // pred_fallthru
    _

// kernel: _lambda_.67
$region0: #{_lambda_.67}
  #allocation0 [shape = 'u32[]', space=smem, size = 0x4, offset = 0x4, fixed_abs, tag = 'smem constant byte address 0x4 - core index']
  #allocation1 [shape = 'u32[144,128]{1,0:T(1,128)}', space=vmem, size = 0x12000, scoped, tag = 'internal scratch']
  %s0 = inlined_call_operand.vmem [shape: f32[16,32], index: 0, kind: input, shape index: {}]
  %s1 = inlined_call_operand.vmem [shape: f32[16,32], index: 1, kind: input, shape index: {}]
  %s2 = inlined_call_operand.vmem [shape: f32[1,32], index: 2, kind: input, shape index: {}]
  %s3 = inlined_call_operand.vmem [shape: f32[1,32], index: 3, kind: input, shape index: {}]
  %s4 = inlined_call_operand.hbm [shape: f32[16,32], index: 4, kind: output, shape index: {}]
  %s5 = sld [smem:[#allocation0]]
  $region26: #{_lambda_.67} parent=0
    _
  %s7 = ssub.s32 1, %s5
  %s8 = scalar_select 0, %s7, %s5
  $region1: #{_lambda_.67} parent=0
    #allocation2 [shape = 'u8[8192]{0}', space=vmem, size = 0x2000, scoped, tag = 'output window, operand 0, single buffered']
    #allocation3 [shape = 's32[1]{0}', space=sflag, size = 0x4, scoped, tag = 'scoped memory for _lambda_.67']
    %9 = vsyncpa [#allocation3], 0
    // Predicated region
    $region2: #{_lambda_.67} parent=1 // pred_check
      _
    $region3: #{_lambda_.67} parent=1 // pred_check_branch
      %11 = sbr.rel (0) target = $region5
    $region4: #{_lambda_.67} parent=1 // pred_region
      _
    $region5: #{_lambda_.67} parent=1 // pred_fallthru
      _
    // Predicated region
    $region6: #{_lambda_.67} parent=1 // pred_check
      _
    $region7: #{_lambda_.67} parent=1 // pred_check_branch
      %13 = sbr.rel (0) target = $region9
    $region8: #{_lambda_.67} parent=1 // pred_region
      _
    $region9: #{_lambda_.67} parent=1 // pred_fallthru
      _
    // Predicated region
    $region10: #{_lambda_.67} parent=1 // pred_check
      _
    $region11: #{_lambda_.67} parent=1 // pred_check_branch
      %15 = sbr.rel (0) target = $region13
    $region12: #{_lambda_.67} parent=1 // pred_region
      _
    $region13: #{_lambda_.67} parent=1 // pred_fallthru
      _
    // Predicated region
    $region14: #{_lambda_.67} parent=1 // pred_check
      _
    $region15: #{_lambda_.67} parent=1 // pred_check_branch
      %17 = sbr.rel (0) target = $region17
    $region16: #{_lambda_.67} parent=1 // pred_region
      _
    $region17: #{_lambda_.67} parent=1 // pred_fallthru
      _
    %v18 = vld [vmem:[%s0] sm:$0xff]
    %v19 = vld [vmem:[%s0 + $0x8] sm:$0xff]
    %v20 = vld [vmem:[%s1] sm:$0xff]
    %v21 = vld [vmem:[%s1 + $0x8] sm:$0xff]
    %v22 = vadd.f32 %v18, %v20
    %v23 = vadd.f32 %v19, %v21
    %vm24 = vcmask 261120
    %v25 = vsel %vm24, %v22, 0.0
    %26 = vadd.xlane.f32.xlu0 %v25
    %v27 = vpop.xlane.xlu0 %26
    %v28 = vsel %vm24, %v23, 0.0
    %29 = vadd.xlane.f32.xlu0 %v28
    %v30 = vpop.xlane.xlu0 %29
    %v31 = vrcp.pop 32.0
    %v32 = vmul.f32 %v27, %v31
    %v33 = vmul.f32 %v30, %v31
    %v34 = vsub.f32 %v22, %v32
    %v35 = vsub.f32 %v23, %v33
    %v36 = vmul.f32 %v34, %v34
    %v37 = vmul.f32 %v35, %v35
    %v38 = vsel %vm24, %v36, 0.0
    %39 = vadd.xlane.f32.xlu0 %v38
    %v40 = vpop.xlane.xlu0 %39
    %v41 = vsel %vm24, %v37, 0.0
    %42 = vadd.xlane.f32.xlu0 %v41
    %v43 = vpop.xlane.xlu0 %42
    %v44 = vmul.f32 %v40, %v31
    %v45 = vmul.f32 %v43, %v31
    %v46 = vadd.f32 %v44, 1e-05
    %v47 = vadd.f32 %v45, 1e-05
    %v48 = vrsqrt.pop %v46
    %v49 = vrsqrt.pop %v47
    %v50 = vmul.f32 %v34, %v48
    %v51 = vmul.f32 %v35, %v49
    %v52 = vld [vmem:[%s2] sm:$0x1]
    %v54 = vlaneseq
    %v55 = vshrl.u32 %v54, 7
    %v56 = vsub.s32 0, %v55
    %v57 = vrot.slane %v52, %v56
    %v59 = vmul.f32 %v50, %v57
    %v60 = vmul.f32 %v51, %v57
    %v61 = vld [vmem:[%s3] sm:$0x1]
    %v63 = vlaneseq
    %v64 = vshrl.u32 %v63, 7
    %v65 = vsub.s32 0, %v64
    %v66 = vrot.slane %v61, %v65
    %v68 = vadd.f32 %v59, %v66
    %v69 = vadd.f32 %v60, %v66
    %70 = vst.msk [vmem:[#allocation2] sm:$0xff] %vm24, %v68
    %71 = vst.msk [vmem:[#allocation2 + $0x8] sm:$0xff] %vm24, %v69
    // Predicated region
    $region18: #{_lambda_.67} parent=1 // pred_check
      _
    $region19: #{_lambda_.67} parent=1 // pred_check_branch
      %73 = sbr.rel (0) target = $region21
    $region20: #{_lambda_.67} parent=1 // pred_region
      %s75 = ssub.s32 256, 256
      %76 = vsyncadd [#allocation3], %s75
      %s77 = sshll.u32 [#allocation2], 4
      %s78 = int_to_ptr.vmem [resolvable:$true] %s77
      %83 = dma.vmem_to_hbm [thread:$0]  %s78, 256, %s4, [#allocation3], 128, 128, 8
    $region21: #{_lambda_.67} parent=1 // pred_fallthru
      _
    // Predicated region
    $region22: #{_lambda_.67} parent=1 // pred_check
      _
    $region23: #{_lambda_.67} parent=1 // pred_check_branch
      %85 = sbr.rel (0) target = $region25
    $region24: #{_lambda_.67} parent=1 // pred_region
      %86 = dma.done [#allocation3], 256
    $region25: #{_lambda_.67} parent=1 // pred_fallthru
      _
    %87 = vsyncpa [#allocation3], 1

// kernel: _lambda_.35
$region0: #{_lambda_.35}
  #allocation0 [shape = 'u32[]', space=smem, size = 0x4, offset = 0x4, fixed_abs, tag = 'smem constant byte address 0x4 - core index']
  #allocation1 [shape = 'u32[144,128]{1,0:T(1,128)}', space=vmem, size = 0x12000, scoped, tag = 'internal scratch']
  #allocation2 [shape = 'f32[8,8,1]{2,1,0:T(8,128)}', space=vmem, size = 0x8000, scoped, tag = 'scratch operand']
  #allocation3 [shape = 'f32[8,8,1]{2,1,0:T(8,128)}', space=vmem, size = 0x8000, scoped, tag = 'scratch operand']
  #allocation4 [shape = 'f32[8,8,128]{2,1,0:T(8,128)}', space=vmem, size = 0x8000, scoped, tag = 'scratch operand']
  %s0 = inlined_call_operand.vmem [shape: f32[8,8,128], index: 0, kind: input, shape index: {}]
  %s1 = inlined_call_operand.vmem [shape: f32[8,8,128], index: 1, kind: input, shape index: {}]
  %s2 = inlined_call_operand.vmem [shape: f32[8,8,128], index: 2, kind: input, shape index: {}]
  %s3 = inlined_call_operand.vmem [shape: f32[8,8,128], index: 3, kind: output, shape index: {}]
  %s4 = sld [smem:[#allocation0]]
  $region30: #{_lambda_.35} parent=0
    _
  %s6 = ssub.s32 1, %s4
  %s7 = scalar_select 0, %s6, %s4
  // Predicated region
  $region2: #{_lambda_.35} parent=0 // pred_check
    _
  $region3: #{_lambda_.35} parent=0 // pred_check_branch
    %9 = sbr.rel (0) target = $region5
  $region4: #{_lambda_.35} parent=0 // pred_region
    _
  $region5: #{_lambda_.35} parent=0 // pred_fallthru
    _
  // Predicated region
  $region6: #{_lambda_.35} parent=0 // pred_check
    _
  $region7: #{_lambda_.35} parent=0 // pred_check_branch
    %11 = sbr.rel (0) target = $region9
  $region8: #{_lambda_.35} parent=0 // pred_region
    _
  $region9: #{_lambda_.35} parent=0 // pred_fallthru
    _
  // Predicated region
  $region10: #{_lambda_.35} parent=0 // pred_check
    _
  $region11: #{_lambda_.35} parent=0 // pred_check_branch
    %13 = sbr.rel (0) target = $region13
  $region12: #{_lambda_.35} parent=0 // pred_region
    _
  $region13: #{_lambda_.35} parent=0 // pred_fallthru
    _
  %p14 = scmp.eq.s32.totalorder 0, 0
  // Predicated region
  $region14: #{_lambda_.35} parent=0 // pred_check
    %p15 = pneg %p14
  $region15: #{_lambda_.35} parent=0 // pred_check_branch
    %17 = sbr.rel (%p15) target = $region17
  $region16: #{_lambda_.35} parent=0 // pred_region
    %vm18 = vcmask 7168
    %19 = vst.msk [vmem:[#allocation2] sm:$0xff] %vm18, -inf
    %20 = vst.msk [vmem:[#allocation2 + $0x8] sm:$0xff] %vm18, -inf
    %21 = vst.msk [vmem:[#allocation2 + $0x10] sm:$0xff] %vm18, -inf
    %22 = vst.msk [vmem:[#allocation2 + $0x18] sm:$0xff] %vm18, -inf
    %23 = vst.msk [vmem:[#allocation2 + $0x20] sm:$0xff] %vm18, -inf
    %24 = vst.msk [vmem:[#allocation2 + $0x28] sm:$0xff] %vm18, -inf
    %25 = vst.msk [vmem:[#allocation2 + $0x30] sm:$0xff] %vm18, -inf
    %26 = vst.msk [vmem:[#allocation2 + $0x38] sm:$0xff] %vm18, -inf
    %27 = vst.msk [vmem:[#allocation3] sm:$0xff] %vm18, 0.0
    %28 = vst.msk [vmem:[#allocation3 + $0x8] sm:$0xff] %vm18, 0.0
    %29 = vst.msk [vmem:[#allocation3 + $0x10] sm:$0xff] %vm18, 0.0
    %30 = vst.msk [vmem:[#allocation3 + $0x18] sm:$0xff] %vm18, 0.0
    %31 = vst.msk [vmem:[#allocation3 + $0x20] sm:$0xff] %vm18, 0.0
    %32 = vst.msk [vmem:[#allocation3 + $0x28] sm:$0xff] %vm18, 0.0
    %33 = vst.msk [vmem:[#allocation3 + $0x30] sm:$0xff] %vm18, 0.0
    %34 = vst.msk [vmem:[#allocation3 + $0x38] sm:$0xff] %vm18, 0.0
    %35 = vst [vmem:[#allocation4] sm:$0xff] 0.0
    %36 = vst [vmem:[#allocation4 + $0x8] sm:$0xff] 0.0
    %37 = vst [vmem:[#allocation4 + $0x10] sm:$0xff] 0.0
    %38 = vst [vmem:[#allocation4 + $0x18] sm:$0xff] 0.0
    %39 = vst [vmem:[#allocation4 + $0x20] sm:$0xff] 0.0
    %40 = vst [vmem:[#allocation4 + $0x28] sm:$0xff] 0.0
    %41 = vst [vmem:[#allocation4 + $0x30] sm:$0xff] 0.0
    %42 = vst [vmem:[#allocation4 + $0x38] sm:$0xff] 0.0
  $region17: #{_lambda_.35} parent=0 // pred_fallthru
    _
  %v43 = vld [vmem:[%s0] sm:$0xff]
  %v44 = vld [vmem:[%s0 + $0x8] sm:$0xff]
  %v45 = vld [vmem:[%s0 + $0x10] sm:$0xff]
  %v46 = vld [vmem:[%s0 + $0x18] sm:$0xff]
  %v47 = vld [vmem:[%s0 + $0x20] sm:$0xff]
  %v48 = vld [vmem:[%s0 + $0x28] sm:$0xff]
  %v49 = vld [vmem:[%s0 + $0x30] sm:$0xff]
  %v50 = vld [vmem:[%s0 + $0x38] sm:$0xff]
  %v51 = vld [vmem:[%s1] sm:$0xff]
  %v52 = vld [vmem:[%s1 + $0x8] sm:$0xff]
  %v53 = vld [vmem:[%s1 + $0x10] sm:$0xff]
  %v54 = vld [vmem:[%s1 + $0x18] sm:$0xff]
  %v55 = vld [vmem:[%s1 + $0x20] sm:$0xff]
  %v56 = vld [vmem:[%s1 + $0x28] sm:$0xff]
  %v57 = vld [vmem:[%s1 + $0x30] sm:$0xff]
  %v58 = vld [vmem:[%s1 + $0x38] sm:$0xff]
  %59 = vmatprep.subr.mxu0 0.0
  %60 = vmatpush1.xpose.msra.mxu0 %v51
  %61 = vmatprep.subr.mxu0 0.0
  %62 = vmatpush1.xpose.msra.mxu0 0.0
  %63 = vmatprep.subr.mxu0 0.0
  %64 = vmatpush1.xpose.msra.mxu0 0.0
  %65 = vmatprep.subr.mxu0 0.0
  %66 = vmatpush1.xpose.msra.mxu0 0.0
  %67 = vmatprep.subr.mxu0 0.0
  %68 = vmatpush1.xpose.msra.mxu0 0.0
  %69 = vmatprep.subr.mxu0 0.0
  %70 = vmatpush1.xpose.msra.mxu0 0.0
  %71 = vmatprep.subr.mxu0 0.0
  %72 = vmatpush1.xpose.msra.mxu0 0.0
  %73 = vmatprep.subr.mxu0 0.0
  %74 = vmatpush1.xpose.msra.mxu0 0.0
  %75 = vmatprep.subr.mxu0 0.0
  %76 = vmatpush1.xpose.msra.mxu0 0.0
  %77 = vmatprep.subr.mxu0 0.0
  %78 = vmatpush1.xpose.msra.mxu0 0.0
  %79 = vmatprep.subr.mxu0 0.0
  %80 = vmatpush1.xpose.msra.mxu0 0.0
  %81 = vmatprep.subr.mxu0 0.0
  %82 = vmatpush1.xpose.msra.mxu0 0.0
  %83 = vmatprep.subr.mxu0 0.0
  %84 = vmatpush1.xpose.msra.mxu0 0.0
  %85 = vmatprep.subr.mxu0 0.0
  %86 = vmatpush1.xpose.msra.mxu0 0.0
  %87 = vmatprep.subr.mxu0 0.0
  %88 = vmatpush1.xpose.msra.mxu0 0.0
  %89 = vmatprep.subr.mxu0 0.0
  %90 = vmatpush1.xpose.msra.mxu0 0.0
  %91 = vmatprep.subr.mxu0 0.0
  %92 = vmatpush1.xpose.msra.mxu0 0.0
  %93 = vmatprep.subr.mxu0 0.0
  %94 = vmatpush1.xpose.msra.mxu0 0.0
  %95 = vmatprep.subr.mxu0 0.0
  %96 = vmatpush1.xpose.msra.mxu0 0.0
  %97 = vmatprep.subr.mxu0 0.0
  %98 = vmatpush1.xpose.msra.mxu0 0.0
  %99 = vmatprep.subr.mxu0 0.0
  %100 = vmatpush1.xpose.msra.mxu0 0.0
  %101 = vmatprep.subr.mxu0 0.0
  %102 = vmatpush1.xpose.msra.mxu0 0.0
  %103 = vmatprep.subr.mxu0 0.0
  %104 = vmatpush1.xpose.msra.mxu0 0.0
  %105 = vmatprep.subr.mxu0 0.0
  %106 = vmatpush1.xpose.msra.mxu0 0.0
  %107 = vmatprep.subr.mxu0 0.0
  %108 = vmatpush1.xpose.msra.mxu0 0.0
  %109 = vmatprep.subr.mxu0 0.0
  %110 = vmatpush1.xpose.msra.mxu0 0.0
  %111 = vmatprep.subr.mxu0 0.0
  %112 = vmatpush1.xpose.msra.mxu0 0.0
  %113 = vmatprep.subr.mxu0 0.0
  %114 = vmatpush1.xpose.msra.mxu0 0.0
  %115 = vmatprep.subr.mxu0 0.0
  %116 = vmatpush1.xpose.msra.mxu0 0.0
  %117 = vmatprep.subr.mxu0 0.0
  %118 = vmatpush1.xpose.msra.mxu0 0.0
  %119 = vmatprep.subr.mxu0 0.0
  %120 = vmatpush1.xpose.msra.mxu0 0.0
  %121 = vmatprep.subr.mxu0 0.0
  %122 = vmatpush1.xpose.msra.mxu0 0.0
  %123 = vmatprep.mubr.f32.mxu0 0.0
  %124 = vmatmul.mubr.f32.gmra.mrb[0].mxu0 %v43
  %v125 = vpop.f32.mrb[0].mxu0
  %v126 = vadd.f32 0.0, %v125
  %v127 = vpop.f32.mrb[0].mxu0
  %128 = vdwg.mxu0
  %129 = vmatprep.subr.mxu0 0.0
  %130 = vmatpush1.xpose.msra.mxu0 %v52
  %131 = vmatprep.subr.mxu0 0.0
  %132 = vmatpush1.xpose.msra.mxu0 0.0
  %133 = vmatprep.subr.mxu0 0.0
  %134 = vmatpush1.xpose.msra.mxu0 0.0
  %135 = vmatprep.subr.mxu0 0.0
  %136 = vmatpush1.xpose.msra.mxu0 0.0
  %137 = vmatprep.subr.mxu0 0.0
  %138 = vmatpush1.xpose.msra.mxu0 0.0
  %139 = vmatprep.subr.mxu0 0.0
  %140 = vmatpush1.xpose.msra.mxu0 0.0
  %141 = vmatprep.subr.mxu0 0.0
  %142 = vmatpush1.xpose.msra.mxu0 0.0
  %143 = vmatprep.subr.mxu0 0.0
  %144 = vmatpush1.xpose.msra.mxu0 0.0
  %145 = vmatprep.subr.mxu0 0.0
  %146 = vmatpush1.xpose.msra.mxu0 0.0
  %147 = vmatprep.subr.mxu0 0.0
  %148 = vmatpush1.xpose.msra.mxu0 0.0
  %149 = vmatprep.subr.mxu0 0.0
  %150 = vmatpush1.xpose.msra.mxu0 0.0
  %151 = vmatprep.subr.mxu0 0.0
  %152 = vmatpush1.xpose.msra.mxu0 0.0
  %153 = vmatprep.subr.mxu0 0.0
  %154 = vmatpush1.xpose.msra.mxu0 0.0
  %155 = vmatprep.subr.mxu0 0.0
  %156 = vmatpush1.xpose.msra.mxu0 0.0
  %157 = vmatprep.subr.mxu0 0.0
  %158 = vmatpush1.xpose.msra.mxu0 0.0
  %159 = vmatprep.subr.mxu0 0.0
  %160 = vmatpush1.xpose.msra.mxu0 0.0
  %161 = vmatprep.subr.mxu0 0.0
  %162 = vmatpush1.xpose.msra.mxu0 0.0
  %163 = vmatprep.subr.mxu0 0.0
  %164 = vmatpush1.xpose.msra.mxu0 0.0
  %165 = vmatprep.subr.mxu0 0.0
  %166 = vmatpush1.xpose.msra.mxu0 0.0
  %167 = vmatprep.subr.mxu0 0.0
  %168 = vmatpush1.xpose.msra.mxu0 0.0
  %169 = vmatprep.subr.mxu0 0.0
  %170 = vmatpush1.xpose.msra.mxu0 0.0
  %171 = vmatprep.subr.mxu0 0.0
  %172 = vmatpush1.xpose.msra.mxu0 0.0
  %173 = vmatprep.subr.mxu0 0.0
  %174 = vmatpush1.xpose.msra.mxu0 0.0
  %175 = vmatprep.subr.mxu0 0.0
  %176 = vmatpush1.xpose.msra.mxu0 0.0
  %177 = vmatprep.subr.mxu0 0.0
  %178 = vmatpush1.xpose.msra.mxu0 0.0
  %179 = vmatprep.subr.mxu0 0.0
  %180 = vmatpush1.xpose.msra.mxu0 0.0
  %181 = vmatprep.subr.mxu0 0.0
  %182 = vmatpush1.xpose.msra.mxu0 0.0
  %183 = vmatprep.subr.mxu0 0.0
  %184 = vmatpush1.xpose.msra.mxu0 0.0
  %185 = vmatprep.subr.mxu0 0.0
  %186 = vmatpush1.xpose.msra.mxu0 0.0
  %187 = vmatprep.subr.mxu0 0.0
  %188 = vmatpush1.xpose.msra.mxu0 0.0
  %189 = vmatprep.subr.mxu0 0.0
  %190 = vmatpush1.xpose.msra.mxu0 0.0
  %191 = vmatprep.subr.mxu0 0.0
  %192 = vmatpush1.xpose.msra.mxu0 0.0
  %193 = vmatprep.mubr.f32.mxu0 0.0
  %194 = vmatmul.mubr.f32.gmra.mrb[0].mxu0 %v44
  %v195 = vpop.f32.mrb[0].mxu0
  %v196 = vadd.f32 0.0, %v195
  %v197 = vpop.f32.mrb[0].mxu0
  %198 = vdwg.mxu0
  %199 = vmatprep.subr.mxu0 0.0
  %200 = vmatpush1.xpose.msra.mxu0 %v53
  %201 = vmatprep.subr.mxu0 0.0
  %202 = vmatpush1.xpose.msra.mxu0 0.0
  %203 = vmatprep.subr.mxu0 0.0
  %204 = vmatpush1.xpose.msra.mxu0 0.0
  %205 = vmatprep.subr.mxu0 0.0
  %206 = vmatpush1.xpose.msra.mxu0 0.0
  %207 = vmatprep.subr.mxu0 0.0
  %208 = vmatpush1.xpose.msra.mxu0 0.0
  %209 = vmatprep.subr.mxu0 0.0
  %210 = vmatpush1.xpose.msra.mxu0 0.0
  %211 = vmatprep.subr.mxu0 0.0
  %212 = vmatpush1.xpose.msra.mxu0 0.0
  %213 = vmatprep.subr.mxu0 0.0
  %214 = vmatpush1.xpose.msra.mxu0 0.0
  %215 = vmatprep.subr.mxu0 0.0
  %216 = vmatpush1.xpose.msra.mxu0 0.0
  %217 = vmatprep.subr.mxu0 0.0
  %218 = vmatpush1.xpose.msra.mxu0 0.0
  %219 = vmatprep.subr.mxu0 0.0
  %220 = vmatpush1.xpose.msra.mxu0 0.0
  %221 = vmatprep.subr.mxu0 0.0
  %222 = vmatpush1.xpose.msra.mxu0 0.0
  %223 = vmatprep.subr.mxu0 0.0
  %224 = vmatpush1.xpose.msra.mxu0 0.0
  %225 = vmatprep.subr.mxu0 0.0
  %226 = vmatpush1.xpose.msra.mxu0 0.0
  %227 = vmatprep.subr.mxu0 0.0
  %228 = vmatpush1.xpose.msra.mxu0 0.0
  %229 = vmatprep.subr.mxu0 0.0
  %230 = vmatpush1.xpose.msra.mxu0 0.0
  %231 = vmatprep.subr.mxu0 0.0
  %232 = vmatpush1.xpose.msra.mxu0 0.0
  %233 = vmatprep.subr.mxu0 0.0
  %234 = vmatpush1.xpose.msra.mxu0 0.0
  %235 = vmatprep.subr.mxu0 0.0
  %236 = vmatpush1.xpose.msra.mxu0 0.0
  %237 = vmatprep.subr.mxu0 0.0
  %238 = vmatpush1.xpose.msra.mxu0 0.0
  %239 = vmatprep.subr.mxu0 0.0
  %240 = vmatpush1.xpose.msra.mxu0 0.0
  %241 = vmatprep.subr.mxu0 0.0
  %242 = vmatpush1.xpose.msra.mxu0 0.0
  %243 = vmatprep.subr.mxu0 0.0
  %244 = vmatpush1.xpose.msra.mxu0 0.0
  %245 = vmatprep.subr.mxu0 0.0
  %246 = vmatpush1.xpose.msra.mxu0 0.0
  %247 = vmatprep.subr.mxu0 0.0
  %248 = vmatpush1.xpose.msra.mxu0 0.0
  %249 = vmatprep.subr.mxu0 0.0
  %250 = vmatpush1.xpose.msra.mxu0 0.0
  %251 = vmatprep.subr.mxu0 0.0
  %252 = vmatpush1.xpose.msra.mxu0 0.0
  %253 = vmatprep.subr.mxu0 0.0
  %254 = vmatpush1.xpose.msra.mxu0 0.0
  %255 = vmatprep.subr.mxu0 0.0
  %256 = vmatpush1.xpose.msra.mxu0 0.0
  %257 = vmatprep.subr.mxu0 0.0
  %258 = vmatpush1.xpose.msra.mxu0 0.0
  %259 = vmatprep.subr.mxu0 0.0
  %260 = vmatpush1.xpose.msra.mxu0 0.0
  %261 = vmatprep.subr.mxu0 0.0
  %262 = vmatpush1.xpose.msra.mxu0 0.0
  %263 = vmatprep.mubr.f32.mxu0 0.0
  %264 = vmatmul.mubr.f32.gmra.mrb[0].mxu0 %v45
  %v265 = vpop.f32.mrb[0].mxu0
  %v266 = vadd.f32 0.0, %v265
  %v267 = vpop.f32.mrb[0].mxu0
  %268 = vdwg.mxu0
  %269 = vmatprep.subr.mxu0 0.0
  %270 = vmatpush1.xpose.msra.mxu0 %v54
  %271 = vmatprep.subr.mxu0 0.0
  %272 = vmatpush1.xpose.msra.mxu0 0.0
  %273 = vmatprep.subr.mxu0 0.0
  %274 = vmatpush1.xpose.msra.mxu0 0.0
  %275 = vmatprep.subr.mxu0 0.0
  %276 = vmatpush1.xpose.msra.mxu0 0.0
  %277 = vmatprep.subr.mxu0 0.0
  %278 = vmatpush1.xpose.msra.mxu0 0.0
  %279 = vmatprep.subr.mxu0 0.0
  %280 = vmatpush1.xpose.msra.mxu0 0.0
  %281 = vmatprep.subr.mxu0 0.0
  %282 = vmatpush1.xpose.msra.mxu0 0.0
  %283 = vmatprep.subr.mxu0 0.0
  %284 = vmatpush1.xpose.msra.mxu0 0.0
  %285 = vmatprep.subr.mxu0 0.0
  %286 = vmatpush1.xpose.msra.mxu0 0.0
  %287 = vmatprep.subr.mxu0 0.0
  %288 = vmatpush1.xpose.msra.mxu0 0.0
  %289 = vmatprep.subr.mxu0 0.0
  %290 = vmatpush1.xpose.msra.mxu0 0.0
  %291 = vmatprep.subr.mxu0 0.0
  %292 = vmatpush1.xpose.msra.mxu0 0.0
  %293 = vmatprep.subr.mxu0 0.0
  %294 = vmatpush1.xpose.msra.mxu0 0.0
  %295 = vmatprep.subr.mxu0 0.0
  %296 = vmatpush1.xpose.msra.mxu0 0.0
  %297 = vmatprep.subr.mxu0 0.0
  %298 = vmatpush1.xpose.msra.mxu0 0.0
  %299 = vmatprep.subr.mxu0 0.0
  %300 = vmatpush1.xpose.msra.mxu0 0.0
  %301 = vmatprep.subr.mxu0 0.0
  %302 = vmatpush1.xpose.msra.mxu0 0.0
  %303 = vmatprep.subr.mxu0 0.0
  %304 = vmatpush1.xpose.msra.mxu0 0.0
  %305 = vmatprep.subr.mxu0 0.0
  %306 = vmatpush1.xpose.msra.mxu0 0.0
  %307 = vmatprep.subr.mxu0 0.0
  %308 = vmatpush1.xpose.msra.mxu0 0.0
  %309 = vmatprep.subr.mxu0 0.0
  %310 = vmatpush1.xpose.msra.mxu0 0.0
  %311 = vmatprep.subr.mxu0 0.0
  %312 = vmatpush1.xpose.msra.mxu0 0.0
  %313 = vmatprep.subr.mxu0 0.0
  %314 = vmatpush1.xpose.msra.mxu0 0.0
  %315 = vmatprep.subr.mxu0 0.0
  %316 = vmatpush1.xpose.msra.mxu0 0.0
  %317 = vmatprep.subr.mxu0 0.0
  %318 = vmatpush1.xpose.msra.mxu0 0.0
  %319 = vmatprep.subr.mxu0 0.0
  %320 = vmatpush1.xpose.msra.mxu0 0.0
  %321 = vmatprep.subr.mxu0 0.0
  %322 = vmatpush1.xpose.msra.mxu0 0.0
  %323 = vmatprep.subr.mxu0 0.0
  %324 = vmatpush1.xpose.msra.mxu0 0.0
  %325 = vmatprep.subr.mxu0 0.0
  %326 = vmatpush1.xpose.msra.mxu0 0.0
  %327 = vmatprep.subr.mxu0 0.0
  %328 = vmatpush1.xpose.msra.mxu0 0.0
  %329 = vmatprep.subr.mxu0 0.0
  %330 = vmatpush1.xpose.msra.mxu0 0.0
  %331 = vmatprep.subr.mxu0 0.0
  %332 = vmatpush1.xpose.msra.mxu0 0.0
  %333 = vmatprep.mubr.f32.mxu0 0.0
  %334 = vmatmul.mubr.f32.gmra.mrb[0].mxu0 %v46
  %v335 = vpop.f32.mrb[0].mxu0
  %v336 = vadd.f32 0.0, %v335
  %v337 = vpop.f32.mrb[0].mxu0
  %338 = vdwg.mxu0
  %339 = vmatprep.subr.mxu0 0.0
  %340 = vmatpush1.xpose.msra.mxu0 %v55
  %341 = vmatprep.subr.mxu0 0.0
  %342 = vmatpush1.xpose.msra.mxu0 0.0
  %343 = vmatprep.subr.mxu0 0.0
  %344 = vmatpush1.xpose.msra.mxu0 0.0
  %345 = vmatprep.subr.mxu0 0.0
  %346 = vmatpush1.xpose.msra.mxu0 0.0
  %347 = vmatprep.subr.mxu0 0.0
  %348 = vmatpush1.xpose.msra.mxu0 0.0
  %349 = vmatprep.subr.mxu0 0.0
  %350 = vmatpush1.xpose.msra.mxu0 0.0
  %351 = vmatprep.subr.mxu0 0.0
  %352 = vmatpush1.xpose.msra.mxu0 0.0
  %353 = vmatprep.subr.mxu0 0.0
  %354 = vmatpush1.xpose.msra.mxu0 0.0
  %355 = vmatprep.subr.mxu0 0.0
  %356 = vmatpush1.xpose.msra.mxu0 0.0
  %357 = vmatprep.subr.mxu0 0.0
  %358 = vmatpush1.xpose.msra.mxu0 0.0
  %359 = vmatprep.subr.mxu0 0.0
  %360 = vmatpush1.xpose.msra.mxu0 0.0
  %361 = vmatprep.subr.mxu0 0.0
  %362 = vmatpush1.xpose.msra.mxu0 0.0
  %363 = vmatprep.subr.mxu0 0.0
  %364 = vmatpush1.xpose.msra.mxu0 0.0
  %365 = vmatprep.subr.mxu0 0.0
  %366 = vmatpush1.xpose.msra.mxu0 0.0
  %367 = vmatprep.subr.mxu0 0.0
  %368 = vmatpush1.xpose.msra.mxu0 0.0
  %369 = vmatprep.subr.mxu0 0.0
  %370 = vmatpush1.xpose.msra.mxu0 0.0
  %371 = vmatprep.subr.mxu0 0.0
  %372 = vmatpush1.xpose.msra.mxu0 0.0
  %373 = vmatprep.subr.mxu0 0.0
  %374 = vmatpush1.xpose.msra.mxu0 0.0
  %375 = vmatprep.subr.mxu0 0.0
  %376 = vmatpush1.xpose.msra.mxu0 0.0
  %377 = vmatprep.subr.mxu0 0.0
  %378 = vmatpush1.xpose.msra.mxu0 0.0
  %379 = vmatprep.subr.mxu0 0.0
  %380 = vmatpush1.xpose.msra.mxu0 0.0
  %381 = vmatprep.subr.mxu0 0.0
  %382 = vmatpush1.xpose.msra.mxu0 0.0
  %383 = vmatprep.subr.mxu0 0.0
  %384 = vmatpush1.xpose.msra.mxu0 0.0
  %385 = vmatprep.subr.mxu0 0.0
  %386 = vmatpush1.xpose.msra.mxu0 0.0
  %387 = vmatprep.subr.mxu0 0.0
  %388 = vmatpush1.xpose.msra.mxu0 0.0
  %389 = vmatprep.subr.mxu0 0.0
  %390 = vmatpush1.xpose.msra.mxu0 0.0
  %391 = vmatprep.subr.mxu0 0.0
  %392 = vmatpush1.xpose.msra.mxu0 0.0
  %393 = vmatprep.subr.mxu0 0.0
  %394 = vmatpush1.xpose.msra.mxu0 0.0
  %395 = vmatprep.subr.mxu0 0.0
  %396 = vmatpush1.xpose.msra.mxu0 0.0
  %397 = vmatprep.subr.mxu0 0.0
  %398 = vmatpush1.xpose.msra.mxu0 0.0
  %399 = vmatprep.subr.mxu0 0.0
  %400 = vmatpush1.xpose.msra.mxu0 0.0
  %401 = vmatprep.subr.mxu0 0.0
  %402 = vmatpush1.xpose.msra.mxu0 0.0
  %403 = vmatprep.mubr.f32.mxu0 0.0
  %404 = vmatmul.mubr.f32.gmra.mrb[0].mxu0 %v47
  %v405 = vpop.f32.mrb[0].mxu0
  %v406 = vadd.f32 0.0, %v405
  %v407 = vpop.f32.mrb[0].mxu0
  %408 = vdwg.mxu0
  %409 = vmatprep.subr.mxu0 0.0
  %410 = vmatpush1.xpose.msra.mxu0 %v56
  %411 = vmatprep.subr.mxu0 0.0
  %412 = vmatpush1.xpose.msra.mxu0 0.0
  %413 = vmatprep.subr.mxu0 0.0
  %414 = vmatpush1.xpose.msra.mxu0 0.0
  %415 = vmatprep.subr.mxu0 0.0
  %416 = vmatpush1.xpose.msra.mxu0 0.0
  %417 = vmatprep.subr.mxu0 0.0
  %418 = vmatpush1.xpose.msra.mxu0 0.0
  %419 = vmatprep.subr.mxu0 0.0
  %420 = vmatpush1.xpose.msra.mxu0 0.0
  %421 = vmatprep.subr.mxu0 0.0
  %422 = vmatpush1.xpose.msra.mxu0 0.0
  %423 = vmatprep.subr.mxu0 0.0
  %424 = vmatpush1.xpose.msra.mxu0 0.0
  %425 = vmatprep.subr.mxu0 0.0
  %426 = vmatpush1.xpose.msra.mxu0 0.0
  %427 = vmatprep.subr.mxu0 0.0
  %428 = vmatpush1.xpose.msra.mxu0 0.0
  %429 = vmatprep.subr.mxu0 0.0
  %430 = vmatpush1.xpose.msra.mxu0 0.0
  %431 = vmatprep.subr.mxu0 0.0
  %432 = vmatpush1.xpose.msra.mxu0 0.0
  %433 = vmatprep.subr.mxu0 0.0
  %434 = vmatpush1.xpose.msra.mxu0 0.0
  %435 = vmatprep.subr.mxu0 0.0
  %436 = vmatpush1.xpose.msra.mxu0 0.0
  %437 = vmatprep.subr.mxu0 0.0
  %438 = vmatpush1.xpose.msra.mxu0 0.0
  %439 = vmatprep.subr.mxu0 0.0
  %440 = vmatpush1.xpose.msra.mxu0 0.0
  %441 = vmatprep.subr.mxu0 0.0
  %442 = vmatpush1.xpose.msra.mxu0 0.0
  %443 = vmatprep.subr.mxu0 0.0
  %444 = vmatpush1.xpose.msra.mxu0 0.0
  %445 = vmatprep.subr.mxu0 0.0
  %446 = vmatpush1.xpose.msra.mxu0 0.0
  %447 = vmatprep.subr.mxu0 0.0
  %448 = vmatpush1.xpose.msra.mxu0 0.0
  %449 = vmatprep.subr.mxu0 0.0
  %450 = vmatpush1.xpose.msra.mxu0 0.0
  %451 = vmatprep.subr.mxu0 0.0
  %452 = vmatpush1.xpose.msra.mxu0 0.0
  %453 = vmatprep.subr.mxu0 0.0
  %454 = vmatpush1.xpose.msra.mxu0 0.0
  %455 = vmatprep.subr.mxu0 0.0
  %456 = vmatpush1.xpose.msra.mxu0 0.0
  %457 = vmatprep.subr.mxu0 0.0
  %458 = vmatpush1.xpose.msra.mxu0 0.0
  %459 = vmatprep.subr.mxu0 0.0
  %460 = vmatpush1.xpose.msra.mxu0 0.0
  %461 = vmatprep.subr.mxu0 0.0
  %462 = vmatpush1.xpose.msra.mxu0 0.0
  %463 = vmatprep.subr.mxu0 0.0
  %464 = vmatpush1.xpose.msra.mxu0 0.0
  %465 = vmatprep.subr.mxu0 0.0
  %466 = vmatpush1.xpose.msra.mxu0 0.0
  %467 = vmatprep.subr.mxu0 0.0
  %468 = vmatpush1.xpose.msra.mxu0 0.0
  %469 = vmatprep.subr.mxu0 0.0
  %470 = vmatpush1.xpose.msra.mxu0 0.0
  %471 = vmatprep.subr.mxu0 0.0
  %472 = vmatpush1.xpose.msra.mxu0 0.0
  %473 = vmatprep.mubr.f32.mxu0 0.0
  %474 = vmatmul.mubr.f32.gmra.mrb[0].mxu0 %v48
  %v475 = vpop.f32.mrb[0].mxu0
  %v476 = vadd.f32 0.0, %v475
  %v477 = vpop.f32.mrb[0].mxu0
  %478 = vdwg.mxu0
  %479 = vmatprep.subr.mxu0 0.0
  %480 = vmatpush1.xpose.msra.mxu0 %v57
  %481 = vmatprep.subr.mxu0 0.0
  %482 = vmatpush1.xpose.msra.mxu0 0.0
  %483 = vmatprep.subr.mxu0 0.0
  %484 = vmatpush1.xpose.msra.mxu0 0.0
  %485 = vmatprep.subr.mxu0 0.0
  %486 = vmatpush1.xpose.msra.mxu0 0.0
  %487 = vmatprep.subr.mxu0 0.0
  %488 = vmatpush1.xpose.msra.mxu0 0.0
  %489 = vmatprep.subr.mxu0 0.0
  %490 = vmatpush1.xpose.msra.mxu0 0.0
  %491 = vmatprep.subr.mxu0 0.0
  %492 = vmatpush1.xpose.msra.mxu0 0.0
  %493 = vmatprep.subr.mxu0 0.0
  %494 = vmatpush1.xpose.msra.mxu0 0.0
  %495 = vmatprep.subr.mxu0 0.0
  %496 = vmatpush1.xpose.msra.mxu0 0.0
  %497 = vmatprep.subr.mxu0 0.0
  %498 = vmatpush1.xpose.msra.mxu0 0.0
  %499 = vmatprep.subr.mxu0 0.0
  %500 = vmatpush1.xpose.msra.mxu0 0.0
  %501 = vmatprep.subr.mxu0 0.0
  %502 = vmatpush1.xpose.msra.mxu0 0.0
  %503 = vmatprep.subr.mxu0 0.0
  %504 = vmatpush1.xpose.msra.mxu0 0.0
  %505 = vmatprep.subr.mxu0 0.0
  %506 = vmatpush1.xpose.msra.mxu0 0.0
  %507 = vmatprep.subr.mxu0 0.0
  %508 = vmatpush1.xpose.msra.mxu0 0.0
  %509 = vmatprep.subr.mxu0 0.0
  %510 = vmatpush1.xpose.msra.mxu0 0.0
  %511 = vmatprep.subr.mxu0 0.0
  %512 = vmatpush1.xpose.msra.mxu0 0.0
  %513 = vmatprep.subr.mxu0 0.0
  %514 = vmatpush1.xpose.msra.mxu0 0.0
  %515 = vmatprep.subr.mxu0 0.0
  %516 = vmatpush1.xpose.msra.mxu0 0.0
  %517 = vmatprep.subr.mxu0 0.0
  %518 = vmatpush1.xpose.msra.mxu0 0.0
  %519 = vmatprep.subr.mxu0 0.0
  %520 = vmatpush1.xpose.msra.mxu0 0.0
  %521 = vmatprep.subr.mxu0 0.0
  %522 = vmatpush1.xpose.msra.mxu0 0.0
  %523 = vmatprep.subr.mxu0 0.0
  %524 = vmatpush1.xpose.msra.mxu0 0.0
  %525 = vmatprep.subr.mxu0 0.0
  %526 = vmatpush1.xpose.msra.mxu0 0.0
  %527 = vmatprep.subr.mxu0 0.0
  %528 = vmatpush1.xpose.msra.mxu0 0.0
  %529 = vmatprep.subr.mxu0 0.0
  %530 = vmatpush1.xpose.msra.mxu0 0.0
  %531 = vmatprep.subr.mxu0 0.0
  %532 = vmatpush1.xpose.msra.mxu0 0.0
  %533 = vmatprep.subr.mxu0 0.0
  %534 = vmatpush1.xpose.msra.mxu0 0.0
  %535 = vmatprep.subr.mxu0 0.0
  %536 = vmatpush1.xpose.msra.mxu0 0.0
  %537 = vmatprep.subr.mxu0 0.0
  %538 = vmatpush1.xpose.msra.mxu0 0.0
  %539 = vmatprep.subr.mxu0 0.0
  %540 = vmatpush1.xpose.msra.mxu0 0.0
  %541 = vmatprep.subr.mxu0 0.0
  %542 = vmatpush1.xpose.msra.mxu0 0.0
  %543 = vmatprep.mubr.f32.mxu0 0.0
  %544 = vmatmul.mubr.f32.gmra.mrb[0].mxu0 %v49
  %v545 = vpop.f32.mrb[0].mxu0
  %v546 = vadd.f32 0.0, %v545
  %v547 = vpop.f32.mrb[0].mxu0
  %548 = vdwg.mxu0
  %549 = vmatprep.subr.mxu0 0.0
  %550 = vmatpush1.xpose.msra.mxu0 %v58
  %551 = vmatprep.subr.mxu0 0.0
  %552 = vmatpush1.xpose.msra.mxu0 0.0
  %553 = vmatprep.subr.mxu0 0.0
  %554 = vmatpush1.xpose.msra.mxu0 0.0
  %555 = vmatprep.subr.mxu0 0.0
  %556 = vmatpush1.xpose.msra.mxu0 0.0
  %557 = vmatprep.subr.mxu0 0.0
  %558 = vmatpush1.xpose.msra.mxu0 0.0
  %559 = vmatprep.subr.mxu0 0.0
  %560 = vmatpush1.xpose.msra.mxu0 0.0
  %561 = vmatprep.subr.mxu0 0.0
  %562 = vmatpush1.xpose.msra.mxu0 0.0
  %563 = vmatprep.subr.mxu0 0.0
  %564 = vmatpush1.xpose.msra.mxu0 0.0
  %565 = vmatprep.subr.mxu0 0.0
  %566 = vmatpush1.xpose.msra.mxu0 0.0
  %567 = vmatprep.subr.mxu0 0.0
  %568 = vmatpush1.xpose.msra.mxu0 0.0
  %569 = vmatprep.subr.mxu0 0.0
  %570 = vmatpush1.xpose.msra.mxu0 0.0
  %571 = vmatprep.subr.mxu0 0.0
  %572 = vmatpush1.xpose.msra.mxu0 0.0
  %573 = vmatprep.subr.mxu0 0.0
  %574 = vmatpush1.xpose.msra.mxu0 0.0
  %575 = vmatprep.subr.mxu0 0.0
  %576 = vmatpush1.xpose.msra.mxu0 0.0
  %577 = vmatprep.subr.mxu0 0.0
  %578 = vmatpush1.xpose.msra.mxu0 0.0
  %579 = vmatprep.subr.mxu0 0.0
  %580 = vmatpush1.xpose.msra.mxu0 0.0
  %581 = vmatprep.subr.mxu0 0.0
  %582 = vmatpush1.xpose.msra.mxu0 0.0
  %583 = vmatprep.subr.mxu0 0.0
  %584 = vmatpush1.xpose.msra.mxu0 0.0
  %585 = vmatprep.subr.mxu0 0.0
  %586 = vmatpush1.xpose.msra.mxu0 0.0
  %587 = vmatprep.subr.mxu0 0.0
  %588 = vmatpush1.xpose.msra.mxu0 0.0
  %589 = vmatprep.subr.mxu0 0.0
  %590 = vmatpush1.xpose.msra.mxu0 0.0
  %591 = vmatprep.subr.mxu0 0.0
  %592 = vmatpush1.xpose.msra.mxu0 0.0
  %593 = vmatprep.subr.mxu0 0.0
  %594 = vmatpush1.xpose.msra.mxu0 0.0
  %595 = vmatprep.subr.mxu0 0.0
  %596 = vmatpush1.xpose.msra.mxu0 0.0
  %597 = vmatprep.subr.mxu0 0.0
  %598 = vmatpush1.xpose.msra.mxu0 0.0
  %599 = vmatprep.subr.mxu0 0.0
  %600 = vmatpush1.xpose.msra.mxu0 0.0
  %601 = vmatprep.subr.mxu0 0.0
  %602 = vmatpush1.xpose.msra.mxu0 0.0
  %603 = vmatprep.subr.mxu0 0.0
  %604 = vmatpush1.xpose.msra.mxu0 0.0
  %605 = vmatprep.subr.mxu0 0.0
  %606 = vmatpush1.xpose.msra.mxu0 0.0
  %607 = vmatprep.subr.mxu0 0.0
  %608 = vmatpush1.xpose.msra.mxu0 0.0
  %609 = vmatprep.subr.mxu0 0.0
  %610 = vmatpush1.xpose.msra.mxu0 0.0
  %611 = vmatprep.subr.mxu0 0.0
  %612 = vmatpush1.xpose.msra.mxu0 0.0
  %613 = vmatprep.mubr.f32.mxu0 0.0
  %614 = vmatmul.mubr.f32.gmra.mrb[0].mxu0 %v50
  %v615 = vpop.f32.mrb[0].mxu0
  %v616 = vadd.f32 0.0, %v615
  %v617 = vpop.f32.mrb[0].mxu0
  %618 = vdwg.mxu0
  %v619 = vmul.f32 %v126, 0.35355338
  %v620 = vmul.f32 %v196, 0.35355338
  %v621 = vmul.f32 %v266, 0.35355338
  %v622 = vmul.f32 %v336, 0.35355338
  %v623 = vmul.f32 %v406, 0.35355338
  %v624 = vmul.f32 %v476, 0.35355338
  %v625 = vmul.f32 %v546, 0.35355338
  %v626 = vmul.f32 %v616, 0.35355338
  %v627 = vld [vmem:[#allocation2] sm:$0xff]
  %v628 = vld [vmem:[#allocation2 + $0x8] sm:$0xff]
  %v629 = vld [vmem:[#allocation2 + $0x10] sm:$0xff]
  %v630 = vld [vmem:[#allocation2 + $0x18] sm:$0xff]
  %v631 = vld [vmem:[#allocation2 + $0x20] sm:$0xff]
  %v632 = vld [vmem:[#allocation2 + $0x28] sm:$0xff]
  %v633 = vld [vmem:[#allocation2 + $0x30] sm:$0xff]
  %v634 = vld [vmem:[#allocation2 + $0x38] sm:$0xff]
  %vm635 = vcmask 64512
  %v636 = vsel %vm635, %v619, -inf
  %637 = vmax.xlane.f32.xlu0 %v636
  %v638 = vpop.xlane.xlu0 %637
  %v639 = vsel %vm635, %v620, -inf
  %640 = vmax.xlane.f32.xlu0 %v639
  %v641 = vpop.xlane.xlu0 %640
  %v642 = vsel %vm635, %v621, -inf
  %643 = vmax.xlane.f32.xlu0 %v642
  %v644 = vpop.xlane.xlu0 %643
  %v645 = vsel %vm635, %v622, -inf
  %646 = vmax.xlane.f32.xlu0 %v645
  %v647 = vpop.xlane.xlu0 %646
  %v648 = vsel %vm635, %v623, -inf
  %649 = vmax.xlane.f32.xlu0 %v648
  %v650 = vpop.xlane.xlu0 %649
  %v651 = vsel %vm635, %v624, -inf
  %652 = vmax.xlane.f32.xlu0 %v651
  %v653 = vpop.xlane.xlu0 %652
  %v654 = vsel %vm635, %v625, -inf
  %655 = vmax.xlane.f32.xlu0 %v654
  %v656 = vpop.xlane.xlu0 %655
  %v657 = vsel %vm635, %v626, -inf
  %658 = vmax.xlane.f32.xlu0 %v657
  %v659 = vpop.xlane.xlu0 %658
  %v660 = vmax.f32 %v627, %v638
  %v661 = vmax.f32 %v628, %v641
  %v662 = vmax.f32 %v629, %v644
  %v663 = vmax.f32 %v630, %v647
  %v664 = vmax.f32 %v631, %v650
  %v665 = vmax.f32 %v632, %v653
  %v666 = vmax.f32 %v633, %v656
  %v667 = vmax.f32 %v634, %v659
  %v668 = vsub.f32 %v627, %v660
  %v669 = vsub.f32 %v628, %v661
  %v670 = vsub.f32 %v629, %v662
  %v671 = vsub.f32 %v630, %v663
  %v672 = vsub.f32 %v631, %v664
  %v673 = vsub.f32 %v632, %v665
  %v674 = vsub.f32 %v633, %v666
  %v675 = vsub.f32 %v634, %v667
  %v676 = vmul.f32 %v668, 1.442695
  %v677 = vpow.pop %v676
  %v678 = vmul.f32 %v669, 1.442695
  %v679 = vpow.pop %v678
  %v680 = vmul.f32 %v670, 1.442695
  %v681 = vpow.pop %v680
  %v682 = vmul.f32 %v671, 1.442695
  %v683 = vpow.pop %v682
  %v684 = vmul.f32 %v672, 1.442695
  %v685 = vpow.pop %v684
  %v686 = vmul.f32 %v673, 1.442695
  %v687 = vpow.pop %v686
  %v688 = vmul.f32 %v674, 1.442695
  %v689 = vpow.pop %v688
  %v690 = vmul.f32 %v675, 1.442695
  %v691 = vpow.pop %v690
  %693 = vset.pattern.permute.xlu0 0
  %694 = vperm.xlu0 %693, %v660
  %v695 = vpop.permute.xlu0 %694
  %698 = vset.pattern.permute.xlu0 0
  %699 = vperm.xlu0 %698, %v661
  %v700 = vpop.permute.xlu0 %699
  %703 = vset.pattern.permute.xlu0 0
  %704 = vperm.xlu0 %703, %v662
  %v705 = vpop.permute.xlu0 %704
  %708 = vset.pattern.permute.xlu0 0
  %709 = vperm.xlu0 %708, %v663
  %v710 = vpop.permute.xlu0 %709
  %713 = vset.pattern.permute.xlu0 0
  %714 = vperm.xlu0 %713, %v664
  %v715 = vpop.permute.xlu0 %714
  %718 = vset.pattern.permute.xlu0 0
  %719 = vperm.xlu0 %718, %v665
  %v720 = vpop.permute.xlu0 %719
  %723 = vset.pattern.permute.xlu0 0
  %724 = vperm.xlu0 %723, %v666
  %v725 = vpop.permute.xlu0 %724
  %728 = vset.pattern.permute.xlu0 0
  %729 = vperm.xlu0 %728, %v667
  %v730 = vpop.permute.xlu0 %729
  %v732 = vsub.f32 %v619, %v695
  %v733 = vsub.f32 %v620, %v700
  %v734 = vsub.f32 %v621, %v705
  %v735 = vsub.f32 %v622, %v710
  %v736 = vsub.f32 %v623, %v715
  %v737 = vsub.f32 %v624, %v720
  %v738 = vsub.f32 %v625, %v725
  %v739 = vsub.f32 %v626, %v730
  %v740 = vmul.f32 %v732, 1.442695
  %v741 = vpow.pop %v740
  %v742 = vmul.f32 %v733, 1.442695
  %v743 = vpow.pop %v742
  %v744 = vmul.f32 %v734, 1.442695
  %v745 = vpow.pop %v744
  %v746 = vmul.f32 %v735, 1.442695
  %v747 = vpow.pop %v746
  %v748 = vmul.f32 %v736, 1.442695
  %v749 = vpow.pop %v748
  %v750 = vmul.f32 %v737, 1.442695
  %v751 = vpow.pop %v750
  %v752 = vmul.f32 %v738, 1.442695
  %v753 = vpow.pop %v752
  %v754 = vmul.f32 %v739, 1.442695
  %v755 = vpow.pop %v754
  %v756 = vld [vmem:[#allocation3] sm:$0xff]
  %v757 = vld [vmem:[#allocation3 + $0x8] sm:$0xff]
  %v758 = vld [vmem:[#allocation3 + $0x10] sm:$0xff]
  %v759 = vld [vmem:[#allocation3 + $0x18] sm:$0xff]
  %v760 = vld [vmem:[#allocation3 + $0x20] sm:$0xff]
  %v761 = vld [vmem:[#allocation3 + $0x28] sm:$0xff]
  %v762 = vld [vmem:[#allocation3 + $0x30] sm:$0xff]
  %v763 = vld [vmem:[#allocation3 + $0x38] sm:$0xff]
  %v764 = vmul.f32 %v677, %v756
  %v765 = vmul.f32 %v679, %v757
  %v766 = vmul.f32 %v681, %v758
  %v767 = vmul.f32 %v683, %v759
  %v768 = vmul.f32 %v685, %v760
  %v769 = vmul.f32 %v687, %v761
  %v770 = vmul.f32 %v689, %v762
  %v771 = vmul.f32 %v691, %v763
  %v772 = vsel %vm635, %v741, 0.0
  %773 = vadd.xlane.f32.xlu0 %v772
  %v774 = vpop.xlane.xlu0 %773
  %v775 = vsel %vm635, %v743, 0.0
  %776 = vadd.xlane.f32.xlu0 %v775
  %v777 = vpop.xlane.xlu0 %776
  %v778 = vsel %vm635, %v745, 0.0
  %779 = vadd.xlane.f32.xlu0 %v778
  %v780 = vpop.xlane.xlu0 %779
  %v781 = vsel %vm635, %v747, 0.0
  %782 = vadd.xlane.f32.xlu0 %v781
  %v783 = vpop.xlane.xlu0 %782
  %v784 = vsel %vm635, %v749, 0.0
  %785 = vadd.xlane.f32.xlu0 %v784
  %v786 = vpop.xlane.xlu0 %785
  %v787 = vsel %vm635, %v751, 0.0
  %788 = vadd.xlane.f32.xlu0 %v787
  %v789 = vpop.xlane.xlu0 %788
  %v790 = vsel %vm635, %v753, 0.0
  %791 = vadd.xlane.f32.xlu0 %v790
  %v792 = vpop.xlane.xlu0 %791
  %v793 = vsel %vm635, %v755, 0.0
  %794 = vadd.xlane.f32.xlu0 %v793
  %v795 = vpop.xlane.xlu0 %794
  %v796 = vadd.f32 %v764, %v774
  %v797 = vadd.f32 %v765, %v777
  %v798 = vadd.f32 %v766, %v780
  %v799 = vadd.f32 %v767, %v783
  %v800 = vadd.f32 %v768, %v786
  %v801 = vadd.f32 %v769, %v789
  %v802 = vadd.f32 %v770, %v792
  %v803 = vadd.f32 %v771, %v795
  %vm804 = vcmask 7168
  %805 = vst.msk [vmem:[#allocation3] sm:$0xff] %vm804, %v796
  %806 = vst.msk [vmem:[#allocation3 + $0x8] sm:$0xff] %vm804, %v797
  %807 = vst.msk [vmem:[#allocation3 + $0x10] sm:$0xff] %vm804, %v798
  %808 = vst.msk [vmem:[#allocation3 + $0x18] sm:$0xff] %vm804, %v799
  %809 = vst.msk [vmem:[#allocation3 + $0x20] sm:$0xff] %vm804, %v800
  %810 = vst.msk [vmem:[#allocation3 + $0x28] sm:$0xff] %vm804, %v801
  %811 = vst.msk [vmem:[#allocation3 + $0x30] sm:$0xff] %vm804, %v802
  %812 = vst.msk [vmem:[#allocation3 + $0x38] sm:$0xff] %vm804, %v803
  %v813 = vld [vmem:[#allocation4] sm:$0xff]
  %v814 = vld [vmem:[#allocation4 + $0x8] sm:$0xff]
  %v815 = vld [vmem:[#allocation4 + $0x10] sm:$0xff]
  %v816 = vld [vmem:[#allocation4 + $0x18] sm:$0xff]
  %v817 = vld [vmem:[#allocation4 + $0x20] sm:$0xff]
  %v818 = vld [vmem:[#allocation4 + $0x28] sm:$0xff]
  %v819 = vld [vmem:[#allocation4 + $0x30] sm:$0xff]
  %v820 = vld [vmem:[#allocation4 + $0x38] sm:$0xff]
  %822 = vset.pattern.permute.xlu0 0
  %823 = vperm.xlu0 %822, %v677
  %v824 = vpop.permute.xlu0 %823
  %827 = vset.pattern.permute.xlu0 0
  %828 = vperm.xlu0 %827, %v679
  %v829 = vpop.permute.xlu0 %828
  %832 = vset.pattern.permute.xlu0 0
  %833 = vperm.xlu0 %832, %v681
  %v834 = vpop.permute.xlu0 %833
  %837 = vset.pattern.permute.xlu0 0
  %838 = vperm.xlu0 %837, %v683
  %v839 = vpop.permute.xlu0 %838
  %842 = vset.pattern.permute.xlu0 0
  %843 = vperm.xlu0 %842, %v685
  %v844 = vpop.permute.xlu0 %843
  %847 = vset.pattern.permute.xlu0 0
  %848 = vperm.xlu0 %847, %v687
  %v849 = vpop.permute.xlu0 %848
  %852 = vset.pattern.permute.xlu0 0
  %853 = vperm.xlu0 %852, %v689
  %v854 = vpop.permute.xlu0 %853
  %857 = vset.pattern.permute.xlu0 0
  %858 = vperm.xlu0 %857, %v691
  %v859 = vpop.permute.xlu0 %858
  %v861 = vmul.f32 %v824, %v813
  %v862 = vmul.f32 %v829, %v814
  %v863 = vmul.f32 %v834, %v815
  %v864 = vmul.f32 %v839, %v816
  %v865 = vmul.f32 %v844, %v817
  %v866 = vmul.f32 %v849, %v818
  %v867 = vmul.f32 %v854, %v819
  %v868 = vmul.f32 %v859, %v820
  %v869 = vld [vmem:[%s2] sm:$0xff]
  %v870 = vld [vmem:[%s2 + $0x8] sm:$0xff]
  %v871 = vld [vmem:[%s2 + $0x10] sm:$0xff]
  %v872 = vld [vmem:[%s2 + $0x18] sm:$0xff]
  %v873 = vld [vmem:[%s2 + $0x20] sm:$0xff]
  %v874 = vld [vmem:[%s2 + $0x28] sm:$0xff]
  %v875 = vld [vmem:[%s2 + $0x30] sm:$0xff]
  %v876 = vld [vmem:[%s2 + $0x38] sm:$0xff]
  %v878 = vsel %vm635, %v741, 0
  %880 = vmatprep.subr.mxu0 0.0
  %881 = vmatpush1.msra.mxu0 %v869
  %882 = vmatprep.subr.mxu0 0.0
  %883 = vmatpush1.msra.mxu0 0.0
  %884 = vmatprep.subr.mxu0 0.0
  %885 = vmatpush1.msra.mxu0 0.0
  %886 = vmatprep.subr.mxu0 0.0
  %887 = vmatpush1.msra.mxu0 0.0
  %888 = vmatprep.subr.mxu0 0.0
  %889 = vmatpush1.msra.mxu0 0.0
  %890 = vmatprep.subr.mxu0 0.0
  %891 = vmatpush1.msra.mxu0 0.0
  %892 = vmatprep.subr.mxu0 0.0
  %893 = vmatpush1.msra.mxu0 0.0
  %894 = vmatprep.subr.mxu0 0.0
  %895 = vmatpush1.msra.mxu0 0.0
  %896 = vmatprep.subr.mxu0 0.0
  %897 = vmatpush1.msra.mxu0 0.0
  %898 = vmatprep.subr.mxu0 0.0
  %899 = vmatpush1.msra.mxu0 0.0
  %900 = vmatprep.subr.mxu0 0.0
  %901 = vmatpush1.msra.mxu0 0.0
  %902 = vmatprep.subr.mxu0 0.0
  %903 = vmatpush1.msra.mxu0 0.0
  %904 = vmatprep.subr.mxu0 0.0
  %905 = vmatpush1.msra.mxu0 0.0
  %906 = vmatprep.subr.mxu0 0.0
  %907 = vmatpush1.msra.mxu0 0.0
  %908 = vmatprep.subr.mxu0 0.0
  %909 = vmatpush1.msra.mxu0 0.0
  %910 = vmatprep.subr.mxu0 0.0
  %911 = vmatpush1.msra.mxu0 0.0
  %912 = vmatprep.subr.mxu0 0.0
  %913 = vmatpush1.msra.mxu0 0.0
  %914 = vmatprep.subr.mxu0 0.0
  %915 = vmatpush1.msra.mxu0 0.0
  %916 = vmatprep.subr.mxu0 0.0
  %917 = vmatpush1.msra.mxu0 0.0
  %918 = vmatprep.subr.mxu0 0.0
  %919 = vmatpush1.msra.mxu0 0.0
  %920 = vmatprep.subr.mxu0 0.0
  %921 = vmatpush1.msra.mxu0 0.0
  %922 = vmatprep.subr.mxu0 0.0
  %923 = vmatpush1.msra.mxu0 0.0
  %924 = vmatprep.subr.mxu0 0.0
  %925 = vmatpush1.msra.mxu0 0.0
  %926 = vmatprep.subr.mxu0 0.0
  %927 = vmatpush1.msra.mxu0 0.0
  %928 = vmatprep.subr.mxu0 0.0
  %929 = vmatpush1.msra.mxu0 0.0
  %930 = vmatprep.subr.mxu0 0.0
  %931 = vmatpush1.msra.mxu0 0.0
  %932 = vmatprep.subr.mxu0 0.0
  %933 = vmatpush1.msra.mxu0 0.0
  %934 = vmatprep.subr.mxu0 0.0
  %935 = vmatpush1.msra.mxu0 0.0
  %936 = vmatprep.subr.mxu0 0.0
  %937 = vmatpush1.msra.mxu0 0.0
  %938 = vmatprep.subr.mxu0 0.0
  %939 = vmatpush1.msra.mxu0 0.0
  %940 = vmatprep.subr.mxu0 0.0
  %941 = vmatpush1.msra.mxu0 0.0
  %942 = vmatprep.subr.mxu0 0.0
  %943 = vmatpush1.msra.mxu0 0.0
  %944 = vmatprep.mubr.f32.mxu0 0.0
  %945 = vmatmul.mubr.f32.gmra.mrb[0].mxu0 %v878
  %v946 = vpop.f32.mrb[0].mxu0
  %v947 = vadd.f32 0.0, %v946
  %v948 = vpop.f32.mrb[0].mxu0
  %949 = vdwg.mxu0
  %v951 = vsel %vm635, %v743, 0
  %953 = vmatprep.subr.mxu0 0.0
  %954 = vmatpush1.msra.mxu0 %v870
  %955 = vmatprep.subr.mxu0 0.0
  %956 = vmatpush1.msra.mxu0 0.0
  %957 = vmatprep.subr.mxu0 0.0
  %958 = vmatpush1.msra.mxu0 0.0
  %959 = vmatprep.subr.mxu0 0.0
  %960 = vmatpush1.msra.mxu0 0.0
  %961 = vmatprep.subr.mxu0 0.0
  %962 = vmatpush1.msra.mxu0 0.0
  %963 = vmatprep.subr.mxu0 0.0
  %964 = vmatpush1.msra.mxu0 0.0
  %965 = vmatprep.subr.mxu0 0.0
  %966 = vmatpush1.msra.mxu0 0.0
  %967 = vmatprep.subr.mxu0 0.0
  %968 = vmatpush1.msra.mxu0 0.0
  %969 = vmatprep.subr.mxu0 0.0
  %970 = vmatpush1.msra.mxu0 0.0
  %971 = vmatprep.subr.mxu0 0.0
  %972 = vmatpush1.msra.mxu0 0.0
  %973 = vmatprep.subr.mxu0 0.0
  %974 = vmatpush1.msra.mxu0 0.0
  %975 = vmatprep.subr.mxu0 0.0
  %976 = vmatpush1.msra.mxu0 0.0
  %977 = vmatprep.subr.mxu0 0.0
  %978 = vmatpush1.msra.mxu0 0.0
  %979 = vmatprep.subr.mxu0 0.0
  %980 = vmatpush1.msra.mxu0 0.0
  %981 = vmatprep.subr.mxu0 0.0
  %982 = vmatpush1.msra.mxu0 0.0
  %983 = vmatprep.subr.mxu0 0.0
  %984 = vmatpush1.msra.mxu0 0.0
  %985 = vmatprep.subr.mxu0 0.0
  %986 = vmatpush1.msra.mxu0 0.0
  %987 = vmatprep.subr.mxu0 0.0
  %988 = vmatpush1.msra.mxu0 0.0
  %989 = vmatprep.subr.mxu0 0.0
  %990 = vmatpush1.msra.mxu0 0.0
  %991 = vmatprep.subr.mxu0 0.0
  %992 = vmatpush1.msra.mxu0 0.0
  %993 = vmatprep.subr.mxu0 0.0
  %994 = vmatpush1.msra.mxu0 0.0
  %995 = vmatprep.subr.mxu0 0.0
  %996 = vmatpush1.msra.mxu0 0.0
  %997 = vmatprep.subr.mxu0 0.0
  %998 = vmatpush1.msra.mxu0 0.0
  %999 = vmatprep.subr.mxu0 0.0
  %1000 = vmatpush1.msra.mxu0 0.0
  %1001 = vmatprep.subr.mxu0 0.0
  %1002 = vmatpush1.msra.mxu0 0.0
  %1003 = vmatprep.subr.mxu0 0.0
  %1004 = vmatpush1.msra.mxu0 0.0
  %1005 = vmatprep.subr.mxu0 0.0
  %1006 = vmatpush1.msra.mxu0 0.0
  %1007 = vmatprep.subr.mxu0 0.0
  %1008 = vmatpush1.msra.mxu0 0.0
  %1009 = vmatprep.subr.mxu0 0.0
  %1010 = vmatpush1.msra.mxu0 0.0
  %1011 = vmatprep.subr.mxu0 0.0
  %1012 = vmatpush1.msra.mxu0 0.0
  %1013 = vmatprep.subr.mxu0 0.0
  %1014 = vmatpush1.msra.mxu0 0.0
  %1015 = vmatprep.subr.mxu0 0.0
  %1016 = vmatpush1.msra.mxu0 0.0
  %1017 = vmatprep.mubr.f32.mxu0 0.0
  %1018 = vmatmul.mubr.f32.gmra.mrb[0].mxu0 %v951
  %v1019 = vpop.f32.mrb[0].mxu0
  %v1020 = vadd.f32 0.0, %v1019
  %v1021 = vpop.f32.mrb[0].mxu0
  %1022 = vdwg.mxu0
  %v1024 = vsel %vm635, %v745, 0
  %1026 = vmatprep.subr.mxu0 0.0
  %1027 = vmatpush1.msra.mxu0 %v871
  %1028 = vmatprep.subr.mxu0 0.0
  %1029 = vmatpush1.msra.mxu0 0.0
  %1030 = vmatprep.subr.mxu0 0.0
  %1031 = vmatpush1.msra.mxu0 0.0
  %1032 = vmatprep.subr.mxu0 0.0
  %1033 = vmatpush1.msra.mxu0 0.0
  %1034 = vmatprep.subr.mxu0 0.0
  %1035 = vmatpush1.msra.mxu0 0.0
  %1036 = vmatprep.subr.mxu0 0.0
  %1037 = vmatpush1.msra.mxu0 0.0
  %1038 = vmatprep.subr.mxu0 0.0
  %1039 = vmatpush1.msra.mxu0 0.0
  %1040 = vmatprep.subr.mxu0 0.0
  %1041 = vmatpush1.msra.mxu0 0.0
  %1042 = vmatprep.subr.mxu0 0.0
  %1043 = vmatpush1.msra.mxu0 0.0
  %1044 = vmatprep.subr.mxu0 0.0
  %1045 = vmatpush1.msra.mxu0 0.0
  %1046 = vmatprep.subr.mxu0 0.0
  %1047 = vmatpush1.msra.mxu0 0.0
  %1048 = vmatprep.subr.mxu0 0.0
  %1049 = vmatpush1.msra.mxu0 0.0
  %1050 = vmatprep.subr.mxu0 0.0
  %1051 = vmatpush1.msra.mxu0 0.0
  %1052 = vmatprep.subr.mxu0 0.0
  %1053 = vmatpush1.msra.mxu0 0.0
  %1054 = vmatprep.subr.mxu0 0.0
  %1055 = vmatpush1.msra.mxu0 0.0
  %1056 = vmatprep.subr.mxu0 0.0
  %1057 = vmatpush1.msra.mxu0 0.0
  %1058 = vmatprep.subr.mxu0 0.0
  %1059 = vmatpush1.msra.mxu0 0.0
  %1060 = vmatprep.subr.mxu0 0.0
  %1061 = vmatpush1.msra.mxu0 0.0
  %1062 = vmatprep.subr.mxu0 0.0
  %1063 = vmatpush1.msra.mxu0 0.0
  %1064 = vmatprep.subr.mxu0 0.0
  %1065 = vmatpush1.msra.mxu0 0.0
  %1066 = vmatprep.subr.mxu0 0.0
  %1067 = vmatpush1.msra.mxu0 0.0
  %1068 = vmatprep.subr.mxu0 0.0
  %1069 = vmatpush1.msra.mxu0 0.0
  %1070 = vmatprep.subr.mxu0 0.0
  %1071 = vmatpush1.msra.mxu0 0.0
  %1072 = vmatprep.subr.mxu0 0.0
  %1073 = vmatpush1.msra.mxu0 0.0
  %1074 = vmatprep.subr.mxu0 0.0
  %1075 = vmatpush1.msra.mxu0 0.0
  %1076 = vmatprep.subr.mxu0 0.0
  %1077 = vmatpush1.msra.mxu0 0.0
  %1078 = vmatprep.subr.mxu0 0.0
  %1079 = vmatpush1.msra.mxu0 0.0
  %1080 = vmatprep.subr.mxu0 0.0
  %1081 = vmatpush1.msra.mxu0 0.0
  %1082 = vmatprep.subr.mxu0 0.0
  %1083 = vmatpush1.msra.mxu0 0.0
  %1084 = vmatprep.subr.mxu0 0.0
  %1085 = vmatpush1.msra.mxu0 0.0
  %1086 = vmatprep.subr.mxu0 0.0
  %1087 = vmatpush1.msra.mxu0 0.0
  %1088 = vmatprep.subr.mxu0 0.0
  %1089 = vmatpush1.msra.mxu0 0.0
  %1090 = vmatprep.mubr.f32.mxu0 0.0
  %1091 = vmatmul.mubr.f32.gmra.mrb[0].mxu0 %v1024
  %v1092 = vpop.f32.mrb[0].mxu0
  %v1093 = vadd.f32 0.0, %v1092
  %v1094 = vpop.f32.mrb[0].mxu0
  %1095 = vdwg.mxu0
  %v1097 = vsel %vm635, %v747, 0
  %1099 = vmatprep.subr.mxu0 0.0
  %1100 = vmatpush1.msra.mxu0 %v872
  %1101 = vmatprep.subr.mxu0 0.0
  %1102 = vmatpush1.msra.mxu0 0.0
  %1103 = vmatprep.subr.mxu0 0.0
  %1104 = vmatpush1.msra.mxu0 0.0
  %1105 = vmatprep.subr.mxu0 0.0
  %1106 = vmatpush1.msra.mxu0 0.0
  %1107 = vmatprep.subr.mxu0 0.0
  %1108 = vmatpush1.msra.mxu0 0.0
  %1109 = vmatprep.subr.mxu0 0.0
  %1110 = vmatpush1.msra.mxu0 0.0
  %1111 = vmatprep.subr.mxu0 0.0
  %1112 = vmatpush1.msra.mxu0 0.0
  %1113 = vmatprep.subr.mxu0 0.0
  %1114 = vmatpush1.msra.mxu0 0.0
  %1115 = vmatprep.subr.mxu0 0.0
  %1116 = vmatpush1.msra.mxu0 0.0
  %1117 = vmatprep.subr.mxu0 0.0
  %1118 = vmatpush1.msra.mxu0 0.0
  %1119 = vmatprep.subr.mxu0 0.0
  %1120 = vmatpush1.msra.mxu0 0.0
  %1121 = vmatprep.subr.mxu0 0.0
  %1122 = vmatpush1.msra.mxu0 0.0
  %1123 = vmatprep.subr.mxu0 0.0
  %1124 = vmatpush1.msra.mxu0 0.0
  %1125 = vmatprep.subr.mxu0 0.0
  %1126 = vmatpush1.msra.mxu0 0.0
  %1127 = vmatprep.subr.mxu0 0.0
  %1128 = vmatpush1.msra.mxu0 0.0
  %1129 = vmatprep.subr.mxu0 0.0
  %1130 = vmatpush1.msra.mxu0 0.0
  %1131 = vmatprep.subr.mxu0 0.0
  %1132 = vmatpush1.msra.mxu0 0.0
  %1133 = vmatprep.subr.mxu0 0.0
  %1134 = vmatpush1.msra.mxu0 0.0
  %1135 = vmatprep.subr.mxu0 0.0
  %1136 = vmatpush1.msra.mxu0 0.0
  %1137 = vmatprep.subr.mxu0 0.0
  %1138 = vmatpush1.msra.mxu0 0.0
  %1139 = vmatprep.subr.mxu0 0.0
  %1140 = vmatpush1.msra.mxu0 0.0
  %1141 = vmatprep.subr.mxu0 0.0
  %1142 = vmatpush1.msra.mxu0 0.0
  %1143 = vmatprep.subr.mxu0 0.0
  %1144 = vmatpush1.msra.mxu0 0.0
  %1145 = vmatprep.subr.mxu0 0.0
  %1146 = vmatpush1.msra.mxu0 0.0
  %1147 = vmatprep.subr.mxu0 0.0
  %1148 = vmatpush1.msra.mxu0 0.0
  %1149 = vmatprep.subr.mxu0 0.0
  %1150 = vmatpush1.msra.mxu0 0.0
  %1151 = vmatprep.subr.mxu0 0.0
  %1152 = vmatpush1.msra.mxu0 0.0
  %1153 = vmatprep.subr.mxu0 0.0
  %1154 = vmatpush1.msra.mxu0 0.0
  %1155 = vmatprep.subr.mxu0 0.0
  %1156 = vmatpush1.msra.mxu0 0.0
  %1157 = vmatprep.subr.mxu0 0.0
  %1158 = vmatpush1.msra.mxu0 0.0
  %1159 = vmatprep.subr.mxu0 0.0
  %1160 = vmatpush1.msra.mxu0 0.0
  %1161 = vmatprep.subr.mxu0 0.0
  %1162 = vmatpush1.msra.mxu0 0.0
  %1163 = vmatprep.mubr.f32.mxu0 0.0
  %1164 = vmatmul.mubr.f32.gmra.mrb[0].mxu0 %v1097
  %v1165 = vpop.f32.mrb[0].mxu0
  %v1166 = vadd.f32 0.0, %v1165
  %v1167 = vpop.f32.mrb[0].mxu0
  %1168 = vdwg.mxu0
  %v1170 = vsel %vm635, %v749, 0
  %1172 = vmatprep.subr.mxu0 0.0
  %1173 = vmatpush1.msra.mxu0 %v873
  %1174 = vmatprep.subr.mxu0 0.0
  %1175 = vmatpush1.msra.mxu0 0.0
  %1176 = vmatprep.subr.mxu0 0.0
  %1177 = vmatpush1.msra.mxu0 0.0
  %1178 = vmatprep.subr.mxu0 0.0
  %1179 = vmatpush1.msra.mxu0 0.0
  %1180 = vmatprep.subr.mxu0 0.0
  %1181 = vmatpush1.msra.mxu0 0.0
  %1182 = vmatprep.subr.mxu0 0.0
  %1183 = vmatpush1.msra.mxu0 0.0
  %1184 = vmatprep.subr.mxu0 0.0
  %1185 = vmatpush1.msra.mxu0 0.0
  %1186 = vmatprep.subr.mxu0 0.0
  %1187 = vmatpush1.msra.mxu0 0.0
  %1188 = vmatprep.subr.mxu0 0.0
  %1189 = vmatpush1.msra.mxu0 0.0
  %1190 = vmatprep.subr.mxu0 0.0
  %1191 = vmatpush1.msra.mxu0 0.0
  %1192 = vmatprep.subr.mxu0 0.0
  %1193 = vmatpush1.msra.mxu0 0.0
  %1194 = vmatprep.subr.mxu0 0.0
  %1195 = vmatpush1.msra.mxu0 0.0
  %1196 = vmatprep.subr.mxu0 0.0
  %1197 = vmatpush1.msra.mxu0 0.0
  %1198 = vmatprep.subr.mxu0 0.0
  %1199 = vmatpush1.msra.mxu0 0.0
  %1200 = vmatprep.subr.mxu0 0.0
  %1201 = vmatpush1.msra.mxu0 0.0
  %1202 = vmatprep.subr.mxu0 0.0
  %1203 = vmatpush1.msra.mxu0 0.0
  %1204 = vmatprep.subr.mxu0 0.0
  %1205 = vmatpush1.msra.mxu0 0.0
  %1206 = vmatprep.subr.mxu0 0.0
  %1207 = vmatpush1.msra.mxu0 0.0
  %1208 = vmatprep.subr.mxu0 0.0
  %1209 = vmatpush1.msra.mxu0 0.0
  %1210 = vmatprep.subr.mxu0 0.0
  %1211 = vmatpush1.msra.mxu0 0.0
  %1212 = vmatprep.subr.mxu0 0.0
  %1213 = vmatpush1.msra.mxu0 0.0
  %1214 = vmatprep.subr.mxu0 0.0
  %1215 = vmatpush1.msra.mxu0 0.0
  %1216 = vmatprep.subr.mxu0 0.0
  %1217 = vmatpush1.msra.mxu0 0.0
  %1218 = vmatprep.subr.mxu0 0.0
  %1219 = vmatpush1.msra.mxu0 0.0
  %1220 = vmatprep.subr.mxu0 0.0
  %1221 = vmatpush1.msra.mxu0 0.0
  %1222 = vmatprep.subr.mxu0 0.0
  %1223 = vmatpush1.msra.mxu0 0.0
  %1224 = vmatprep.subr.mxu0 0.0
  %1225 = vmatpush1.msra.mxu0 0.0
  %1226 = vmatprep.subr.mxu0 0.0
  %1227 = vmatpush1.msra.mxu0 0.0
  %1228 = vmatprep.subr.mxu0 0.0
  %1229 = vmatpush1.msra.mxu0 0.0
  %1230 = vmatprep.subr.mxu0 0.0
  %1231 = vmatpush1.msra.mxu0 0.0
  %1232 = vmatprep.subr.mxu0 0.0
  %1233 = vmatpush1.msra.mxu0 0.0
  %1234 = vmatprep.subr.mxu0 0.0
  %1235 = vmatpush1.msra.mxu0 0.0
  %1236 = vmatprep.mubr.f32.mxu0 0.0
  %1237 = vmatmul.mubr.f32.gmra.mrb[0].mxu0 %v1170
  %v1238 = vpop.f32.mrb[0].mxu0
  %v1239 = vadd.f32 0.0, %v1238
  %v1240 = vpop.f32.mrb[0].mxu0
  %1241 = vdwg.mxu0
  %v1243 = vsel %vm635, %v751, 0
  %1245 = vmatprep.subr.mxu0 0.0
  %1246 = vmatpush1.msra.mxu0 %v874
  %1247 = vmatprep.subr.mxu0 0.0
  %1248 = vmatpush1.msra.mxu0 0.0
  %1249 = vmatprep.subr.mxu0 0.0
  %1250 = vmatpush1.msra.mxu0 0.0
  %1251 = vmatprep.subr.mxu0 0.0
  %1252 = vmatpush1.msra.mxu0 0.0
  %1253 = vmatprep.subr.mxu0 0.0
  %1254 = vmatpush1.msra.mxu0 0.0
  %1255 = vmatprep.subr.mxu0 0.0
  %1256 = vmatpush1.msra.mxu0 0.0
  %1257 = vmatprep.subr.mxu0 0.0
  %1258 = vmatpush1.msra.mxu0 0.0
  %1259 = vmatprep.subr.mxu0 0.0
  %1260 = vmatpush1.msra.mxu0 0.0
  %1261 = vmatprep.subr.mxu0 0.0
  %1262 = vmatpush1.msra.mxu0 0.0
  %1263 = vmatprep.subr.mxu0 0.0
  %1264 = vmatpush1.msra.mxu0 0.0
  %1265 = vmatprep.subr.mxu0 0.0
  %1266 = vmatpush1.msra.mxu0 0.0
  %1267 = vmatprep.subr.mxu0 0.0
  %1268 = vmatpush1.msra.mxu0 0.0
  %1269 = vmatprep.subr.mxu0 0.0
  %1270 = vmatpush1.msra.mxu0 0.0
  %1271 = vmatprep.subr.mxu0 0.0
  %1272 = vmatpush1.msra.mxu0 0.0
  %1273 = vmatprep.subr.mxu0 0.0
  %1274 = vmatpush1.msra.mxu0 0.0
  %1275 = vmatprep.subr.mxu0 0.0
  %1276 = vmatpush1.msra.mxu0 0.0
  %1277 = vmatprep.subr.mxu0 0.0
  %1278 = vmatpush1.msra.mxu0 0.0
  %1279 = vmatprep.subr.mxu0 0.0
  %1280 = vmatpush1.msra.mxu0 0.0
  %1281 = vmatprep.subr.mxu0 0.0
  %1282 = vmatpush1.msra.mxu0 0.0
  %1283 = vmatprep.subr.mxu0 0.0
  %1284 = vmatpush1.msra.mxu0 0.0
  %1285 = vmatprep.subr.mxu0 0.0
  %1286 = vmatpush1.msra.mxu0 0.0
  %1287 = vmatprep.subr.mxu0 0.0
  %1288 = vmatpush1.msra.mxu0 0.0
  %1289 = vmatprep.subr.mxu0 0.0
  %1290 = vmatpush1.msra.mxu0 0.0
  %1291 = vmatprep.subr.mxu0 0.0
  %1292 = vmatpush1.msra.mxu0 0.0
  %1293 = vmatprep.subr.mxu0 0.0
  %1294 = vmatpush1.msra.mxu0 0.0
  %1295 = vmatprep.subr.mxu0 0.0
  %1296 = vmatpush1.msra.mxu0 0.0
  %1297 = vmatprep.subr.mxu0 0.0
  %1298 = vmatpush1.msra.mxu0 0.0
  %1299 = vmatprep.subr.mxu0 0.0
  %1300 = vmatpush1.msra.mxu0 0.0
  %1301 = vmatprep.subr.mxu0 0.0
  %1302 = vmatpush1.msra.mxu0 0.0
  %1303 = vmatprep.subr.mxu0 0.0
  %1304 = vmatpush1.msra.mxu0 0.0
  %1305 = vmatprep.subr.mxu0 0.0
  %1306 = vmatpush1.msra.mxu0 0.0
  %1307 = vmatprep.subr.mxu0 0.0
  %1308 = vmatpush1.msra.mxu0 0.0
  %1309 = vmatprep.mubr.f32.mxu0 0.0
  %1310 = vmatmul.mubr.f32.gmra.mrb[0].mxu0 %v1243
  %v1311 = vpop.f32.mrb[0].mxu0
  %v1312 = vadd.f32 0.0, %v1311
  %v1313 = vpop.f32.mrb[0].mxu0
  %1314 = vdwg.mxu0
  %v1316 = vsel %vm635, %v753, 0
  %1318 = vmatprep.subr.mxu0 0.0
  %1319 = vmatpush1.msra.mxu0 %v875
  %1320 = vmatprep.subr.mxu0 0.0
  %1321 = vmatpush1.msra.mxu0 0.0
  %1322 = vmatprep.subr.mxu0 0.0
  %1323 = vmatpush1.msra.mxu0 0.0
  %1324 = vmatprep.subr.mxu0 0.0
  %1325 = vmatpush1.msra.mxu0 0.0
  %1326 = vmatprep.subr.mxu0 0.0
  %1327 = vmatpush1.msra.mxu0 0.0
  %1328 = vmatprep.subr.mxu0 0.0
  %1329 = vmatpush1.msra.mxu0 0.0
  %1330 = vmatprep.subr.mxu0 0.0
  %1331 = vmatpush1.msra.mxu0 0.0
  %1332 = vmatprep.subr.mxu0 0.0
  %1333 = vmatpush1.msra.mxu0 0.0
  %1334 = vmatprep.subr.mxu0 0.0
  %1335 = vmatpush1.msra.mxu0 0.0
  %1336 = vmatprep.subr.mxu0 0.0
  %1337 = vmatpush1.msra.mxu0 0.0
  %1338 = vmatprep.subr.mxu0 0.0
  %1339 = vmatpush1.msra.mxu0 0.0
  %1340 = vmatprep.subr.mxu0 0.0
  %1341 = vmatpush1.msra.mxu0 0.0
  %1342 = vmatprep.subr.mxu0 0.0
  %1343 = vmatpush1.msra.mxu0 0.0
  %1344 = vmatprep.subr.mxu0 0.0
  %1345 = vmatpush1.msra.mxu0 0.0
  %1346 = vmatprep.subr.mxu0 0.0
  %1347 = vmatpush1.msra.mxu0 0.0
  %1348 = vmatprep.subr.mxu0 0.0
  %1349 = vmatpush1.msra.mxu0 0.0
  %1350 = vmatprep.subr.mxu0 0.0
  %1351 = vmatpush1.msra.mxu0 0.0
  %1352 = vmatprep.subr.mxu0 0.0
  %1353 = vmatpush1.msra.mxu0 0.0
  %1354 = vmatprep.subr.mxu0 0.0
  %1355 = vmatpush1.msra.mxu0 0.0
  %1356 = vmatprep.subr.mxu0 0.0
  %1357 = vmatpush1.msra.mxu0 0.0
  %1358 = vmatprep.subr.mxu0 0.0
  %1359 = vmatpush1.msra.mxu0 0.0
  %1360 = vmatprep.subr.mxu0 0.0
  %1361 = vmatpush1.msra.mxu0 0.0
  %1362 = vmatprep.subr.mxu0 0.0
  %1363 = vmatpush1.msra.mxu0 0.0
  %1364 = vmatprep.subr.mxu0 0.0
  %1365 = vmatpush1.msra.mxu0 0.0
  %1366 = vmatprep.subr.mxu0 0.0
  %1367 = vmatpush1.msra.mxu0 0.0
  %1368 = vmatprep.subr.mxu0 0.0
  %1369 = vmatpush1.msra.mxu0 0.0
  %1370 = vmatprep.subr.mxu0 0.0
  %1371 = vmatpush1.msra.mxu0 0.0
  %1372 = vmatprep.subr.mxu0 0.0
  %1373 = vmatpush1.msra.mxu0 0.0
  %1374 = vmatprep.subr.mxu0 0.0
  %1375 = vmatpush1.msra.mxu0 0.0
  %1376 = vmatprep.subr.mxu0 0.0
  %1377 = vmatpush1.msra.mxu0 0.0
  %1378 = vmatprep.subr.mxu0 0.0
  %1379 = vmatpush1.msra.mxu0 0.0
  %1380 = vmatprep.subr.mxu0 0.0
  %1381 = vmatpush1.msra.mxu0 0.0
  %1382 = vmatprep.mubr.f32.mxu0 0.0
  %1383 = vmatmul.mubr.f32.gmra.mrb[0].mxu0 %v1316
  %v1384 = vpop.f32.mrb[0].mxu0
  %v1385 = vadd.f32 0.0, %v1384
  %v1386 = vpop.f32.mrb[0].mxu0
  %1387 = vdwg.mxu0
  %v1389 = vsel %vm635, %v755, 0
  %1391 = vmatprep.subr.mxu0 0.0
  %1392 = vmatpush1.msra.mxu0 %v876
  %1393 = vmatprep.subr.mxu0 0.0
  %1394 = vmatpush1.msra.mxu0 0.0
  %1395 = vmatprep.subr.mxu0 0.0
  %1396 = vmatpush1.msra.mxu0 0.0
  %1397 = vmatprep.subr.mxu0 0.0
  %1398 = vmatpush1.msra.mxu0 0.0
  %1399 = vmatprep.subr.mxu0 0.0
  %1400 = vmatpush1.msra.mxu0 0.0
  %1401 = vmatprep.subr.mxu0 0.0
  %1402 = vmatpush1.msra.mxu0 0.0
  %1403 = vmatprep.subr.mxu0 0.0
  %1404 = vmatpush1.msra.mxu0 0.0
  %1405 = vmatprep.subr.mxu0 0.0
  %1406 = vmatpush1.msra.mxu0 0.0
  %1407 = vmatprep.subr.mxu0 0.0
  %1408 = vmatpush1.msra.mxu0 0.0
  %1409 = vmatprep.subr.mxu0 0.0
  %1410 = vmatpush1.msra.mxu0 0.0
  %1411 = vmatprep.subr.mxu0 0.0
  %1412 = vmatpush1.msra.mxu0 0.0
  %1413 = vmatprep.subr.mxu0 0.0
  %1414 = vmatpush1.msra.mxu0 0.0
  %1415 = vmatprep.subr.mxu0 0.0
  %1416 = vmatpush1.msra.mxu0 0.0
  %1417 = vmatprep.subr.mxu0 0.0
  %1418 = vmatpush1.msra.mxu0 0.0
  %1419 = vmatprep.subr.mxu0 0.0
  %1420 = vmatpush1.msra.mxu0 0.0
  %1421 = vmatprep.subr.mxu0 0.0
  %1422 = vmatpush1.msra.mxu0 0.0
  %1423 = vmatprep.subr.mxu0 0.0
  %1424 = vmatpush1.msra.mxu0 0.0
  %1425 = vmatprep.subr.mxu0 0.0
  %1426 = vmatpush1.msra.mxu0 0.0
  %1427 = vmatprep.subr.mxu0 0.0
  %1428 = vmatpush1.msra.mxu0 0.0
  %1429 = vmatprep.subr.mxu0 0.0
  %1430 = vmatpush1.msra.mxu0 0.0
  %1431 = vmatprep.subr.mxu0 0.0
  %1432 = vmatpush1.msra.mxu0 0.0
  %1433 = vmatprep.subr.mxu0 0.0
  %1434 = vmatpush1.msra.mxu0 0.0
  %1435 = vmatprep.subr.mxu0 0.0
  %1436 = vmatpush1.msra.mxu0 0.0
  %1437 = vmatprep.subr.mxu0 0.0
  %1438 = vmatpush1.msra.mxu0 0.0
  %1439 = vmatprep.subr.mxu0 0.0
  %1440 = vmatpush1.msra.mxu0 0.0
  %1441 = vmatprep.subr.mxu0 0.0
  %1442 = vmatpush1.msra.mxu0 0.0
  %1443 = vmatprep.subr.mxu0 0.0
  %1444 = vmatpush1.msra.mxu0 0.0
  %1445 = vmatprep.subr.mxu0 0.0
  %1446 = vmatpush1.msra.mxu0 0.0
  %1447 = vmatprep.subr.mxu0 0.0
  %1448 = vmatpush1.msra.mxu0 0.0
  %1449 = vmatprep.subr.mxu0 0.0
  %1450 = vmatpush1.msra.mxu0 0.0
  %1451 = vmatprep.subr.mxu0 0.0
  %1452 = vmatpush1.msra.mxu0 0.0
  %1453 = vmatprep.subr.mxu0 0.0
  %1454 = vmatpush1.msra.mxu0 0.0
  %1455 = vmatprep.mubr.f32.mxu0 0.0
  %1456 = vmatmul.mubr.f32.gmra.mrb[0].mxu0 %v1389
  %v1457 = vpop.f32.mrb[0].mxu0
  %v1458 = vadd.f32 0.0, %v1457
  %v1459 = vpop.f32.mrb[0].mxu0
  %1460 = vdwg.mxu0
  %v1461 = vadd.f32 %v861, %v947
  %v1462 = vadd.f32 %v862, %v1020
  %v1463 = vadd.f32 %v863, %v1093
  %v1464 = vadd.f32 %v864, %v1166
  %v1465 = vadd.f32 %v865, %v1239
  %v1466 = vadd.f32 %v866, %v1312
  %v1467 = vadd.f32 %v867, %v1385
  %v1468 = vadd.f32 %v868, %v1458
  %1469 = vst [vmem:[#allocation4] sm:$0xff] %v1461
  %1470 = vst [vmem:[#allocation4 + $0x8] sm:$0xff] %v1462
  %1471 = vst [vmem:[#allocation4 + $0x10] sm:$0xff] %v1463
  %1472 = vst [vmem:[#allocation4 + $0x18] sm:$0xff] %v1464
  %1473 = vst [vmem:[#allocation4 + $0x20] sm:$0xff] %v1465
  %1474 = vst [vmem:[#allocation4 + $0x28] sm:$0xff] %v1466
  %1475 = vst [vmem:[#allocation4 + $0x30] sm:$0xff] %v1467
  %1476 = vst [vmem:[#allocation4 + $0x38] sm:$0xff] %v1468
  %1477 = vst.msk [vmem:[#allocation2] sm:$0xff] %vm804, %v660
  %1478 = vst.msk [vmem:[#allocation2 + $0x8] sm:$0xff] %vm804, %v661
  %1479 = vst.msk [vmem:[#allocation2 + $0x10] sm:$0xff] %vm804, %v662
  %1480 = vst.msk [vmem:[#allocation2 + $0x18] sm:$0xff] %vm804, %v663
  %1481 = vst.msk [vmem:[#allocation2 + $0x20] sm:$0xff] %vm804, %v664
  %1482 = vst.msk [vmem:[#allocation2 + $0x28] sm:$0xff] %vm804, %v665
  %1483 = vst.msk [vmem:[#allocation2 + $0x30] sm:$0xff] %vm804, %v666
  %1484 = vst.msk [vmem:[#allocation2 + $0x38] sm:$0xff] %vm804, %v667
  // Predicated region
  $region18: #{_lambda_.35} parent=0 // pred_check
    %p1485 = pneg %p14
  $region19: #{_lambda_.35} parent=0 // pred_check_branch
    %1487 = sbr.rel (%p1485) target = $region21
  $region20: #{_lambda_.35} parent=0 // pred_region
    %v1488 = vld [vmem:[#allocation4] sm:$0xff]
    %v1489 = vld [vmem:[#allocation4 + $0x8] sm:$0xff]
    %v1490 = vld [vmem:[#allocation4 + $0x10] sm:$0xff]
    %v1491 = vld [vmem:[#allocation4 + $0x18] sm:$0xff]
    %v1492 = vld [vmem:[#allocation4 + $0x20] sm:$0xff]
    %v1493 = vld [vmem:[#allocation4 + $0x28] sm:$0xff]
    %v1494 = vld [vmem:[#allocation4 + $0x30] sm:$0xff]
    %v1495 = vld [vmem:[#allocation4 + $0x38] sm:$0xff]
    %v1496 = vld [vmem:[#allocation3] sm:$0xff]
    %v1497 = vld [vmem:[#allocation3 + $0x8] sm:$0xff]
    %v1498 = vld [vmem:[#allocation3 + $0x10] sm:$0xff]
    %v1499 = vld [vmem:[#allocation3 + $0x18] sm:$0xff]
    %v1500 = vld [vmem:[#allocation3 + $0x20] sm:$0xff]
    %v1501 = vld [vmem:[#allocation3 + $0x28] sm:$0xff]
    %v1502 = vld [vmem:[#allocation3 + $0x30] sm:$0xff]
    %v1503 = vld [vmem:[#allocation3 + $0x38] sm:$0xff]
    %v1504 = vrcp.pop %v1496
    %v1505 = vrcp.pop %v1497
    %v1506 = vrcp.pop %v1498
    %v1507 = vrcp.pop %v1499
    %v1508 = vrcp.pop %v1500
    %v1509 = vrcp.pop %v1501
    %v1510 = vrcp.pop %v1502
    %v1511 = vrcp.pop %v1503
    %1513 = vset.pattern.permute.xlu0 0
    %1514 = vperm.xlu0 %1513, %v1504
    %v1515 = vpop.permute.xlu0 %1514
    %1518 = vset.pattern.permute.xlu0 0
    %1519 = vperm.xlu0 %1518, %v1505
    %v1520 = vpop.permute.xlu0 %1519
    %1523 = vset.pattern.permute.xlu0 0
    %1524 = vperm.xlu0 %1523, %v1506
    %v1525 = vpop.permute.xlu0 %1524
    %1528 = vset.pattern.permute.xlu0 0
    %1529 = vperm.xlu0 %1528, %v1507
    %v1530 = vpop.permute.xlu0 %1529
    %1533 = vset.pattern.permute.xlu0 0
    %1534 = vperm.xlu0 %1533, %v1508
    %v1535 = vpop.permute.xlu0 %1534
    %1538 = vset.pattern.permute.xlu0 0
    %1539 = vperm.xlu0 %1538, %v1509
    %v1540 = vpop.permute.xlu0 %1539
    %1543 = vset.pattern.permute.xlu0 0
    %1544 = vperm.xlu0 %1543, %v1510
    %v1545 = vpop.permute.xlu0 %1544
    %1548 = vset.pattern.permute.xlu0 0
    %1549 = vperm.xlu0 %1548, %v1511
    %v1550 = vpop.permute.xlu0 %1549
    %v1552 = vmul.f32 %v1488, %v1515
    %v1553 = vmul.f32 %v1489, %v1520
    %v1554 = vmul.f32 %v1490, %v1525
    %v1555 = vmul.f32 %v1491, %v1530
    %v1556 = vmul.f32 %v1492, %v1535
    %v1557 = vmul.f32 %v1493, %v1540
    %v1558 = vmul.f32 %v1494, %v1545
    %v1559 = vmul.f32 %v1495, %v1550
    %1560 = vst [vmem:[%s3] sm:$0xff] %v1552
    %1561 = vst [vmem:[%s3 + $0x8] sm:$0xff] %v1553
    %1562 = vst [vmem:[%s3 + $0x10] sm:$0xff] %v1554
    %1563 = vst [vmem:[%s3 + $0x18] sm:$0xff] %v1555
    %1564 = vst [vmem:[%s3 + $0x20] sm:$0xff] %v1556
    %1565 = vst [vmem:[%s3 + $0x28] sm:$0xff] %v1557
    %1566 = vst [vmem:[%s3 + $0x30] sm:$0xff] %v1558
    %1567 = vst [vmem:[%s3 + $0x38] sm:$0xff] %v1559
  $region21: #{_lambda_.35} parent=0 // pred_fallthru
    _
  // Predicated region
  $region22: #{_lambda_.35} parent=0 // pred_check
    _
  $region23: #{_lambda_.35} parent=0 // pred_check_branch
    %1569 = sbr.rel (0) target = $region25
  $region24: #{_lambda_.35} parent=0 // pred_region
    _
  $region25: #{_lambda_.35} parent=0 // pred_fallthru
    _
  // Predicated region
  $region26: #{_lambda_.35} parent=0 // pred_check
    _
  $region27: #{_lambda_.35} parent=0 // pred_check_branch
    %1571 = sbr.rel (0) target = $region29
  $region28: #{_lambda_.35} parent=0 // pred_region
    _
  $region29: #{_lambda_.35} parent=0 // pred_fallthru
    _

</llo_original>
